<compile_context>
chip_gen: v6e
topology: v6e:2x2x1
jax: 0.10.0
libtpu: 0.0.40
codegen_flags: <defaults>
</compile_context>

<pallas_src>
import functools

import jax
import jax.numpy as jnp
import numpy as np
from jax.experimental import pallas as pl
from jax.experimental.pallas import tpu as pltpu

EPS = 1e-5


# ----------------------------------------------------------------------------
# Weight preprocessing (pure JAX, runs once per forward; cacheable per weights)
# ----------------------------------------------------------------------------
def _shift_mats(n):
    """S[k, i_in, i_out] = 1  iff  i_in == i_out + (k - 1),  k = 0, 1, 2."""
    i = jnp.arange(n)
    return jnp.stack(
        [(i[:, None] == (i[None, :] + (k - 1))).astype(jnp.float32) for k in range(3)],
        axis=0)


def _fold_bn(gamma, beta, mean, var, eps=EPS):
    """Eval-mode BN -> per-output-channel scale s and bias b (y = conv*s + b)."""
    s = gamma / jnp.sqrt(var + eps)
    return s, beta - mean * s


def _band3x3(w, H, W, scale):
    """3x3x3 conv taps + H/W zero padding + BN scale folded into banded matrices.

    w: (3,3,3,Cin,Cout), scale: (Cout,)  ->  B: (3, H*W*Cin, H*W*Cout) f32 so that
    (in the (rows, H*W*C) flat layout)  out[r] = sum_kd  x[r + kd - 1] @ B[kd].
    """
    Sh = _shift_mats(H)                       # (3, H, H)
    Sw = _shift_mats(W)                       # (3, W, W)
    B = jnp.einsum("aio,bjp,dabce->dijcope", Sh, Sw, w.astype(jnp.float32))
    Cin, Cout = w.shape[3], w.shape[4]
    B = B.reshape(3, H * W * Cin, H * W * Cout)
    return B * jnp.tile(scale, H * W)[None, None, :]


def _band1x1(wd, H, W, scale):
    """1x1x1 downsample conv (+ BN scale) as a block-diagonal (H*W*Cin, H*W*Cout)."""
    Bd = jnp.kron(jnp.eye(H * W, dtype=jnp.float32), wd.astype(jnp.float32))
    return Bd * jnp.tile(scale, H * W)[None, :]


def _tile_bias(b, H, W):
    return jnp.tile(b, H * W).reshape(1, -1).astype(jnp.float32)


# ----------------------------------------------------------------------------
# Fused kernel (register accumulation, roll+mask depth shifts, fused downsample)
# ----------------------------------------------------------------------------
def _make_resblock_kernel(D, Kout, has_downsample):
    def kernel(x_ref, b1c_ref, b1u_ref, b1d_ref, b2c_ref, b2u_ref, b2d_ref,
               t1_ref, t2_ref, *rest):
        if has_downsample:
            td_ref, out_ref = rest
        else:
            (out_ref,) = rest

        x = x_ref[...]                                   # (M, Kin), compute dtype
        M = x.shape[0]

        # depth index of each row (rows are (batch, depth) flattened, depth minor)
        row = jax.lax.broadcasted_iota(jnp.int32, (M, Kout), 0)
        d_idx = row % D
        keep_up = d_idx != 0          # rows that receive a contribution from row r-1
        keep_dn = d_idx != (D - 1)    # rows that receive a contribution from row r+1

        def conv3(src, c_ref, u_ref, d_ref):
            """3 MXU matmuls; kd=+/-1 taps shifted with XLU roll + seam mask."""
            c = jnp.dot(src, c_ref[...], preferred_element_type=jnp.float32)
            u = jnp.dot(src, u_ref[...], preferred_element_type=jnp.float32)
            d = jnp.dot(src, d_ref[...], preferred_element_type=jnp.float32)
            u = jnp.where(keep_up, pltpu.roll(u, 1, axis=0), 0.0)       # out[r]+=u[r-1]
            d = jnp.where(keep_dn, pltpu.roll(d, M - 1, axis=0), 0.0)   # out[r]+=d[r+1]
            return c, u + d

        # conv1 (+ fused 1x1 downsample columns) + bn1 + relu
        c1, ud1 = conv3(x, b1c_ref, b1u_ref, b1d_ref)    # c1: (M, Kout [+ Kout])
        h = jnp.maximum(c1[:, :Kout] + ud1 + t1_ref[...], 0.0)

        # residual branch
        if has_downsample:
            res = c1[:, Kout:] + td_ref[...]
        else:
            res = x.astype(jnp.float32)

        # conv2 + bn2, add residual, relu, single lane-dense store
        c2, ud2 = conv3(h.astype(x.dtype), b2c_ref, b2u_ref, b2d_ref)
        out_ref[...] = jnp.maximum(c2 + ud2 + t2_ref[...] + res, 0.0).astype(out_ref.dtype)

    return kernel


# ----------------------------------------------------------------------------
# Wrapper
# ----------------------------------------------------------------------------
def residual_block_forward(x, p, compute_dtype=jnp.bfloat16, batch_block=None):
    """Fused Pallas ResidualBlock forward.  x: (N, D, H, W, Cin) -> (N, D, H, W, Cout)."""
    N, D, H, W, Cin = x.shape
    Cout = p["w1"].shape[-1]
    Kin, Kout = H * W * Cin, H * W * Cout

    has_downsample = p.get("wd") is not None
    if not has_downsample:
        assert Cin == Cout, "identity residual path requires inc == outc"

    if batch_block is None:
        batch_block = N                     # fold whole batch into the MXU M dimension
    assert N % batch_block == 0
    num_blocks = N // batch_block
    M_blk = batch_block * D

    # Folded BN params and banded weights (taps + H/W padding + BN scale folded in).
    s1, b1bias = _fold_bn(p["g1"], p["be1"], p["m1"], p["v1"])
    s2, b2bias = _fold_bn(p["g2"], p["be2"], p["m2"], p["v2"])
    B1 = _band3x3(p["w1"], H, W, s1)                      # (3, Kin,  Kout) f32
    B2 = _band3x3(p["w2"], H, W, s2)                      # (3, Kout, Kout) f32

    if has_downsample:
        sd, bdbias = _fold_bn(p["gd"], p["bed"], p["md"], p["vd"])
        Bd = _band1x1(p["wd"], H, W, sd)                  # (Kin, Kout)
        b1c = jnp.concatenate([B1[1], Bd], axis=1)        # (Kin, 2*Kout) fused center
    else:
        b1c = B1[1]

    b1c = b1c.astype(compute_dtype)
    b1u, b1d = B1[0].astype(compute_dtype), B1[2].astype(compute_dtype)
    b2c, b2u, b2d = (B2[1].astype(compute_dtype), B2[0].astype(compute_dtype),
                     B2[2].astype(compute_dtype))
    t1 = _tile_bias(b1bias, H, W)
    t2 = _tile_bias(b2bias, H, W)

    x_flat = x.reshape(N * D, Kin).astype(compute_dtype)  # lane-dense (rows, H*W*Cin)

    def const_spec(shape):
        # TODO(synk): for large bands use pipeline_mode=pl.Buffered(1) / manual DMA to
        #             avoid pointless double-buffering of never-changing weights.
        return pl.BlockSpec(shape, lambda n, _nd=len(shape): (0,) * _nd)

    in_specs = [
        pl.BlockSpec((M_blk, Kin), lambda n: (n, 0)),
        const_spec(b1c.shape), const_spec((Kin, Kout)), const_spec((Kin, Kout)),
        const_spec((Kout, Kout)), const_spec((Kout, Kout)), const_spec((Kout, Kout)),
        const_spec((1, Kout)), const_spec((1, Kout)),
    ]
    args = [x_flat, b1c, b1u, b1d, b2c, b2u, b2d, t1, t2]
    if has_downsample:
        td = _tile_bias(bdbias, H, W)
        in_specs.append(const_spec((1, Kout)))
        args.append(td)

    out = pl.pallas_call(
        _make_resblock_kernel(D, Kout, has_downsample),
        out_shape=jax.ShapeDtypeStruct((N * D, Kout), x.dtype),
        grid=(num_blocks,),
        in_specs=in_specs,
        out_specs=pl.BlockSpec((M_blk, Kout), lambda n: (n, 0)),
        compiler_params=pltpu.CompilerParams(
            dimension_semantics=("parallel",),
            vmem_limit_bytes=32 * 1024 * 1024),
    )(*args)
    return out.reshape(N, D, H, W, Cout)


# ----------------------------------------------------------------------------
# Pure-JAX reference.  BN is folded into conv weights/bias with the SAME algebra and
# the SAME bf16 weight quantization as the kernel, so the comparison isolates the
# kernel's correctness (exact identity in f32; matched rounding at bf16).
# ----------------------------------------------------------------------------
def _ref_forward(x, p, compute_dtype=jnp.bfloat16):
    cast = lambda a: a.astype(compute_dtype)

    def conv(x_, w, pad):
        return jax.lax.conv_general_dilated(
            cast(x_), cast(w), window_strides=(1, 1, 1), padding=[(pad, pad)] * 3,
            dimension_numbers=("NDHWC", "DHWIO", "NDHWC"),
            preferred_element_type=jnp.float32)

    s1, t1 = _fold_bn(p["g1"], p["be1"], p["m1"], p["v1"])
    s2, t2 = _fold_bn(p["g2"], p["be2"], p["m2"], p["v2"])
    h = jnp.maximum(conv(x, p["w1"] * s1, 1) + t1, 0.0)
    y = conv(h, p["w2"] * s2, 1) + t2
    if p.get("wd") is None:
        r = cast(x).astype(jnp.float32)
    else:
        sd, td = _fold_bn(p["gd"], p["bed"], p["md"], p["vd"])
        wd5 = (p["wd"] * sd).reshape(1, 1, 1, *p["wd"].shape)
        r = conv(x, wd5, 0) + td
    return jnp.maximum(y + r, 0.0)


# ----------------------------------------------------------------------------
# Main
# ----------------------------------------------------------------------------
if __name__ == "__main__":
    inc, outc = 4, 8          # inc != outc -> downsample path (Conv1x1 + BN) exercised
    N, D, H, W = 2, 8, 8, 8

    key = jax.random.PRNGKey(0)
    ks = jax.random.split(key, 20)

    x = jax.random.normal(ks[0], (N, D, H, W, inc), jnp.float32)

    def bn_params(k):
        ka, kb, kc, kd = jax.random.split(k, 4)
        g = 1.0 + 0.1 * jax.random.normal(ka, (outc,), jnp.float32)
        be = 0.1 * jax.random.normal(kb, (outc,), jnp.float32)
        m = 0.1 * jax.random.normal(kc, (outc,), jnp.float32)
        v = 0.9 + 0.2 * jax.random.uniform(kd, (outc,), jnp.float32)
        return g, be, m, v

    g1, be1, m1, v1 = bn_params(ks[1])
    g2, be2, m2, v2 = bn_params(ks[2])
    gd, bed, md, vd = bn_params(ks[3])

    params = dict(
        w1=0.1 * jax.random.normal(ks[4], (3, 3, 3, inc, outc), jnp.float32),
        w2=0.1 * jax.random.normal(ks[5], (3, 3, 3, outc, outc), jnp.float32),
        wd=0.1 * jax.random.normal(ks[6], (inc, outc), jnp.float32),
        g1=g1, be1=be1, m1=m1, v1=v1,
        g2=g2, be2=be2, m2=m2, v2=v2,
        gd=gd, bed=bed, md=md, vd=vd,
    )

    fwd = jax.jit(functools.partial(residual_block_forward, compute_dtype=jnp.bfloat16))
    out = jax.block_until_ready(fwd(x, params))
    ref = jax.block_until_ready(_ref_forward(x, params, compute_dtype=jnp.bfloat16))

    np.testing.assert_allclose(np.asarray(out), np.asarray(ref), rtol=2e-3, atol=2e-3)
    print("KERNEL_OK")
</pallas_src>

<mosaic_0001>
module attributes {stable_mosaic.version = 11 : i64} {
  func.func @kernel(%arg0: i32, %arg1: memref<16x256xbf16, #tpu.memory_space<vmem>>, %arg2: memref<256x1024xbf16, #tpu.memory_space<vmem>>, %arg3: memref<256x512xbf16, #tpu.memory_space<vmem>>, %arg4: memref<256x512xbf16, #tpu.memory_space<vmem>>, %arg5: memref<512x512xbf16, #tpu.memory_space<vmem>>, %arg6: memref<512x512xbf16, #tpu.memory_space<vmem>>, %arg7: memref<512x512xbf16, #tpu.memory_space<vmem>>, %arg8: memref<1x512xf32, #tpu.memory_space<vmem>>, %arg9: memref<1x512xf32, #tpu.memory_space<vmem>>, %arg10: memref<1x512xf32, #tpu.memory_space<vmem>>, %arg11: memref<16x512xf32, #tpu.memory_space<vmem>>) attributes {dimension_semantics = [#tpu.dimension_semantics<parallel>], iteration_bounds = array<i64: 1>, scalar_prefetch = 0 : i64, scratch_operands = 0 : i64, tpu.core_type = #tpu.core_type<tc>, window_params = [{transform_indices = @transform_0, window_bounds = array<i64: 16, 256>}, {pipeline_mode = #tpu.pipeline_mode<synchronous>, transform_indices = @transform_1, window_bounds = array<i64: 256, 1024>}, {pipeline_mode = #tpu.pipeline_mode<synchronous>, transform_indices = @transform_2, window_bounds = array<i64: 256, 512>}, {pipeline_mode = #tpu.pipeline_mode<synchronous>, transform_indices = @transform_3, window_bounds = array<i64: 256, 512>}, {pipeline_mode = #tpu.pipeline_mode<synchronous>, transform_indices = @transform_4, window_bounds = array<i64: 512, 512>}, {pipeline_mode = #tpu.pipeline_mode<synchronous>, transform_indices = @transform_5, window_bounds = array<i64: 512, 512>}, {pipeline_mode = #tpu.pipeline_mode<synchronous>, transform_indices = @transform_6, window_bounds = array<i64: 512, 512>}, {pipeline_mode = #tpu.pipeline_mode<synchronous>, transform_indices = @transform_7, window_bounds = array<i64: 1, 512>}, {pipeline_mode = #tpu.pipeline_mode<synchronous>, transform_indices = @transform_8, window_bounds = array<i64: 1, 512>}, {pipeline_mode = #tpu.pipeline_mode<synchronous>, transform_indices = @transform_9, window_bounds = array<i64: 1, 512>}, {transform_indices = @transform_10, window_bounds = array<i64: 16, 512>}]} {
    %c0 = arith.constant 0 : index
    %c0_0 = arith.constant 0 : index
    %0 = vector.load %arg1[%c0, %c0_0] : memref<16x256xbf16, #tpu.memory_space<vmem>>, vector<16x256xbf16>
    %1 = tpu.iota {dimensions = array<i32: 0>} : vector<16x512xi32>
    %c8_i32 = arith.constant 8 : i32
    %c0_i32 = arith.constant 0 : i32
    %2 = arith.cmpi eq, %c8_i32, %c0_i32 : i32
    %c1_i32 = arith.constant 1 : i32
    %3 = arith.select %2, %c1_i32, %c8_i32 : i32
    %4 = vector.broadcast %3 : i32 to vector<16x512xi32>
    %5 = arith.remsi %1, %4 : vector<16x512xi32>
    %c0_i32_1 = arith.constant 0 : i32
    %6 = vector.broadcast %c0_i32_1 : i32 to vector<16x512xi32>
    %7 = arith.cmpi ne, %5, %6 : vector<16x512xi32>
    %c0_i32_2 = arith.constant 0 : i32
    %8 = vector.broadcast %c0_i32_2 : i32 to vector<16x512xi32>
    %9 = arith.cmpi slt, %5, %8 : vector<16x512xi32>
    %c0_i32_3 = arith.constant 0 : i32
    %10 = arith.cmpi slt, %3, %c0_i32_3 : i32
    %11 = vector.broadcast %10 : i1 to vector<16x512xi1>
    %12 = vector.broadcast %11 : vector<16x512xi1> to vector<16x512xi1>
    %13 = arith.xori %9, %12 : vector<16x512xi1>
    %14 = arith.andi %13, %7 : vector<16x512xi1>
    %15 = vector.broadcast %3 : i32 to vector<16x512xi32>
    %16 = arith.addi %5, %15 : vector<16x512xi32>
    %17 = arith.select %14, %16, %5 : vector<16x512xi1>, vector<16x512xi32>
    %c0_i32_4 = arith.constant 0 : i32
    %18 = vector.broadcast %c0_i32_4 : i32 to vector<16x512xi32>
    %19 = arith.cmpi ne, %17, %18 : vector<16x512xi32>
    %c7_i32 = arith.constant 7 : i32
    %20 = vector.broadcast %c7_i32 : i32 to vector<16x512xi32>
    %21 = arith.cmpi ne, %17, %20 : vector<16x512xi32>
    %c0_5 = arith.constant 0 : index
    %c0_6 = arith.constant 0 : index
    %22 = vector.load %arg2[%c0_5, %c0_6] : memref<256x1024xbf16, #tpu.memory_space<vmem>>, vector<256x1024xbf16>
    %cst = arith.constant dense<0.000000e+00> : vector<16x1024xf32>
    %23 = tpu.matmul %0, %22, %cst {dimension_numbers = #tpu.dot_dimension_numbers<[1], [0], [0], [1], [0, 0, 1, 1], [], []>} : vector<16x256xbf16>, vector<256x1024xbf16>, vector<16x1024xf32> -> vector<16x1024xf32>
    %c0_7 = arith.constant 0 : index
    %c0_8 = arith.constant 0 : index
    %24 = vector.load %arg3[%c0_7, %c0_8] : memref<256x512xbf16, #tpu.memory_space<vmem>>, vector<256x512xbf16>
    %cst_9 = arith.constant dense<0.000000e+00> : vector<16x512xf32>
    %25 = tpu.matmul %0, %24, %cst_9 {dimension_numbers = #tpu.dot_dimension_numbers<[1], [0], [0], [1], [0, 0, 1, 1], [], []>} : vector<16x256xbf16>, vector<256x512xbf16>, vector<16x512xf32> -> vector<16x512xf32>
    %c0_10 = arith.constant 0 : index
    %c0_11 = arith.constant 0 : index
    %26 = vector.load %arg4[%c0_10, %c0_11] : memref<256x512xbf16, #tpu.memory_space<vmem>>, vector<256x512xbf16>
    %cst_12 = arith.constant dense<0.000000e+00> : vector<16x512xf32>
    %27 = tpu.matmul %0, %26, %cst_12 {dimension_numbers = #tpu.dot_dimension_numbers<[1], [0], [0], [1], [0, 0, 1, 1], [], []>} : vector<16x256xbf16>, vector<256x512xbf16>, vector<16x512xf32> -> vector<16x512xf32>
    %c1_i32_13 = arith.constant 1 : i32
    %28 = tpu.dynamic_rotate %25 by %c1_i32_13 dim 0 : vector<16x512xf32>, i32 -> vector<16x512xf32>
    %cst_14 = arith.constant 0.000000e+00 : f32
    %29 = vector.broadcast %cst_14 : f32 to vector<16x512xf32>
    %30 = arith.select %19, %28, %29 : vector<16x512xi1>, vector<16x512xf32>
    %c15_i32 = arith.constant 15 : i32
    %31 = tpu.dynamic_rotate %27 by %c15_i32 dim 0 : vector<16x512xf32>, i32 -> vector<16x512xf32>
    %cst_15 = arith.constant 0.000000e+00 : f32
    %32 = vector.broadcast %cst_15 : f32 to vector<16x512xf32>
    %33 = arith.select %21, %31, %32 : vector<16x512xi1>, vector<16x512xf32>
    %34 = arith.addf %30, %33 : vector<16x512xf32>
    %35 = vector.extract_strided_slice %23 {offsets = [0, 0], sizes = [16, 512], strides = [1, 1]} : vector<16x1024xf32> to vector<16x512xf32>
    %36 = arith.addf %35, %34 : vector<16x512xf32>
    %c0_16 = arith.constant 0 : index
    %c0_17 = arith.constant 0 : index
    %37 = vector.load %arg8[%c0_16, %c0_17] : memref<1x512xf32, #tpu.memory_space<vmem>>, vector<1x512xf32>
    %38 = vector.broadcast %37 : vector<1x512xf32> to vector<16x512xf32>
    %39 = arith.addf %36, %38 : vector<16x512xf32>
    %cst_18 = arith.constant 0.000000e+00 : f32
    %40 = vector.broadcast %cst_18 : f32 to vector<16x512xf32>
    %41 = arith.maximumf %39, %40 : vector<16x512xf32>
    %42 = vector.extract_strided_slice %23 {offsets = [0, 512], sizes = [16, 512], strides = [1, 1]} : vector<16x1024xf32> to vector<16x512xf32>
    %c0_19 = arith.constant 0 : index
    %c0_20 = arith.constant 0 : index
    %43 = vector.load %arg10[%c0_19, %c0_20] : memref<1x512xf32, #tpu.memory_space<vmem>>, vector<1x512xf32>
    %44 = vector.broadcast %43 : vector<1x512xf32> to vector<16x512xf32>
    %45 = arith.addf %42, %44 : vector<16x512xf32>
    %46 = arith.truncf %41 : vector<16x512xf32> to vector<16x512xbf16>
    %c0_21 = arith.constant 0 : index
    %c0_22 = arith.constant 0 : index
    %47 = vector.load %arg5[%c0_21, %c0_22] : memref<512x512xbf16, #tpu.memory_space<vmem>>, vector<512x512xbf16>
    %cst_23 = arith.constant dense<0.000000e+00> : vector<16x512xf32>
    %48 = tpu.matmul %46, %47, %cst_23 {dimension_numbers = #tpu.dot_dimension_numbers<[1], [0], [0], [1], [0, 0, 1, 1], [], []>} : vector<16x512xbf16>, vector<512x512xbf16>, vector<16x512xf32> -> vector<16x512xf32>
    %c0_24 = arith.constant 0 : index
    %c0_25 = arith.constant 0 : index
    %49 = vector.load %arg6[%c0_24, %c0_25] : memref<512x512xbf16, #tpu.memory_space<vmem>>, vector<512x512xbf16>
    %cst_26 = arith.constant dense<0.000000e+00> : vector<16x512xf32>
    %50 = tpu.matmul %46, %49, %cst_26 {dimension_numbers = #tpu.dot_dimension_numbers<[1], [0], [0], [1], [0, 0, 1, 1], [], []>} : vector<16x512xbf16>, vector<512x512xbf16>, vector<16x512xf32> -> vector<16x512xf32>
    %c0_27 = arith.constant 0 : index
    %c0_28 = arith.constant 0 : index
    %51 = vector.load %arg7[%c0_27, %c0_28] : memref<512x512xbf16, #tpu.memory_space<vmem>>, vector<512x512xbf16>
    %cst_29 = arith.constant dense<0.000000e+00> : vector<16x512xf32>
    %52 = tpu.matmul %46, %51, %cst_29 {dimension_numbers = #tpu.dot_dimension_numbers<[1], [0], [0], [1], [0, 0, 1, 1], [], []>} : vector<16x512xbf16>, vector<512x512xbf16>, vector<16x512xf32> -> vector<16x512xf32>
    %c1_i32_30 = arith.constant 1 : i32
    %53 = tpu.dynamic_rotate %50 by %c1_i32_30 dim 0 : vector<16x512xf32>, i32 -> vector<16x512xf32>
    %cst_31 = arith.constant 0.000000e+00 : f32
    %54 = vector.broadcast %cst_31 : f32 to vector<16x512xf32>
    %55 = arith.select %19, %53, %54 : vector<16x512xi1>, vector<16x512xf32>
    %c15_i32_32 = arith.constant 15 : i32
    %56 = tpu.dynamic_rotate %52 by %c15_i32_32 dim 0 : vector<16x512xf32>, i32 -> vector<16x512xf32>
    %cst_33 = arith.constant 0.000000e+00 : f32
    %57 = vector.broadcast %cst_33 : f32 to vector<16x512xf32>
    %58 = arith.select %21, %56, %57 : vector<16x512xi1>, vector<16x512xf32>
    %59 = arith.addf %55, %58 : vector<16x512xf32>
    %60 = arith.addf %48, %59 : vector<16x512xf32>
    %c0_34 = arith.constant 0 : index
    %c0_35 = arith.constant 0 : index
    %61 = vector.load %arg9[%c0_34, %c0_35] : memref<1x512xf32, #tpu.memory_space<vmem>>, vector<1x512xf32>
    %62 = vector.broadcast %61 : vector<1x512xf32> to vector<16x512xf32>
    %63 = arith.addf %60, %62 : vector<16x512xf32>
    %64 = arith.addf %63, %45 : vector<16x512xf32>
    %cst_36 = arith.constant 0.000000e+00 : f32
    %65 = vector.broadcast %cst_36 : f32 to vector<16x512xf32>
    %66 = arith.maximumf %64, %65 : vector<16x512xf32>
    %c0_37 = arith.constant 0 : index
    %c0_38 = arith.constant 0 : index
    %67 = vector.load %arg11[%c0_37, %c0_38] : memref<16x512xf32, #tpu.memory_space<vmem>>, vector<16x512xf32>
    tpu.vector_store %arg11[%c0_37, %c0_38], %66 {strides = array<i32>} : memref<16x512xf32, #tpu.memory_space<vmem>>, vector<16x512xf32>,
    return
  }
  func.func @transform_0(%arg0: i32) -> (i32, i32) {
    %c0_i32 = arith.constant 0 : i32
    %c0_i32_0 = arith.constant 0 : i32
    return %arg0, %c0_i32 : i32, i32
  }
  func.func @transform_1(%arg0: i32) -> (i32, i32) {
    %c0_i32 = arith.constant 0 : i32
    %c0_i32_0 = arith.constant 0 : i32
    %c0_i32_1 = arith.constant 0 : i32
    return %c0_i32, %c0_i32_0 : i32, i32
  }
  func.func @transform_2(%arg0: i32) -> (i32, i32) {
    %c0_i32 = arith.constant 0 : i32
    %c0_i32_0 = arith.constant 0 : i32
    %c0_i32_1 = arith.constant 0 : i32
    return %c0_i32, %c0_i32_0 : i32, i32
  }
  func.func @transform_3(%arg0: i32) -> (i32, i32) {
    %c0_i32 = arith.constant 0 : i32
    %c0_i32_0 = arith.constant 0 : i32
    %c0_i32_1 = arith.constant 0 : i32
    return %c0_i32, %c0_i32_0 : i32, i32
  }
  func.func @transform_4(%arg0: i32) -> (i32, i32) {
    %c0_i32 = arith.constant 0 : i32
    %c0_i32_0 = arith.constant 0 : i32
    %c0_i32_1 = arith.constant 0 : i32
    return %c0_i32, %c0_i32_0 : i32, i32
  }
  func.func @transform_5(%arg0: i32) -> (i32, i32) {
    %c0_i32 = arith.constant 0 : i32
    %c0_i32_0 = arith.constant 0 : i32
    %c0_i32_1 = arith.constant 0 : i32
    return %c0_i32, %c0_i32_0 : i32, i32
  }
  func.func @transform_6(%arg0: i32) -> (i32, i32) {
    %c0_i32 = arith.constant 0 : i32
    %c0_i32_0 = arith.constant 0 : i32
    %c0_i32_1 = arith.constant 0 : i32
    return %c0_i32, %c0_i32_0 : i32, i32
  }
  func.func @transform_7(%arg0: i32) -> (i32, i32) {
    %c0_i32 = arith.constant 0 : i32
    %c0_i32_0 = arith.constant 0 : i32
    %c0_i32_1 = arith.constant 0 : i32
    return %c0_i32, %c0_i32_0 : i32, i32
  }
  func.func @transform_8(%arg0: i32) -> (i32, i32) {
    %c0_i32 = arith.constant 0 : i32
    %c0_i32_0 = arith.constant 0 : i32
    %c0_i32_1 = arith.constant 0 : i32
    return %c0_i32, %c0_i32_0 : i32, i32
  }
  func.func @transform_9(%arg0: i32) -> (i32, i32) {
    %c0_i32 = arith.constant 0 : i32
    %c0_i32_0 = arith.constant 0 : i32
    %c0_i32_1 = arith.constant 0 : i32
    return %c0_i32, %c0_i32_0 : i32, i32
  }
  func.func @transform_10(%arg0: i32) -> (i32, i32) {
    %c0_i32 = arith.constant 0 : i32
    %c0_i32_0 = arith.constant 0 : i32
    return %arg0, %c0_i32 : i32, i32
  }
}

</mosaic_0001>

<llo_original>
// kernel: tile.33
$region0: #{tile.33}
  #allocation0 [shape = 's32[1]{0}', space=sflag, size = 0x4, scoped, tag = 'scoped memory for tile.33']
  %s0 = inlined_call_operand.vmem [shape: f32[8], index: 0, kind: input, shape index: {}]
  %s1 = inlined_call_operand.vmem [shape: f32[64,8], index: 1, kind: output, shape index: {}]
  // Predicated region
  $region2: #{tile.33} parent=0 // pred_check
    _
  $region3: #{tile.33} parent=0 // pred_check_branch
    %3 = sbr.rel (0) target = $region5
  $region4: #{tile.33} parent=0 // pred_region
    _
  $region5: #{tile.33} parent=0 // pred_fallthru
    _
  %v4 = vld [vmem:[%s0] ss:$0 sm:$0xff]
  %5 = vst [vmem:[%s1] sm:$0xff] %v4
  %s6 = scalar_lea.vmem %s1, 8
  %7 = vst [vmem:[%s6] sm:$0xff] %v4
  %s8 = scalar_lea.vmem %s1, 16
  %9 = vst [vmem:[%s8] sm:$0xff] %v4
  %s10 = scalar_lea.vmem %s1, 24
  %11 = vst [vmem:[%s10] sm:$0xff] %v4
  %s12 = scalar_lea.vmem %s1, 32
  %13 = vst [vmem:[%s12] sm:$0xff] %v4
  %s14 = scalar_lea.vmem %s1, 40
  %15 = vst [vmem:[%s14] sm:$0xff] %v4
  %s16 = scalar_lea.vmem %s1, 48
  %17 = vst [vmem:[%s16] sm:$0xff] %v4
  %s18 = scalar_lea.vmem %s1, 56
  %19 = vst [vmem:[%s18] sm:$0xff] %v4

// kernel: mul.32
$region0: #{mul.32}
  %s0 = inlined_call_operand.vmem [shape: f32[64,8], index: 0, kind: input, shape index: {}]
  %s1 = inlined_call_operand.vmem [shape: f32[512], index: 1, kind: output, shape index: {}]
  $region1: #{mul.32} parent=0
    #allocation0 [shape = 'u8[4096]{0}', space=vmem, size = 0x1000, scoped, tag = 'scoped mem for output reshape']
    %s2 = smov 3
    %v3 = vld [vmem:[%s0] ss:$16 sm:%s2]
    %s4 = smov 12
    %v5 = vld [vmem:[%s0] ss:$16 sm:%s4]
    %vm6 = vcmask 1043458
    %v7 = vsel %vm6, %v5, %v3
    %vm8 = vcmask 64512
    %9 = vst.msk [vmem:[#allocation0] sm:$0xf] %vm8, %v7
    %s10 = scalar_lea.vmem %s0, 15
    %s11 = smov 3
    %v12 = vld [vmem:[%s10] ss:$16 sm:%s11]
    %s13 = scalar_lea.vmem %s0, 15
    %s14 = smov 12
    %v15 = vld [vmem:[%s13] ss:$16 sm:%s14]
    %vm16 = vcmask 1043458
    %v17 = vsel %vm16, %v15, %v12
    %18 = vrot.lane.b32.xlu0 %v17, 120
    %v19 = vpop.permute.xlu0 %18
    %vm20 = vcmask 1048512
    %21 = vst.msk [vmem:[#allocation0] sm:$0xf] %vm20, %v19
    %s22 = scalar_lea.vmem %s0, 14
    %s23 = smov 3
    %v24 = vld [vmem:[%s22] ss:$16 sm:%s23]
    %s25 = scalar_lea.vmem %s0, 14
    %s26 = smov 12
    %v27 = vld [vmem:[%s25] ss:$16 sm:%s26]
    %vm28 = vcmask 1043458
    %v29 = vsel %vm28, %v27, %v24
    %30 = vrot.lane.b32.xlu0 %v29, 112
    %v31 = vpop.permute.xlu0 %30
    %vm32 = vcmask 982912
    %33 = vst.msk [vmem:[#allocation0] sm:$0xf] %vm32, %v31
    %s34 = scalar_lea.vmem %s0, 13
    %s35 = smov 3
    %v36 = vld [vmem:[%s34] ss:$16 sm:%s35]
    %s37 = scalar_lea.vmem %s0, 13
    %s38 = smov 12
    %v39 = vld [vmem:[%s37] ss:$16 sm:%s38]
    %vm40 = vcmask 1043458
    %v41 = vsel %vm40, %v39, %v36
    %42 = vrot.lane.b32.xlu0 %v41, 104
    %v43 = vpop.permute.xlu0 %42
    %vm44 = vcmask 917312
    %45 = vst.msk [vmem:[#allocation0] sm:$0xf] %vm44, %v43
    %s46 = scalar_lea.vmem %s0, 12
    %s47 = smov 3
    %v48 = vld [vmem:[%s46] ss:$16 sm:%s47]
    %s49 = scalar_lea.vmem %s0, 12
    %s50 = smov 12
    %v51 = vld [vmem:[%s49] ss:$16 sm:%s50]
    %vm52 = vcmask 1043458
    %v53 = vsel %vm52, %v51, %v48
    %54 = vrot.lane.b32.xlu0 %v53, 96
    %v55 = vpop.permute.xlu0 %54
    %vm56 = vcmask 851712
    %57 = vst.msk [vmem:[#allocation0] sm:$0xf] %vm56, %v55
    %s58 = scalar_lea.vmem %s0, 11
    %s59 = smov 3
    %v60 = vld [vmem:[%s58] ss:$16 sm:%s59]
    %s61 = scalar_lea.vmem %s0, 11
    %s62 = smov 12
    %v63 = vld [vmem:[%s61] ss:$16 sm:%s62]
    %vm64 = vcmask 1043458
    %v65 = vsel %vm64, %v63, %v60
    %66 = vrot.lane.b32.xlu0 %v65, 88
    %v67 = vpop.permute.xlu0 %66
    %vm68 = vcmask 786112
    %69 = vst.msk [vmem:[#allocation0] sm:$0xf] %vm68, %v67
    %s70 = scalar_lea.vmem %s0, 10
    %s71 = smov 3
    %v72 = vld [vmem:[%s70] ss:$16 sm:%s71]
    %s73 = scalar_lea.vmem %s0, 10
    %s74 = smov 12
    %v75 = vld [vmem:[%s73] ss:$16 sm:%s74]
    %vm76 = vcmask 1043458
    %v77 = vsel %vm76, %v75, %v72
    %78 = vrot.lane.b32.xlu0 %v77, 80
    %v79 = vpop.permute.xlu0 %78
    %vm80 = vcmask 720512
    %81 = vst.msk [vmem:[#allocation0] sm:$0xf] %vm80, %v79
    %s82 = scalar_lea.vmem %s0, 9
    %s83 = smov 3
    %v84 = vld [vmem:[%s82] ss:$16 sm:%s83]
    %s85 = scalar_lea.vmem %s0, 9
    %s86 = smov 12
    %v87 = vld [vmem:[%s85] ss:$16 sm:%s86]
    %vm88 = vcmask 1043458
    %v89 = vsel %vm88, %v87, %v84
    %90 = vrot.lane.b32.xlu0 %v89, 72
    %v91 = vpop.permute.xlu0 %90
    %vm92 = vcmask 654912
    %93 = vst.msk [vmem:[#allocation0] sm:$0xf] %vm92, %v91
    %s94 = scalar_lea.vmem %s0, 8
    %s95 = smov 3
    %v96 = vld [vmem:[%s94] ss:$16 sm:%s95]
    %s97 = scalar_lea.vmem %s0, 8
    %s98 = smov 12
    %v99 = vld [vmem:[%s97] ss:$16 sm:%s98]
    %vm100 = vcmask 1043458
    %v101 = vsel %vm100, %v99, %v96
    %102 = vrot.lane.b32.xlu0 %v101, 64
    %v103 = vpop.permute.xlu0 %102
    %vm104 = vcmask 589312
    %105 = vst.msk [vmem:[#allocation0] sm:$0xf] %vm104, %v103
    %s106 = scalar_lea.vmem %s0, 7
    %s107 = smov 3
    %v108 = vld [vmem:[%s106] ss:$16 sm:%s107]
    %s109 = scalar_lea.vmem %s0, 7
    %s110 = smov 12
    %v111 = vld [vmem:[%s109] ss:$16 sm:%s110]
    %vm112 = vcmask 1043458
    %v113 = vsel %vm112, %v111, %v108
    %114 = vrot.lane.b32.xlu0 %v113, 56
    %v115 = vpop.permute.xlu0 %114
    %vm116 = vcmask 523712
    %117 = vst.msk [vmem:[#allocation0] sm:$0xf] %vm116, %v115
    %s118 = scalar_lea.vmem %s0, 6
    %s119 = smov 3
    %v120 = vld [vmem:[%s118] ss:$16 sm:%s119]
    %s121 = scalar_lea.vmem %s0, 6
    %s122 = smov 12
    %v123 = vld [vmem:[%s121] ss:$16 sm:%s122]
    %vm124 = vcmask 1043458
    %v125 = vsel %vm124, %v123, %v120
    %126 = vrot.lane.b32.xlu0 %v125, 48
    %v127 = vpop.permute.xlu0 %126
    %vm128 = vcmask 458112
    %129 = vst.msk [vmem:[#allocation0] sm:$0xf] %vm128, %v127
    %s130 = scalar_lea.vmem %s0, 5
    %s131 = smov 3
    %v132 = vld [vmem:[%s130] ss:$16 sm:%s131]
    %s133 = scalar_lea.vmem %s0, 5
    %s134 = smov 12
    %v135 = vld [vmem:[%s133] ss:$16 sm:%s134]
    %vm136 = vcmask 1043458
    %v137 = vsel %vm136, %v135, %v132
    %138 = vrot.lane.b32.xlu0 %v137, 40
    %v139 = vpop.permute.xlu0 %138
    %vm140 = vcmask 392512
    %141 = vst.msk [vmem:[#allocation0] sm:$0xf] %vm140, %v139
    %s142 = scalar_lea.vmem %s0, 4
    %s143 = smov 3
    %v144 = vld [vmem:[%s142] ss:$16 sm:%s143]
    %s145 = scalar_lea.vmem %s0, 4
    %s146 = smov 12
    %v147 = vld [vmem:[%s145] ss:$16 sm:%s146]
    %vm148 = vcmask 1043458
    %v149 = vsel %vm148, %v147, %v144
    %150 = vrot.lane.b32.xlu0 %v149, 32
    %v151 = vpop.permute.xlu0 %150
    %vm152 = vcmask 326912
    %153 = vst.msk [vmem:[#allocation0] sm:$0xf] %vm152, %v151
    %s154 = scalar_lea.vmem %s0, 3
    %s155 = smov 3
    %v156 = vld [vmem:[%s154] ss:$16 sm:%s155]
    %s157 = scalar_lea.vmem %s0, 3
    %s158 = smov 12
    %v159 = vld [vmem:[%s157] ss:$16 sm:%s158]
    %vm160 = vcmask 1043458
    %v161 = vsel %vm160, %v159, %v156
    %162 = vrot.lane.b32.xlu0 %v161, 24
    %v163 = vpop.permute.xlu0 %162
    %vm164 = vcmask 261312
    %165 = vst.msk [vmem:[#allocation0] sm:$0xf] %vm164, %v163
    %s166 = scalar_lea.vmem %s0, 2
    %s167 = smov 3
    %v168 = vld [vmem:[%s166] ss:$16 sm:%s167]
    %s169 = scalar_lea.vmem %s0, 2
    %s170 = smov 12
    %v171 = vld [vmem:[%s169] ss:$16 sm:%s170]
    %vm172 = vcmask 1043458
    %v173 = vsel %vm172, %v171, %v168
    %174 = vrot.lane.b32.xlu0 %v173, 16
    %v175 = vpop.permute.xlu0 %174
    %vm176 = vcmask 195712
    %177 = vst.msk [vmem:[#allocation0] sm:$0xf] %vm176, %v175
    %s178 = scalar_lea.vmem %s0, 1
    %s179 = smov 3
    %v180 = vld [vmem:[%s178] ss:$16 sm:%s179]
    %s181 = scalar_lea.vmem %s0, 1
    %s182 = smov 12
    %v183 = vld [vmem:[%s181] ss:$16 sm:%s182]
    %vm184 = vcmask 1043458
    %v185 = vsel %vm184, %v183, %v180
    %186 = vrot.lane.b32.xlu0 %v185, 8
    %v187 = vpop.permute.xlu0 %186
    %vm188 = vcmask 130112
    %189 = vst.msk [vmem:[#allocation0] sm:$0xf] %vm188, %v187
    %s191 = sshll.u32 1, 4
    %s192 = ssub.s32 %s191, 1
    %v194 = vld [vmem:[#allocation0] sm:%s192]
    %s195 = sshll.u32 1, 4
    %s196 = ssub.s32 %s195, 1
    %197 = vst [vmem:[%s1] sm:%s196] %v194

// kernel: tile.49
$region0: #{tile.49}
  %s0 = inlined_call_operand.vmem [shape: f32[64,8], index: 0, kind: input, shape index: {}]
  %s1 = inlined_call_operand.vmem [shape: f32[1,512], index: 1, kind: output, shape index: {}]
  $region1: #{tile.49} parent=0
    #allocation0 [shape = 'u8[16384]{0}', space=vmem, size = 0x4000, scoped, tag = 'scoped mem for output reshape']
    %s2 = smov 3
    %v3 = vld [vmem:[%s0] ss:$16 sm:%s2]
    %s4 = smov 12
    %v5 = vld [vmem:[%s0] ss:$16 sm:%s4]
    %vm6 = vcmask 1043458
    %v7 = vsel %vm6, %v5, %v3
    %vm8 = vcmask 64512
    %9 = vst.msk [vmem:[#allocation0] ss:$8 sm:$0xf] %vm8, %v7
    %s10 = scalar_lea.vmem %s0, 15
    %s11 = smov 3
    %v12 = vld [vmem:[%s10] ss:$16 sm:%s11]
    %s13 = scalar_lea.vmem %s0, 15
    %s14 = smov 12
    %v15 = vld [vmem:[%s13] ss:$16 sm:%s14]
    %vm16 = vcmask 1043458
    %v17 = vsel %vm16, %v15, %v12
    %18 = vrot.lane.b32.xlu0 %v17, 120
    %v19 = vpop.permute.xlu0 %18
    %vm20 = vcmask 1048512
    %21 = vst.msk [vmem:[#allocation0] ss:$8 sm:$0xf] %vm20, %v19
    %s22 = scalar_lea.vmem %s0, 14
    %s23 = smov 3
    %v24 = vld [vmem:[%s22] ss:$16 sm:%s23]
    %s25 = scalar_lea.vmem %s0, 14
    %s26 = smov 12
    %v27 = vld [vmem:[%s25] ss:$16 sm:%s26]
    %vm28 = vcmask 1043458
    %v29 = vsel %vm28, %v27, %v24
    %30 = vrot.lane.b32.xlu0 %v29, 112
    %v31 = vpop.permute.xlu0 %30
    %vm32 = vcmask 982912
    %33 = vst.msk [vmem:[#allocation0] ss:$8 sm:$0xf] %vm32, %v31
    %s34 = scalar_lea.vmem %s0, 13
    %s35 = smov 3
    %v36 = vld [vmem:[%s34] ss:$16 sm:%s35]
    %s37 = scalar_lea.vmem %s0, 13
    %s38 = smov 12
    %v39 = vld [vmem:[%s37] ss:$16 sm:%s38]
    %vm40 = vcmask 1043458
    %v41 = vsel %vm40, %v39, %v36
    %42 = vrot.lane.b32.xlu0 %v41, 104
    %v43 = vpop.permute.xlu0 %42
    %vm44 = vcmask 917312
    %45 = vst.msk [vmem:[#allocation0] ss:$8 sm:$0xf] %vm44, %v43
    %s46 = scalar_lea.vmem %s0, 12
    %s47 = smov 3
    %v48 = vld [vmem:[%s46] ss:$16 sm:%s47]
    %s49 = scalar_lea.vmem %s0, 12
    %s50 = smov 12
    %v51 = vld [vmem:[%s49] ss:$16 sm:%s50]
    %vm52 = vcmask 1043458
    %v53 = vsel %vm52, %v51, %v48
    %54 = vrot.lane.b32.xlu0 %v53, 96
    %v55 = vpop.permute.xlu0 %54
    %vm56 = vcmask 851712
    %57 = vst.msk [vmem:[#allocation0] ss:$8 sm:$0xf] %vm56, %v55
    %s58 = scalar_lea.vmem %s0, 11
    %s59 = smov 3
    %v60 = vld [vmem:[%s58] ss:$16 sm:%s59]
    %s61 = scalar_lea.vmem %s0, 11
    %s62 = smov 12
    %v63 = vld [vmem:[%s61] ss:$16 sm:%s62]
    %vm64 = vcmask 1043458
    %v65 = vsel %vm64, %v63, %v60
    %66 = vrot.lane.b32.xlu0 %v65, 88
    %v67 = vpop.permute.xlu0 %66
    %vm68 = vcmask 786112
    %69 = vst.msk [vmem:[#allocation0] ss:$8 sm:$0xf] %vm68, %v67
    %s70 = scalar_lea.vmem %s0, 10
    %s71 = smov 3
    %v72 = vld [vmem:[%s70] ss:$16 sm:%s71]
    %s73 = scalar_lea.vmem %s0, 10
    %s74 = smov 12
    %v75 = vld [vmem:[%s73] ss:$16 sm:%s74]
    %vm76 = vcmask 1043458
    %v77 = vsel %vm76, %v75, %v72
    %78 = vrot.lane.b32.xlu0 %v77, 80
    %v79 = vpop.permute.xlu0 %78
    %vm80 = vcmask 720512
    %81 = vst.msk [vmem:[#allocation0] ss:$8 sm:$0xf] %vm80, %v79
    %s82 = scalar_lea.vmem %s0, 9
    %s83 = smov 3
    %v84 = vld [vmem:[%s82] ss:$16 sm:%s83]
    %s85 = scalar_lea.vmem %s0, 9
    %s86 = smov 12
    %v87 = vld [vmem:[%s85] ss:$16 sm:%s86]
    %vm88 = vcmask 1043458
    %v89 = vsel %vm88, %v87, %v84
    %90 = vrot.lane.b32.xlu0 %v89, 72
    %v91 = vpop.permute.xlu0 %90
    %vm92 = vcmask 654912
    %93 = vst.msk [vmem:[#allocation0] ss:$8 sm:$0xf] %vm92, %v91
    %s94 = scalar_lea.vmem %s0, 8
    %s95 = smov 3
    %v96 = vld [vmem:[%s94] ss:$16 sm:%s95]
    %s97 = scalar_lea.vmem %s0, 8
    %s98 = smov 12
    %v99 = vld [vmem:[%s97] ss:$16 sm:%s98]
    %vm100 = vcmask 1043458
    %v101 = vsel %vm100, %v99, %v96
    %102 = vrot.lane.b32.xlu0 %v101, 64
    %v103 = vpop.permute.xlu0 %102
    %vm104 = vcmask 589312
    %105 = vst.msk [vmem:[#allocation0] ss:$8 sm:$0xf] %vm104, %v103
    %s106 = scalar_lea.vmem %s0, 7
    %s107 = smov 3
    %v108 = vld [vmem:[%s106] ss:$16 sm:%s107]
    %s109 = scalar_lea.vmem %s0, 7
    %s110 = smov 12
    %v111 = vld [vmem:[%s109] ss:$16 sm:%s110]
    %vm112 = vcmask 1043458
    %v113 = vsel %vm112, %v111, %v108
    %114 = vrot.lane.b32.xlu0 %v113, 56
    %v115 = vpop.permute.xlu0 %114
    %vm116 = vcmask 523712
    %117 = vst.msk [vmem:[#allocation0] ss:$8 sm:$0xf] %vm116, %v115
    %s118 = scalar_lea.vmem %s0, 6
    %s119 = smov 3
    %v120 = vld [vmem:[%s118] ss:$16 sm:%s119]
    %s121 = scalar_lea.vmem %s0, 6
    %s122 = smov 12
    %v123 = vld [vmem:[%s121] ss:$16 sm:%s122]
    %vm124 = vcmask 1043458
    %v125 = vsel %vm124, %v123, %v120
    %126 = vrot.lane.b32.xlu0 %v125, 48
    %v127 = vpop.permute.xlu0 %126
    %vm128 = vcmask 458112
    %129 = vst.msk [vmem:[#allocation0] ss:$8 sm:$0xf] %vm128, %v127
    %s130 = scalar_lea.vmem %s0, 5
    %s131 = smov 3
    %v132 = vld [vmem:[%s130] ss:$16 sm:%s131]
    %s133 = scalar_lea.vmem %s0, 5
    %s134 = smov 12
    %v135 = vld [vmem:[%s133] ss:$16 sm:%s134]
    %vm136 = vcmask 1043458
    %v137 = vsel %vm136, %v135, %v132
    %138 = vrot.lane.b32.xlu0 %v137, 40
    %v139 = vpop.permute.xlu0 %138
    %vm140 = vcmask 392512
    %141 = vst.msk [vmem:[#allocation0] ss:$8 sm:$0xf] %vm140, %v139
    %s142 = scalar_lea.vmem %s0, 4
    %s143 = smov 3
    %v144 = vld [vmem:[%s142] ss:$16 sm:%s143]
    %s145 = scalar_lea.vmem %s0, 4
    %s146 = smov 12
    %v147 = vld [vmem:[%s145] ss:$16 sm:%s146]
    %vm148 = vcmask 1043458
    %v149 = vsel %vm148, %v147, %v144
    %150 = vrot.lane.b32.xlu0 %v149, 32
    %v151 = vpop.permute.xlu0 %150
    %vm152 = vcmask 326912
    %153 = vst.msk [vmem:[#allocation0] ss:$8 sm:$0xf] %vm152, %v151
    %s154 = scalar_lea.vmem %s0, 3
    %s155 = smov 3
    %v156 = vld [vmem:[%s154] ss:$16 sm:%s155]
    %s157 = scalar_lea.vmem %s0, 3
    %s158 = smov 12
    %v159 = vld [vmem:[%s157] ss:$16 sm:%s158]
    %vm160 = vcmask 1043458
    %v161 = vsel %vm160, %v159, %v156
    %162 = vrot.lane.b32.xlu0 %v161, 24
    %v163 = vpop.permute.xlu0 %162
    %vm164 = vcmask 261312
    %165 = vst.msk [vmem:[#allocation0] ss:$8 sm:$0xf] %vm164, %v163
    %s166 = scalar_lea.vmem %s0, 2
    %s167 = smov 3
    %v168 = vld [vmem:[%s166] ss:$16 sm:%s167]
    %s169 = scalar_lea.vmem %s0, 2
    %s170 = smov 12
    %v171 = vld [vmem:[%s169] ss:$16 sm:%s170]
    %vm172 = vcmask 1043458
    %v173 = vsel %vm172, %v171, %v168
    %174 = vrot.lane.b32.xlu0 %v173, 16
    %v175 = vpop.permute.xlu0 %174
    %vm176 = vcmask 195712
    %177 = vst.msk [vmem:[#allocation0] ss:$8 sm:$0xf] %vm176, %v175
    %s178 = scalar_lea.vmem %s0, 1
    %s179 = smov 3
    %v180 = vld [vmem:[%s178] ss:$16 sm:%s179]
    %s181 = scalar_lea.vmem %s0, 1
    %s182 = smov 12
    %v183 = vld [vmem:[%s181] ss:$16 sm:%s182]
    %vm184 = vcmask 1043458
    %v185 = vsel %vm184, %v183, %v180
    %186 = vrot.lane.b32.xlu0 %v185, 8
    %v187 = vpop.permute.xlu0 %186
    %vm188 = vcmask 130112
    %189 = vst.msk [vmem:[#allocation0] ss:$8 sm:$0xf] %vm188, %v187
    %s191 = sshll.u32 1, 1
    %s192 = ssub.s32 %s191, 1
    %v194 = vld [vmem:[#allocation0] sm:%s192]
    %s195 = sshll.u32 1, 1
    %s196 = ssub.s32 %s195, 1
    %197 = vst [vmem:[%s1] sm:%s196] %v194
    %s198 = scalar_lea.vmem [#allocation0], 8
    %v199 = vld [vmem:[%s198] sm:%s192]
    %s200 = sshll.u32 1, 1
    %s201 = ssub.s32 %s200, 1
    %s202 = scalar_lea.vmem %s1, 1
    %203 = vst [vmem:[%s202] sm:%s201] %v199
    %s204 = scalar_lea.vmem [#allocation0], 16
    %v205 = vld [vmem:[%s204] sm:%s192]
    %s206 = sshll.u32 1, 1
    %s207 = ssub.s32 %s206, 1
    %s208 = smul.addr 1, 2
    %s209 = scalar_lea.vmem %s1, %s208
    %210 = vst [vmem:[%s209] sm:%s207] %v205
    %s211 = scalar_lea.vmem [#allocation0], 24
    %v212 = vld [vmem:[%s211] sm:%s192]
    %s213 = sshll.u32 1, 1
    %s214 = ssub.s32 %s213, 1
    %s215 = smul.addr 1, 3
    %s216 = scalar_lea.vmem %s1, %s215
    %217 = vst [vmem:[%s216] sm:%s214] %v212

// kernel: residual_block_forward.1
$region0: #{residual_block_forward.1}
  #allocation0 [shape = 'u32[]', space=smem, size = 0x4, offset = 0x4, fixed_abs, tag = 'smem constant byte address 0x4 - core index']
  #allocation1 [shape = 'u32[144,128]{1,0:T(1,128)}', space=vmem, size = 0x12000, scoped, tag = 'internal scratch']
  %s0 = inlined_call_operand.vmem [shape: bf16[16,256], index: 0, kind: input, shape index: {}]
  %s1 = inlined_call_operand.vmem [shape: bf16[256,1024], index: 1, kind: input, shape index: {}]
  %s2 = inlined_call_operand.vmem [shape: bf16[256,512], index: 2, kind: input, shape index: {}]
  %s3 = inlined_call_operand.vmem [shape: bf16[256,512], index: 3, kind: input, shape index: {}]
  %s4 = inlined_call_operand.vmem [shape: bf16[512,512], index: 4, kind: input, shape index: {}]
  %s5 = inlined_call_operand.vmem [shape: bf16[512,512], index: 5, kind: input, shape index: {}]
  %s6 = inlined_call_operand.vmem [shape: bf16[512,512], index: 6, kind: input, shape index: {}]
  %s7 = inlined_call_operand.vmem [shape: f32[1,512], index: 7, kind: input, shape index: {}]
  %s8 = inlined_call_operand.vmem [shape: f32[1,512], index: 8, kind: input, shape index: {}]
  %s9 = inlined_call_operand.vmem [shape: f32[1,512], index: 9, kind: input, shape index: {}]
  %s10 = inlined_call_operand.vmem [shape: f32[16,512], index: 10, kind: output, shape index: {}]
  %s11 = sld [smem:[#allocation0]]
  $region50: #{residual_block_forward.1} parent=0
    _
  %s13 = ssub.s32 1, %s11
  %s14 = scalar_select 0, %s13, %s11
  // Predicated region
  $region2: #{residual_block_forward.1} parent=0 // pred_check
    _
  $region3: #{residual_block_forward.1} parent=0 // pred_check_branch
    %16 = sbr.rel (0) target = $region5
  $region4: #{residual_block_forward.1} parent=0 // pred_region
    _
  $region5: #{residual_block_forward.1} parent=0 // pred_fallthru
    _
  // Predicated region
  $region6: #{residual_block_forward.1} parent=0 // pred_check
    _
  $region7: #{residual_block_forward.1} parent=0 // pred_check_branch
    %18 = sbr.rel (0) target = $region9
  $region8: #{residual_block_forward.1} parent=0 // pred_region
    _
  $region9: #{residual_block_forward.1} parent=0 // pred_fallthru
    _
  // Predicated region
  $region10: #{residual_block_forward.1} parent=0 // pred_check
    _
  $region11: #{residual_block_forward.1} parent=0 // pred_check_branch
    %20 = sbr.rel (0) target = $region13
  $region12: #{residual_block_forward.1} parent=0 // pred_region
    _
  $region13: #{residual_block_forward.1} parent=0 // pred_fallthru
    _
  // Predicated region
  $region14: #{residual_block_forward.1} parent=0 // pred_check
    _
  $region15: #{residual_block_forward.1} parent=0 // pred_check_branch
    %22 = sbr.rel (0) target = $region17
  $region16: #{residual_block_forward.1} parent=0 // pred_region
    _
  $region17: #{residual_block_forward.1} parent=0 // pred_fallthru
    _
  // Predicated region
  $region18: #{residual_block_forward.1} parent=0 // pred_check
    _
  $region19: #{residual_block_forward.1} parent=0 // pred_check_branch
    %24 = sbr.rel (0) target = $region21
  $region20: #{residual_block_forward.1} parent=0 // pred_region
    _
  $region21: #{residual_block_forward.1} parent=0 // pred_fallthru
    _
  // Predicated region
  $region22: #{residual_block_forward.1} parent=0 // pred_check
    _
  $region23: #{residual_block_forward.1} parent=0 // pred_check_branch
    %26 = sbr.rel (0) target = $region25
  $region24: #{residual_block_forward.1} parent=0 // pred_region
    _
  $region25: #{residual_block_forward.1} parent=0 // pred_fallthru
    _
  // Predicated region
  $region26: #{residual_block_forward.1} parent=0 // pred_check
    _
  $region27: #{residual_block_forward.1} parent=0 // pred_check_branch
    %28 = sbr.rel (0) target = $region29
  $region28: #{residual_block_forward.1} parent=0 // pred_region
    _
  $region29: #{residual_block_forward.1} parent=0 // pred_fallthru
    _
  // Predicated region
  $region30: #{residual_block_forward.1} parent=0 // pred_check
    _
  $region31: #{residual_block_forward.1} parent=0 // pred_check_branch
    %30 = sbr.rel (0) target = $region33
  $region32: #{residual_block_forward.1} parent=0 // pred_region
    _
  $region33: #{residual_block_forward.1} parent=0 // pred_fallthru
    _
  // Predicated region
  $region34: #{residual_block_forward.1} parent=0 // pred_check
    _
  $region35: #{residual_block_forward.1} parent=0 // pred_check_branch
    %32 = sbr.rel (0) target = $region37
  $region36: #{residual_block_forward.1} parent=0 // pred_region
    _
  $region37: #{residual_block_forward.1} parent=0 // pred_fallthru
    _
  // Predicated region
  $region38: #{residual_block_forward.1} parent=0 // pred_check
    _
  $region39: #{residual_block_forward.1} parent=0 // pred_check_branch
    %34 = sbr.rel (0) target = $region41
  $region40: #{residual_block_forward.1} parent=0 // pred_region
    _
  $region41: #{residual_block_forward.1} parent=0 // pred_fallthru
    _
  %v35 = vld [vmem:[%s0] sm:$0xff]
  %v36 = vld [vmem:[%s0 + $0x8] sm:$0xff]
  %v37 = vlaneseq
  %v38 = vshrl.u32 %v37, 7
  %v39 = vadd.s32 %v38, 8
  %vm40 = vcmp.lt.s32.totalorder %v38, 0
  %v41 = vsub.s32 0, %v38
  %v42 = vsel %vm40, %v41, %v38
  %v43 = vshrl.u32 %v42, 3
  %v44 = vand.u32 %v42, 7
  %v45 = vsub.s32 0, %v44
  %v46 = vsel %vm40, %v45, %v44
  %vm47 = vcmp.lt.s32.totalorder %v39, 0
  %v48 = vsub.s32 0, %v39
  %v49 = vsel %vm47, %v48, %v39
  %v50 = vshrl.u32 %v49, 3
  %v51 = vand.u32 %v49, 7
  %v52 = vsub.s32 0, %v51
  %v53 = vsel %vm47, %v52, %v51
  %vm54 = vcmp.ne.s32.totalorder %v46, 0
  %vm55 = vcmp.ne.s32.totalorder %v53, 0
  %vm56 = vcmp.lt.s32.totalorder %v46, 0
  %vm57 = vcmp.lt.s32.totalorder %v53, 0
  %vm58 = vmand %vm56, %vm54
  %vm59 = vmand %vm57, %vm55
  %v60 = vadd.s32 %v46, 8
  %v61 = vadd.s32 %v53, 8
  %v62 = vsel %vm58, %v60, %v46
  %v63 = vsel %vm59, %v61, %v53
  %vm64 = vcmp.ne.s32.totalorder %v62, 0
  %vm65 = vcmp.ne.s32.totalorder %v63, 0
  %vm66 = vcmp.ne.s32.totalorder %v62, 7
  %vm67 = vcmp.ne.s32.totalorder %v63, 7
  %v68 = vld [vmem:[%s1] sm:$0xff]
  %v69 = vld [vmem:[%s1 + $0x8] sm:$0xff]
  %v70 = vld [vmem:[%s1 + $0x10] sm:$0xff]
  %v71 = vld [vmem:[%s1 + $0x18] sm:$0xff]
  %v72 = vld [vmem:[%s1 + $0x20] sm:$0xff]
  %v73 = vld [vmem:[%s1 + $0x28] sm:$0xff]
  %v74 = vld [vmem:[%s1 + $0x30] sm:$0xff]
  %v75 = vld [vmem:[%s1 + $0x38] sm:$0xff]
  %v76 = vld [vmem:[%s1 + $0x40] sm:$0xff]
  %v77 = vld [vmem:[%s1 + $0x48] sm:$0xff]
  %v78 = vld [vmem:[%s1 + $0x50] sm:$0xff]
  %v79 = vld [vmem:[%s1 + $0x58] sm:$0xff]
  %v80 = vld [vmem:[%s1 + $0x60] sm:$0xff]
  %v81 = vld [vmem:[%s1 + $0x68] sm:$0xff]
  %v82 = vld [vmem:[%s1 + $0x70] sm:$0xff]
  %v83 = vld [vmem:[%s1 + $0x78] sm:$0xff]
  %v84 = vld [vmem:[%s1 + $0x80] sm:$0xff]
  %v85 = vld [vmem:[%s1 + $0x88] sm:$0xff]
  %v86 = vld [vmem:[%s1 + $0x90] sm:$0xff]
  %v87 = vld [vmem:[%s1 + $0x98] sm:$0xff]
  %v88 = vld [vmem:[%s1 + $0xa0] sm:$0xff]
  %v89 = vld [vmem:[%s1 + $0xa8] sm:$0xff]
  %v90 = vld [vmem:[%s1 + $0xb0] sm:$0xff]
  %v91 = vld [vmem:[%s1 + $0xb8] sm:$0xff]
  %v92 = vld [vmem:[%s1 + $0xc0] sm:$0xff]
  %v93 = vld [vmem:[%s1 + $0xc8] sm:$0xff]
  %v94 = vld [vmem:[%s1 + $0xd0] sm:$0xff]
  %v95 = vld [vmem:[%s1 + $0xd8] sm:$0xff]
  %v96 = vld [vmem:[%s1 + $0xe0] sm:$0xff]
  %v97 = vld [vmem:[%s1 + $0xe8] sm:$0xff]
  %v98 = vld [vmem:[%s1 + $0xf0] sm:$0xff]
  %v99 = vld [vmem:[%s1 + $0xf8] sm:$0xff]
  %v100 = vld [vmem:[%s1 + $0x100] sm:$0xff]
  %v101 = vld [vmem:[%s1 + $0x108] sm:$0xff]
  %v102 = vld [vmem:[%s1 + $0x110] sm:$0xff]
  %v103 = vld [vmem:[%s1 + $0x118] sm:$0xff]
  %v104 = vld [vmem:[%s1 + $0x120] sm:$0xff]
  %v105 = vld [vmem:[%s1 + $0x128] sm:$0xff]
  %v106 = vld [vmem:[%s1 + $0x130] sm:$0xff]
  %v107 = vld [vmem:[%s1 + $0x138] sm:$0xff]
  %v108 = vld [vmem:[%s1 + $0x140] sm:$0xff]
  %v109 = vld [vmem:[%s1 + $0x148] sm:$0xff]
  %v110 = vld [vmem:[%s1 + $0x150] sm:$0xff]
  %v111 = vld [vmem:[%s1 + $0x158] sm:$0xff]
  %v112 = vld [vmem:[%s1 + $0x160] sm:$0xff]
  %v113 = vld [vmem:[%s1 + $0x168] sm:$0xff]
  %v114 = vld [vmem:[%s1 + $0x170] sm:$0xff]
  %v115 = vld [vmem:[%s1 + $0x178] sm:$0xff]
  %v116 = vld [vmem:[%s1 + $0x180] sm:$0xff]
  %v117 = vld [vmem:[%s1 + $0x188] sm:$0xff]
  %v118 = vld [vmem:[%s1 + $0x190] sm:$0xff]
  %v119 = vld [vmem:[%s1 + $0x198] sm:$0xff]
  %v120 = vld [vmem:[%s1 + $0x1a0] sm:$0xff]
  %v121 = vld [vmem:[%s1 + $0x1a8] sm:$0xff]
  %v122 = vld [vmem:[%s1 + $0x1b0] sm:$0xff]
  %v123 = vld [vmem:[%s1 + $0x1b8] sm:$0xff]
  %v124 = vld [vmem:[%s1 + $0x1c0] sm:$0xff]
  %v125 = vld [vmem:[%s1 + $0x1c8] sm:$0xff]
  %v126 = vld [vmem:[%s1 + $0x1d0] sm:$0xff]
  %v127 = vld [vmem:[%s1 + $0x1d8] sm:$0xff]
  %v128 = vld [vmem:[%s1 + $0x1e0] sm:$0xff]
  %v129 = vld [vmem:[%s1 + $0x1e8] sm:$0xff]
  %v130 = vld [vmem:[%s1 + $0x1f0] sm:$0xff]
  %v131 = vld [vmem:[%s1 + $0x1f8] sm:$0xff]
  %v132 = vld [vmem:[%s1 + $0x200] sm:$0xff]
  %v133 = vld [vmem:[%s1 + $0x208] sm:$0xff]
  %v134 = vld [vmem:[%s1 + $0x210] sm:$0xff]
  %v135 = vld [vmem:[%s1 + $0x218] sm:$0xff]
  %v136 = vld [vmem:[%s1 + $0x220] sm:$0xff]
  %v137 = vld [vmem:[%s1 + $0x228] sm:$0xff]
  %v138 = vld [vmem:[%s1 + $0x230] sm:$0xff]
  %v139 = vld [vmem:[%s1 + $0x238] sm:$0xff]
  %v140 = vld [vmem:[%s1 + $0x240] sm:$0xff]
  %v141 = vld [vmem:[%s1 + $0x248] sm:$0xff]
  %v142 = vld [vmem:[%s1 + $0x250] sm:$0xff]
  %v143 = vld [vmem:[%s1 + $0x258] sm:$0xff]
  %v144 = vld [vmem:[%s1 + $0x260] sm:$0xff]
  %v145 = vld [vmem:[%s1 + $0x268] sm:$0xff]
  %v146 = vld [vmem:[%s1 + $0x270] sm:$0xff]
  %v147 = vld [vmem:[%s1 + $0x278] sm:$0xff]
  %v148 = vld [vmem:[%s1 + $0x280] sm:$0xff]
  %v149 = vld [vmem:[%s1 + $0x288] sm:$0xff]
  %v150 = vld [vmem:[%s1 + $0x290] sm:$0xff]
  %v151 = vld [vmem:[%s1 + $0x298] sm:$0xff]
  %v152 = vld [vmem:[%s1 + $0x2a0] sm:$0xff]
  %v153 = vld [vmem:[%s1 + $0x2a8] sm:$0xff]
  %v154 = vld [vmem:[%s1 + $0x2b0] sm:$0xff]
  %v155 = vld [vmem:[%s1 + $0x2b8] sm:$0xff]
  %v156 = vld [vmem:[%s1 + $0x2c0] sm:$0xff]
  %v157 = vld [vmem:[%s1 + $0x2c8] sm:$0xff]
  %v158 = vld [vmem:[%s1 + $0x2d0] sm:$0xff]
  %v159 = vld [vmem:[%s1 + $0x2d8] sm:$0xff]
  %v160 = vld [vmem:[%s1 + $0x2e0] sm:$0xff]
  %v161 = vld [vmem:[%s1 + $0x2e8] sm:$0xff]
  %v162 = vld [vmem:[%s1 + $0x2f0] sm:$0xff]
  %v163 = vld [vmem:[%s1 + $0x2f8] sm:$0xff]
  %v164 = vld [vmem:[%s1 + $0x300] sm:$0xff]
  %v165 = vld [vmem:[%s1 + $0x308] sm:$0xff]
  %v166 = vld [vmem:[%s1 + $0x310] sm:$0xff]
  %v167 = vld [vmem:[%s1 + $0x318] sm:$0xff]
  %v168 = vld [vmem:[%s1 + $0x320] sm:$0xff]
  %v169 = vld [vmem:[%s1 + $0x328] sm:$0xff]
  %v170 = vld [vmem:[%s1 + $0x330] sm:$0xff]
  %v171 = vld [vmem:[%s1 + $0x338] sm:$0xff]
  %v172 = vld [vmem:[%s1 + $0x340] sm:$0xff]
  %v173 = vld [vmem:[%s1 + $0x348] sm:$0xff]
  %v174 = vld [vmem:[%s1 + $0x350] sm:$0xff]
  %v175 = vld [vmem:[%s1 + $0x358] sm:$0xff]
  %v176 = vld [vmem:[%s1 + $0x360] sm:$0xff]
  %v177 = vld [vmem:[%s1 + $0x368] sm:$0xff]
  %v178 = vld [vmem:[%s1 + $0x370] sm:$0xff]
  %v179 = vld [vmem:[%s1 + $0x378] sm:$0xff]
  %v180 = vld [vmem:[%s1 + $0x380] sm:$0xff]
  %v181 = vld [vmem:[%s1 + $0x388] sm:$0xff]
  %v182 = vld [vmem:[%s1 + $0x390] sm:$0xff]
  %v183 = vld [vmem:[%s1 + $0x398] sm:$0xff]
  %v184 = vld [vmem:[%s1 + $0x3a0] sm:$0xff]
  %v185 = vld [vmem:[%s1 + $0x3a8] sm:$0xff]
  %v186 = vld [vmem:[%s1 + $0x3b0] sm:$0xff]
  %v187 = vld [vmem:[%s1 + $0x3b8] sm:$0xff]
  %v188 = vld [vmem:[%s1 + $0x3c0] sm:$0xff]
  %v189 = vld [vmem:[%s1 + $0x3c8] sm:$0xff]
  %v190 = vld [vmem:[%s1 + $0x3d0] sm:$0xff]
  %v191 = vld [vmem:[%s1 + $0x3d8] sm:$0xff]
  %v192 = vld [vmem:[%s1 + $0x3e0] sm:$0xff]
  %v193 = vld [vmem:[%s1 + $0x3e8] sm:$0xff]
  %v194 = vld [vmem:[%s1 + $0x3f0] sm:$0xff]
  %v195 = vld [vmem:[%s1 + $0x3f8] sm:$0xff]
  %v198 = vunpack.c.l.b16 %v35
  %v199 = vunpack.c.h.b16 %v35
  %v200 = vunpack.c.l.b16 %v36
  %v201 = vunpack.c.h.b16 %v36
  %v202 = vpack.c.b16 %v200, %v198
  %v203 = vpack.c.b16 %v201, %v199
  %v334 = vunpack.c.l.b16 %v68
  %v335 = vunpack.c.h.b16 %v68
  %v336 = vunpack.c.l.b16 %v69
  %v337 = vunpack.c.h.b16 %v69
  %v338 = vunpack.c.l.b16 %v70
  %v339 = vunpack.c.h.b16 %v70
  %v340 = vunpack.c.l.b16 %v71
  %v341 = vunpack.c.h.b16 %v71
  %v342 = vunpack.c.l.b16 %v72
  %v343 = vunpack.c.h.b16 %v72
  %v344 = vunpack.c.l.b16 %v73
  %v345 = vunpack.c.h.b16 %v73
  %v346 = vunpack.c.l.b16 %v74
  %v347 = vunpack.c.h.b16 %v74
  %v348 = vunpack.c.l.b16 %v75
  %v349 = vunpack.c.h.b16 %v75
  %v350 = vunpack.c.l.b16 %v76
  %v351 = vunpack.c.h.b16 %v76
  %v352 = vunpack.c.l.b16 %v77
  %v353 = vunpack.c.h.b16 %v77
  %v354 = vunpack.c.l.b16 %v78
  %v355 = vunpack.c.h.b16 %v78
  %v356 = vunpack.c.l.b16 %v79
  %v357 = vunpack.c.h.b16 %v79
  %v358 = vunpack.c.l.b16 %v80
  %v359 = vunpack.c.h.b16 %v80
  %v360 = vunpack.c.l.b16 %v81
  %v361 = vunpack.c.h.b16 %v81
  %v362 = vunpack.c.l.b16 %v82
  %v363 = vunpack.c.h.b16 %v82
  %v364 = vunpack.c.l.b16 %v83
  %v365 = vunpack.c.h.b16 %v83
  %v366 = vunpack.c.l.b16 %v84
  %v367 = vunpack.c.h.b16 %v84
  %v368 = vunpack.c.l.b16 %v85
  %v369 = vunpack.c.h.b16 %v85
  %v370 = vunpack.c.l.b16 %v86
  %v371 = vunpack.c.h.b16 %v86
  %v372 = vunpack.c.l.b16 %v87
  %v373 = vunpack.c.h.b16 %v87
  %v374 = vunpack.c.l.b16 %v88
  %v375 = vunpack.c.h.b16 %v88
  %v376 = vunpack.c.l.b16 %v89
  %v377 = vunpack.c.h.b16 %v89
  %v378 = vunpack.c.l.b16 %v90
  %v379 = vunpack.c.h.b16 %v90
  %v380 = vunpack.c.l.b16 %v91
  %v381 = vunpack.c.h.b16 %v91
  %v382 = vunpack.c.l.b16 %v92
  %v383 = vunpack.c.h.b16 %v92
  %v384 = vunpack.c.l.b16 %v93
  %v385 = vunpack.c.h.b16 %v93
  %v386 = vunpack.c.l.b16 %v94
  %v387 = vunpack.c.h.b16 %v94
  %v388 = vunpack.c.l.b16 %v95
  %v389 = vunpack.c.h.b16 %v95
  %v390 = vunpack.c.l.b16 %v96
  %v391 = vunpack.c.h.b16 %v96
  %v392 = vunpack.c.l.b16 %v97
  %v393 = vunpack.c.h.b16 %v97
  %v394 = vunpack.c.l.b16 %v98
  %v395 = vunpack.c.h.b16 %v98
  %v396 = vunpack.c.l.b16 %v99
  %v397 = vunpack.c.h.b16 %v99
  %v398 = vunpack.c.l.b16 %v100
  %v399 = vunpack.c.h.b16 %v100
  %v400 = vunpack.c.l.b16 %v101
  %v401 = vunpack.c.h.b16 %v101
  %v402 = vunpack.c.l.b16 %v102
  %v403 = vunpack.c.h.b16 %v102
  %v404 = vunpack.c.l.b16 %v103
  %v405 = vunpack.c.h.b16 %v103
  %v406 = vunpack.c.l.b16 %v104
  %v407 = vunpack.c.h.b16 %v104
  %v408 = vunpack.c.l.b16 %v105
  %v409 = vunpack.c.h.b16 %v105
  %v410 = vunpack.c.l.b16 %v106
  %v411 = vunpack.c.h.b16 %v106
  %v412 = vunpack.c.l.b16 %v107
  %v413 = vunpack.c.h.b16 %v107
  %v414 = vunpack.c.l.b16 %v108
  %v415 = vunpack.c.h.b16 %v108
  %v416 = vunpack.c.l.b16 %v109
  %v417 = vunpack.c.h.b16 %v109
  %v418 = vunpack.c.l.b16 %v110
  %v419 = vunpack.c.h.b16 %v110
  %v420 = vunpack.c.l.b16 %v111
  %v421 = vunpack.c.h.b16 %v111
  %v422 = vunpack.c.l.b16 %v112
  %v423 = vunpack.c.h.b16 %v112
  %v424 = vunpack.c.l.b16 %v113
  %v425 = vunpack.c.h.b16 %v113
  %v426 = vunpack.c.l.b16 %v114
  %v427 = vunpack.c.h.b16 %v114
  %v428 = vunpack.c.l.b16 %v115
  %v429 = vunpack.c.h.b16 %v115
  %v430 = vunpack.c.l.b16 %v116
  %v431 = vunpack.c.h.b16 %v116
  %v432 = vunpack.c.l.b16 %v117
  %v433 = vunpack.c.h.b16 %v117
  %v434 = vunpack.c.l.b16 %v118
  %v435 = vunpack.c.h.b16 %v118
  %v436 = vunpack.c.l.b16 %v119
  %v437 = vunpack.c.h.b16 %v119
  %v438 = vunpack.c.l.b16 %v120
  %v439 = vunpack.c.h.b16 %v120
  %v440 = vunpack.c.l.b16 %v121
  %v441 = vunpack.c.h.b16 %v121
  %v442 = vunpack.c.l.b16 %v122
  %v443 = vunpack.c.h.b16 %v122
  %v444 = vunpack.c.l.b16 %v123
  %v445 = vunpack.c.h.b16 %v123
  %v446 = vunpack.c.l.b16 %v124
  %v447 = vunpack.c.h.b16 %v124
  %v448 = vunpack.c.l.b16 %v125
  %v449 = vunpack.c.h.b16 %v125
  %v450 = vunpack.c.l.b16 %v126
  %v451 = vunpack.c.h.b16 %v126
  %v452 = vunpack.c.l.b16 %v127
  %v453 = vunpack.c.h.b16 %v127
  %v454 = vunpack.c.l.b16 %v128
  %v455 = vunpack.c.h.b16 %v128
  %v456 = vunpack.c.l.b16 %v129
  %v457 = vunpack.c.h.b16 %v129
  %v458 = vunpack.c.l.b16 %v130
  %v459 = vunpack.c.h.b16 %v130
  %v460 = vunpack.c.l.b16 %v131
  %v461 = vunpack.c.h.b16 %v131
  %v462 = vunpack.c.l.b16 %v132
  %v463 = vunpack.c.h.b16 %v132
  %v464 = vunpack.c.l.b16 %v133
  %v465 = vunpack.c.h.b16 %v133
  %v466 = vunpack.c.l.b16 %v134
  %v467 = vunpack.c.h.b16 %v134
  %v468 = vunpack.c.l.b16 %v135
  %v469 = vunpack.c.h.b16 %v135
  %v470 = vunpack.c.l.b16 %v136
  %v471 = vunpack.c.h.b16 %v136
  %v472 = vunpack.c.l.b16 %v137
  %v473 = vunpack.c.h.b16 %v137
  %v474 = vunpack.c.l.b16 %v138
  %v475 = vunpack.c.h.b16 %v138
  %v476 = vunpack.c.l.b16 %v139
  %v477 = vunpack.c.h.b16 %v139
  %v478 = vunpack.c.l.b16 %v140
  %v479 = vunpack.c.h.b16 %v140
  %v480 = vunpack.c.l.b16 %v141
  %v481 = vunpack.c.h.b16 %v141
  %v482 = vunpack.c.l.b16 %v142
  %v483 = vunpack.c.h.b16 %v142
  %v484 = vunpack.c.l.b16 %v143
  %v485 = vunpack.c.h.b16 %v143
  %v486 = vunpack.c.l.b16 %v144
  %v487 = vunpack.c.h.b16 %v144
  %v488 = vunpack.c.l.b16 %v145
  %v489 = vunpack.c.h.b16 %v145
  %v490 = vunpack.c.l.b16 %v146
  %v491 = vunpack.c.h.b16 %v146
  %v492 = vunpack.c.l.b16 %v147
  %v493 = vunpack.c.h.b16 %v147
  %v494 = vunpack.c.l.b16 %v148
  %v495 = vunpack.c.h.b16 %v148
  %v496 = vunpack.c.l.b16 %v149
  %v497 = vunpack.c.h.b16 %v149
  %v498 = vunpack.c.l.b16 %v150
  %v499 = vunpack.c.h.b16 %v150
  %v500 = vunpack.c.l.b16 %v151
  %v501 = vunpack.c.h.b16 %v151
  %v502 = vunpack.c.l.b16 %v152
  %v503 = vunpack.c.h.b16 %v152
  %v504 = vunpack.c.l.b16 %v153
  %v505 = vunpack.c.h.b16 %v153
  %v506 = vunpack.c.l.b16 %v154
  %v507 = vunpack.c.h.b16 %v154
  %v508 = vunpack.c.l.b16 %v155
  %v509 = vunpack.c.h.b16 %v155
  %v510 = vunpack.c.l.b16 %v156
  %v511 = vunpack.c.h.b16 %v156
  %v512 = vunpack.c.l.b16 %v157
  %v513 = vunpack.c.h.b16 %v157
  %v514 = vunpack.c.l.b16 %v158
  %v515 = vunpack.c.h.b16 %v158
  %v516 = vunpack.c.l.b16 %v159
  %v517 = vunpack.c.h.b16 %v159
  %v518 = vunpack.c.l.b16 %v160
  %v519 = vunpack.c.h.b16 %v160
  %v520 = vunpack.c.l.b16 %v161
  %v521 = vunpack.c.h.b16 %v161
  %v522 = vunpack.c.l.b16 %v162
  %v523 = vunpack.c.h.b16 %v162
  %v524 = vunpack.c.l.b16 %v163
  %v525 = vunpack.c.h.b16 %v163
  %v526 = vunpack.c.l.b16 %v164
  %v527 = vunpack.c.h.b16 %v164
  %v528 = vunpack.c.l.b16 %v165
  %v529 = vunpack.c.h.b16 %v165
  %v530 = vunpack.c.l.b16 %v166
  %v531 = vunpack.c.h.b16 %v166
  %v532 = vunpack.c.l.b16 %v167
  %v533 = vunpack.c.h.b16 %v167
  %v534 = vunpack.c.l.b16 %v168
  %v535 = vunpack.c.h.b16 %v168
  %v536 = vunpack.c.l.b16 %v169
  %v537 = vunpack.c.h.b16 %v169
  %v538 = vunpack.c.l.b16 %v170
  %v539 = vunpack.c.h.b16 %v170
  %v540 = vunpack.c.l.b16 %v171
  %v541 = vunpack.c.h.b16 %v171
  %v542 = vunpack.c.l.b16 %v172
  %v543 = vunpack.c.h.b16 %v172
  %v544 = vunpack.c.l.b16 %v173
  %v545 = vunpack.c.h.b16 %v173
  %v546 = vunpack.c.l.b16 %v174
  %v547 = vunpack.c.h.b16 %v174
  %v548 = vunpack.c.l.b16 %v175
  %v549 = vunpack.c.h.b16 %v175
  %v550 = vunpack.c.l.b16 %v176
  %v551 = vunpack.c.h.b16 %v176
  %v552 = vunpack.c.l.b16 %v177
  %v553 = vunpack.c.h.b16 %v177
  %v554 = vunpack.c.l.b16 %v178
  %v555 = vunpack.c.h.b16 %v178
  %v556 = vunpack.c.l.b16 %v179
  %v557 = vunpack.c.h.b16 %v179
  %v558 = vunpack.c.l.b16 %v180
  %v559 = vunpack.c.h.b16 %v180
  %v560 = vunpack.c.l.b16 %v181
  %v561 = vunpack.c.h.b16 %v181
  %v562 = vunpack.c.l.b16 %v182
  %v563 = vunpack.c.h.b16 %v182
  %v564 = vunpack.c.l.b16 %v183
  %v565 = vunpack.c.h.b16 %v183
  %v566 = vunpack.c.l.b16 %v184
  %v567 = vunpack.c.h.b16 %v184
  %v568 = vunpack.c.l.b16 %v185
  %v569 = vunpack.c.h.b16 %v185
  %v570 = vunpack.c.l.b16 %v186
  %v571 = vunpack.c.h.b16 %v186
  %v572 = vunpack.c.l.b16 %v187
  %v573 = vunpack.c.h.b16 %v187
  %v574 = vunpack.c.l.b16 %v188
  %v575 = vunpack.c.h.b16 %v188
  %v576 = vunpack.c.l.b16 %v189
  %v577 = vunpack.c.h.b16 %v189
  %v578 = vunpack.c.l.b16 %v190
  %v579 = vunpack.c.h.b16 %v190
  %v580 = vunpack.c.l.b16 %v191
  %v581 = vunpack.c.h.b16 %v191
  %v582 = vunpack.c.l.b16 %v192
  %v583 = vunpack.c.h.b16 %v192
  %v584 = vunpack.c.l.b16 %v193
  %v585 = vunpack.c.h.b16 %v193
  %v586 = vunpack.c.l.b16 %v194
  %v587 = vunpack.c.h.b16 %v194
  %v588 = vunpack.c.l.b16 %v195
  %v589 = vunpack.c.h.b16 %v195
  %v590 = vpack.c.b16 %v342, %v334
  %v591 = vpack.c.b16 %v343, %v335
  %v592 = vpack.c.b16 %v344, %v336
  %v593 = vpack.c.b16 %v345, %v337
  %v594 = vpack.c.b16 %v346, %v338
  %v595 = vpack.c.b16 %v347, %v339
  %v596 = vpack.c.b16 %v348, %v340
  %v597 = vpack.c.b16 %v349, %v341
  %v598 = vpack.c.b16 %v358, %v350
  %v599 = vpack.c.b16 %v359, %v351
  %v600 = vpack.c.b16 %v360, %v352
  %v601 = vpack.c.b16 %v361, %v353
  %v602 = vpack.c.b16 %v362, %v354
  %v603 = vpack.c.b16 %v363, %v355
  %v604 = vpack.c.b16 %v364, %v356
  %v605 = vpack.c.b16 %v365, %v357
  %v606 = vpack.c.b16 %v374, %v366
  %v607 = vpack.c.b16 %v375, %v367
  %v608 = vpack.c.b16 %v376, %v368
  %v609 = vpack.c.b16 %v377, %v369
  %v610 = vpack.c.b16 %v378, %v370
  %v611 = vpack.c.b16 %v379, %v371
  %v612 = vpack.c.b16 %v380, %v372
  %v613 = vpack.c.b16 %v381, %v373
  %v614 = vpack.c.b16 %v390, %v382
  %v615 = vpack.c.b16 %v391, %v383
  %v616 = vpack.c.b16 %v392, %v384
  %v617 = vpack.c.b16 %v393, %v385
  %v618 = vpack.c.b16 %v394, %v386
  %v619 = vpack.c.b16 %v395, %v387
  %v620 = vpack.c.b16 %v396, %v388
  %v621 = vpack.c.b16 %v397, %v389
  %v622 = vpack.c.b16 %v406, %v398
  %v623 = vpack.c.b16 %v407, %v399
  %v624 = vpack.c.b16 %v408, %v400
  %v625 = vpack.c.b16 %v409, %v401
  %v626 = vpack.c.b16 %v410, %v402
  %v627 = vpack.c.b16 %v411, %v403
  %v628 = vpack.c.b16 %v412, %v404
  %v629 = vpack.c.b16 %v413, %v405
  %v630 = vpack.c.b16 %v422, %v414
  %v631 = vpack.c.b16 %v423, %v415
  %v632 = vpack.c.b16 %v424, %v416
  %v633 = vpack.c.b16 %v425, %v417
  %v634 = vpack.c.b16 %v426, %v418
  %v635 = vpack.c.b16 %v427, %v419
  %v636 = vpack.c.b16 %v428, %v420
  %v637 = vpack.c.b16 %v429, %v421
  %v638 = vpack.c.b16 %v438, %v430
  %v639 = vpack.c.b16 %v439, %v431
  %v640 = vpack.c.b16 %v440, %v432
  %v641 = vpack.c.b16 %v441, %v433
  %v642 = vpack.c.b16 %v442, %v434
  %v643 = vpack.c.b16 %v443, %v435
  %v644 = vpack.c.b16 %v444, %v436
  %v645 = vpack.c.b16 %v445, %v437
  %v646 = vpack.c.b16 %v454, %v446
  %v647 = vpack.c.b16 %v455, %v447
  %v648 = vpack.c.b16 %v456, %v448
  %v649 = vpack.c.b16 %v457, %v449
  %v650 = vpack.c.b16 %v458, %v450
  %v651 = vpack.c.b16 %v459, %v451
  %v652 = vpack.c.b16 %v460, %v452
  %v653 = vpack.c.b16 %v461, %v453
  %v654 = vpack.c.b16 %v470, %v462
  %v655 = vpack.c.b16 %v471, %v463
  %v656 = vpack.c.b16 %v472, %v464
  %v657 = vpack.c.b16 %v473, %v465
  %v658 = vpack.c.b16 %v474, %v466
  %v659 = vpack.c.b16 %v475, %v467
  %v660 = vpack.c.b16 %v476, %v468
  %v661 = vpack.c.b16 %v477, %v469
  %v662 = vpack.c.b16 %v486, %v478
  %v663 = vpack.c.b16 %v487, %v479
  %v664 = vpack.c.b16 %v488, %v480
  %v665 = vpack.c.b16 %v489, %v481
  %v666 = vpack.c.b16 %v490, %v482
  %v667 = vpack.c.b16 %v491, %v483
  %v668 = vpack.c.b16 %v492, %v484
  %v669 = vpack.c.b16 %v493, %v485
  %v670 = vpack.c.b16 %v502, %v494
  %v671 = vpack.c.b16 %v503, %v495
  %v672 = vpack.c.b16 %v504, %v496
  %v673 = vpack.c.b16 %v505, %v497
  %v674 = vpack.c.b16 %v506, %v498
  %v675 = vpack.c.b16 %v507, %v499
  %v676 = vpack.c.b16 %v508, %v500
  %v677 = vpack.c.b16 %v509, %v501
  %v678 = vpack.c.b16 %v518, %v510
  %v679 = vpack.c.b16 %v519, %v511
  %v680 = vpack.c.b16 %v520, %v512
  %v681 = vpack.c.b16 %v521, %v513
  %v682 = vpack.c.b16 %v522, %v514
  %v683 = vpack.c.b16 %v523, %v515
  %v684 = vpack.c.b16 %v524, %v516
  %v685 = vpack.c.b16 %v525, %v517
  %v686 = vpack.c.b16 %v534, %v526
  %v687 = vpack.c.b16 %v535, %v527
  %v688 = vpack.c.b16 %v536, %v528
  %v689 = vpack.c.b16 %v537, %v529
  %v690 = vpack.c.b16 %v538, %v530
  %v691 = vpack.c.b16 %v539, %v531
  %v692 = vpack.c.b16 %v540, %v532
  %v693 = vpack.c.b16 %v541, %v533
  %v694 = vpack.c.b16 %v550, %v542
  %v695 = vpack.c.b16 %v551, %v543
  %v696 = vpack.c.b16 %v552, %v544
  %v697 = vpack.c.b16 %v553, %v545
  %v698 = vpack.c.b16 %v554, %v546
  %v699 = vpack.c.b16 %v555, %v547
  %v700 = vpack.c.b16 %v556, %v548
  %v701 = vpack.c.b16 %v557, %v549
  %v702 = vpack.c.b16 %v566, %v558
  %v703 = vpack.c.b16 %v567, %v559
  %v704 = vpack.c.b16 %v568, %v560
  %v705 = vpack.c.b16 %v569, %v561
  %v706 = vpack.c.b16 %v570, %v562
  %v707 = vpack.c.b16 %v571, %v563
  %v708 = vpack.c.b16 %v572, %v564
  %v709 = vpack.c.b16 %v573, %v565
  %v710 = vpack.c.b16 %v582, %v574
  %v711 = vpack.c.b16 %v583, %v575
  %v712 = vpack.c.b16 %v584, %v576
  %v713 = vpack.c.b16 %v585, %v577
  %v714 = vpack.c.b16 %v586, %v578
  %v715 = vpack.c.b16 %v587, %v579
  %v716 = vpack.c.b16 %v588, %v580
  %v717 = vpack.c.b16 %v589, %v581
  %846 = vmatprep.subr.bf16.mxu0 %v647
  %847 = vmatpush1.bf16.msra.mxu0 %v646
  %848 = vmatprep.subr.bf16.mxu0 %v639
  %849 = vmatpush1.bf16.msra.mxu0 %v638
  %850 = vmatprep.subr.bf16.mxu0 %v631
  %851 = vmatpush1.bf16.msra.mxu0 %v630
  %852 = vmatprep.subr.bf16.mxu0 %v623
  %853 = vmatpush1.bf16.msra.mxu0 %v622
  %854 = vmatprep.subr.bf16.mxu0 %v615
  %855 = vmatpush1.bf16.msra.mxu0 %v614
  %856 = vmatprep.subr.bf16.mxu0 %v607
  %857 = vmatpush1.bf16.msra.mxu0 %v606
  %858 = vmatprep.subr.bf16.mxu0 %v599
  %859 = vmatpush1.bf16.msra.mxu0 %v598
  %860 = vmatprep.subr.bf16.mxu0 %v591
  %861 = vmatpush1.bf16.msra.mxu0 %v590
  %862 = vmatprep.subr.bf16.mxu0 %v711
  %863 = vmatpush2.bf16.msra.mxu0 %v710
  %864 = vmatprep.subr.bf16.mxu0 %v703
  %865 = vmatpush2.bf16.msra.mxu0 %v702
  %866 = vmatprep.subr.bf16.mxu0 %v695
  %867 = vmatpush2.bf16.msra.mxu0 %v694
  %868 = vmatprep.subr.bf16.mxu0 %v687
  %869 = vmatpush2.bf16.msra.mxu0 %v686
  %870 = vmatprep.subr.bf16.mxu0 %v679
  %871 = vmatpush2.bf16.msra.mxu0 %v678
  %872 = vmatprep.subr.bf16.mxu0 %v671
  %873 = vmatpush2.bf16.msra.mxu0 %v670
  %874 = vmatprep.subr.bf16.mxu0 %v663
  %875 = vmatpush2.bf16.msra.mxu0 %v662
  %876 = vmatprep.subr.bf16.mxu0 %v655
  %877 = vmatpush2.bf16.msra.mxu0 %v654
  %878 = vmatprep.mubr.bf16.mxu0 %v203
  %879 = vmatmul.mubr.bf16.gmra.mxu0 %v202
  %v880 = vpop.f32.mrf.mxu0
  %v881 = vadd.f32 0.0, %v880
  %v882 = vpop.f32.mrf.mxu0
  %v883 = vadd.f32 0.0, %v882
  %v884 = vpop.f32.mrf.mxu0
  %v885 = vadd.f32 0.0, %v884
  %v886 = vpop.f32.mrf.mxu0
  %v887 = vadd.f32 0.0, %v886
  %888 = vdwg.mxu0
  %889 = vmatprep.subr.bf16.mxu0 %v649
  %890 = vmatpush1.bf16.msra.mxu0 %v648
  %891 = vmatprep.subr.bf16.mxu0 %v641
  %892 = vmatpush1.bf16.msra.mxu0 %v640
  %893 = vmatprep.subr.bf16.mxu0 %v633
  %894 = vmatpush1.bf16.msra.mxu0 %v632
  %895 = vmatprep.subr.bf16.mxu0 %v625
  %896 = vmatpush1.bf16.msra.mxu0 %v624
  %897 = vmatprep.subr.bf16.mxu0 %v617
  %898 = vmatpush1.bf16.msra.mxu0 %v616
  %899 = vmatprep.subr.bf16.mxu0 %v609
  %900 = vmatpush1.bf16.msra.mxu0 %v608
  %901 = vmatprep.subr.bf16.mxu0 %v601
  %902 = vmatpush1.bf16.msra.mxu0 %v600
  %903 = vmatprep.subr.bf16.mxu0 %v593
  %904 = vmatpush1.bf16.msra.mxu0 %v592
  %905 = vmatprep.subr.bf16.mxu0 %v713
  %906 = vmatpush2.bf16.msra.mxu0 %v712
  %907 = vmatprep.subr.bf16.mxu0 %v705
  %908 = vmatpush2.bf16.msra.mxu0 %v704
  %909 = vmatprep.subr.bf16.mxu0 %v697
  %910 = vmatpush2.bf16.msra.mxu0 %v696
  %911 = vmatprep.subr.bf16.mxu0 %v689
  %912 = vmatpush2.bf16.msra.mxu0 %v688
  %913 = vmatprep.subr.bf16.mxu0 %v681
  %914 = vmatpush2.bf16.msra.mxu0 %v680
  %915 = vmatprep.subr.bf16.mxu0 %v673
  %916 = vmatpush2.bf16.msra.mxu0 %v672
  %917 = vmatprep.subr.bf16.mxu0 %v665
  %918 = vmatpush2.bf16.msra.mxu0 %v664
  %919 = vmatprep.subr.bf16.mxu0 %v657
  %920 = vmatpush2.bf16.msra.mxu0 %v656
  %921 = vmatprep.mubr.bf16.mxu0 %v203
  %922 = vmatmul.mubr.bf16.gmra.mxu0 %v202
  %v923 = vpop.f32.mrf.mxu0
  %v924 = vadd.f32 0.0, %v923
  %v925 = vpop.f32.mrf.mxu0
  %v926 = vadd.f32 0.0, %v925
  %v927 = vpop.f32.mrf.mxu0
  %v928 = vadd.f32 0.0, %v927
  %v929 = vpop.f32.mrf.mxu0
  %v930 = vadd.f32 0.0, %v929
  %931 = vdwg.mxu0
  %932 = vmatprep.subr.bf16.mxu0 %v651
  %933 = vmatpush1.bf16.msra.mxu0 %v650
  %934 = vmatprep.subr.bf16.mxu0 %v643
  %935 = vmatpush1.bf16.msra.mxu0 %v642
  %936 = vmatprep.subr.bf16.mxu0 %v635
  %937 = vmatpush1.bf16.msra.mxu0 %v634
  %938 = vmatprep.subr.bf16.mxu0 %v627
  %939 = vmatpush1.bf16.msra.mxu0 %v626
  %940 = vmatprep.subr.bf16.mxu0 %v619
  %941 = vmatpush1.bf16.msra.mxu0 %v618
  %942 = vmatprep.subr.bf16.mxu0 %v611
  %943 = vmatpush1.bf16.msra.mxu0 %v610
  %944 = vmatprep.subr.bf16.mxu0 %v603
  %945 = vmatpush1.bf16.msra.mxu0 %v602
  %946 = vmatprep.subr.bf16.mxu0 %v595
  %947 = vmatpush1.bf16.msra.mxu0 %v594
  %948 = vmatprep.subr.bf16.mxu0 %v715
  %949 = vmatpush2.bf16.msra.mxu0 %v714
  %950 = vmatprep.subr.bf16.mxu0 %v707
  %951 = vmatpush2.bf16.msra.mxu0 %v706
  %952 = vmatprep.subr.bf16.mxu0 %v699
  %953 = vmatpush2.bf16.msra.mxu0 %v698
  %954 = vmatprep.subr.bf16.mxu0 %v691
  %955 = vmatpush2.bf16.msra.mxu0 %v690
  %956 = vmatprep.subr.bf16.mxu0 %v683
  %957 = vmatpush2.bf16.msra.mxu0 %v682
  %958 = vmatprep.subr.bf16.mxu0 %v675
  %959 = vmatpush2.bf16.msra.mxu0 %v674
  %960 = vmatprep.subr.bf16.mxu0 %v667
  %961 = vmatpush2.bf16.msra.mxu0 %v666
  %962 = vmatprep.subr.bf16.mxu0 %v659
  %963 = vmatpush2.bf16.msra.mxu0 %v658
  %964 = vmatprep.mubr.bf16.mxu0 %v203
  %965 = vmatmul.mubr.bf16.gmra.mxu0 %v202
  %v966 = vpop.f32.mrf.mxu0
  %v967 = vadd.f32 0.0, %v966
  %v968 = vpop.f32.mrf.mxu0
  %v969 = vadd.f32 0.0, %v968
  %v970 = vpop.f32.mrf.mxu0
  %v971 = vadd.f32 0.0, %v970
  %v972 = vpop.f32.mrf.mxu0
  %v973 = vadd.f32 0.0, %v972
  %974 = vdwg.mxu0
  %975 = vmatprep.subr.bf16.mxu0 %v653
  %976 = vmatpush1.bf16.msra.mxu0 %v652
  %977 = vmatprep.subr.bf16.mxu0 %v645
  %978 = vmatpush1.bf16.msra.mxu0 %v644
  %979 = vmatprep.subr.bf16.mxu0 %v637
  %980 = vmatpush1.bf16.msra.mxu0 %v636
  %981 = vmatprep.subr.bf16.mxu0 %v629
  %982 = vmatpush1.bf16.msra.mxu0 %v628
  %983 = vmatprep.subr.bf16.mxu0 %v621
  %984 = vmatpush1.bf16.msra.mxu0 %v620
  %985 = vmatprep.subr.bf16.mxu0 %v613
  %986 = vmatpush1.bf16.msra.mxu0 %v612
  %987 = vmatprep.subr.bf16.mxu0 %v605
  %988 = vmatpush1.bf16.msra.mxu0 %v604
  %989 = vmatprep.subr.bf16.mxu0 %v597
  %990 = vmatpush1.bf16.msra.mxu0 %v596
  %991 = vmatprep.subr.bf16.mxu0 %v717
  %992 = vmatpush2.bf16.msra.mxu0 %v716
  %993 = vmatprep.subr.bf16.mxu0 %v709
  %994 = vmatpush2.bf16.msra.mxu0 %v708
  %995 = vmatprep.subr.bf16.mxu0 %v701
  %996 = vmatpush2.bf16.msra.mxu0 %v700
  %997 = vmatprep.subr.bf16.mxu0 %v693
  %998 = vmatpush2.bf16.msra.mxu0 %v692
  %999 = vmatprep.subr.bf16.mxu0 %v685
  %1000 = vmatpush2.bf16.msra.mxu0 %v684
  %1001 = vmatprep.subr.bf16.mxu0 %v677
  %1002 = vmatpush2.bf16.msra.mxu0 %v676
  %1003 = vmatprep.subr.bf16.mxu0 %v669
  %1004 = vmatpush2.bf16.msra.mxu0 %v668
  %1005 = vmatprep.subr.bf16.mxu0 %v661
  %1006 = vmatpush2.bf16.msra.mxu0 %v660
  %1007 = vmatprep.mubr.bf16.mxu0 %v203
  %1008 = vmatmul.mubr.bf16.gmra.mxu0 %v202
  %v1009 = vpop.f32.mrf.mxu0
  %v1010 = vadd.f32 0.0, %v1009
  %v1011 = vpop.f32.mrf.mxu0
  %v1012 = vadd.f32 0.0, %v1011
  %v1013 = vpop.f32.mrf.mxu0
  %v1014 = vadd.f32 0.0, %v1013
  %v1015 = vpop.f32.mrf.mxu0
  %v1016 = vadd.f32 0.0, %v1015
  %1017 = vdwg.mxu0
  %v1018 = vld [vmem:[%s2] sm:$0xff]
  %v1019 = vld [vmem:[%s2 + $0x8] sm:$0xff]
  %v1020 = vld [vmem:[%s2 + $0x10] sm:$0xff]
  %v1021 = vld [vmem:[%s2 + $0x18] sm:$0xff]
  %v1022 = vld [vmem:[%s2 + $0x20] sm:$0xff]
  %v1023 = vld [vmem:[%s2 + $0x28] sm:$0xff]
  %v1024 = vld [vmem:[%s2 + $0x30] sm:$0xff]
  %v1025 = vld [vmem:[%s2 + $0x38] sm:$0xff]
  %v1026 = vld [vmem:[%s2 + $0x40] sm:$0xff]
  %v1027 = vld [vmem:[%s2 + $0x48] sm:$0xff]
  %v1028 = vld [vmem:[%s2 + $0x50] sm:$0xff]
  %v1029 = vld [vmem:[%s2 + $0x58] sm:$0xff]
  %v1030 = vld [vmem:[%s2 + $0x60] sm:$0xff]
  %v1031 = vld [vmem:[%s2 + $0x68] sm:$0xff]
  %v1032 = vld [vmem:[%s2 + $0x70] sm:$0xff]
  %v1033 = vld [vmem:[%s2 + $0x78] sm:$0xff]
  %v1034 = vld [vmem:[%s2 + $0x80] sm:$0xff]
  %v1035 = vld [vmem:[%s2 + $0x88] sm:$0xff]
  %v1036 = vld [vmem:[%s2 + $0x90] sm:$0xff]
  %v1037 = vld [vmem:[%s2 + $0x98] sm:$0xff]
  %v1038 = vld [vmem:[%s2 + $0xa0] sm:$0xff]
  %v1039 = vld [vmem:[%s2 + $0xa8] sm:$0xff]
  %v1040 = vld [vmem:[%s2 + $0xb0] sm:$0xff]
  %v1041 = vld [vmem:[%s2 + $0xb8] sm:$0xff]
  %v1042 = vld [vmem:[%s2 + $0xc0] sm:$0xff]
  %v1043 = vld [vmem:[%s2 + $0xc8] sm:$0xff]
  %v1044 = vld [vmem:[%s2 + $0xd0] sm:$0xff]
  %v1045 = vld [vmem:[%s2 + $0xd8] sm:$0xff]
  %v1046 = vld [vmem:[%s2 + $0xe0] sm:$0xff]
  %v1047 = vld [vmem:[%s2 + $0xe8] sm:$0xff]
  %v1048 = vld [vmem:[%s2 + $0xf0] sm:$0xff]
  %v1049 = vld [vmem:[%s2 + $0xf8] sm:$0xff]
  %v1050 = vld [vmem:[%s2 + $0x100] sm:$0xff]
  %v1051 = vld [vmem:[%s2 + $0x108] sm:$0xff]
  %v1052 = vld [vmem:[%s2 + $0x110] sm:$0xff]
  %v1053 = vld [vmem:[%s2 + $0x118] sm:$0xff]
  %v1054 = vld [vmem:[%s2 + $0x120] sm:$0xff]
  %v1055 = vld [vmem:[%s2 + $0x128] sm:$0xff]
  %v1056 = vld [vmem:[%s2 + $0x130] sm:$0xff]
  %v1057 = vld [vmem:[%s2 + $0x138] sm:$0xff]
  %v1058 = vld [vmem:[%s2 + $0x140] sm:$0xff]
  %v1059 = vld [vmem:[%s2 + $0x148] sm:$0xff]
  %v1060 = vld [vmem:[%s2 + $0x150] sm:$0xff]
  %v1061 = vld [vmem:[%s2 + $0x158] sm:$0xff]
  %v1062 = vld [vmem:[%s2 + $0x160] sm:$0xff]
  %v1063 = vld [vmem:[%s2 + $0x168] sm:$0xff]
  %v1064 = vld [vmem:[%s2 + $0x170] sm:$0xff]
  %v1065 = vld [vmem:[%s2 + $0x178] sm:$0xff]
  %v1066 = vld [vmem:[%s2 + $0x180] sm:$0xff]
  %v1067 = vld [vmem:[%s2 + $0x188] sm:$0xff]
  %v1068 = vld [vmem:[%s2 + $0x190] sm:$0xff]
  %v1069 = vld [vmem:[%s2 + $0x198] sm:$0xff]
  %v1070 = vld [vmem:[%s2 + $0x1a0] sm:$0xff]
  %v1071 = vld [vmem:[%s2 + $0x1a8] sm:$0xff]
  %v1072 = vld [vmem:[%s2 + $0x1b0] sm:$0xff]
  %v1073 = vld [vmem:[%s2 + $0x1b8] sm:$0xff]
  %v1074 = vld [vmem:[%s2 + $0x1c0] sm:$0xff]
  %v1075 = vld [vmem:[%s2 + $0x1c8] sm:$0xff]
  %v1076 = vld [vmem:[%s2 + $0x1d0] sm:$0xff]
  %v1077 = vld [vmem:[%s2 + $0x1d8] sm:$0xff]
  %v1078 = vld [vmem:[%s2 + $0x1e0] sm:$0xff]
  %v1079 = vld [vmem:[%s2 + $0x1e8] sm:$0xff]
  %v1080 = vld [vmem:[%s2 + $0x1f0] sm:$0xff]
  %v1081 = vld [vmem:[%s2 + $0x1f8] sm:$0xff]
  %v1146 = vunpack.c.l.b16 %v1018
  %v1147 = vunpack.c.h.b16 %v1018
  %v1148 = vunpack.c.l.b16 %v1019
  %v1149 = vunpack.c.h.b16 %v1019
  %v1150 = vunpack.c.l.b16 %v1020
  %v1151 = vunpack.c.h.b16 %v1020
  %v1152 = vunpack.c.l.b16 %v1021
  %v1153 = vunpack.c.h.b16 %v1021
  %v1154 = vunpack.c.l.b16 %v1022
  %v1155 = vunpack.c.h.b16 %v1022
  %v1156 = vunpack.c.l.b16 %v1023
  %v1157 = vunpack.c.h.b16 %v1023
  %v1158 = vunpack.c.l.b16 %v1024
  %v1159 = vunpack.c.h.b16 %v1024
  %v1160 = vunpack.c.l.b16 %v1025
  %v1161 = vunpack.c.h.b16 %v1025
  %v1162 = vunpack.c.l.b16 %v1026
  %v1163 = vunpack.c.h.b16 %v1026
  %v1164 = vunpack.c.l.b16 %v1027
  %v1165 = vunpack.c.h.b16 %v1027
  %v1166 = vunpack.c.l.b16 %v1028
  %v1167 = vunpack.c.h.b16 %v1028
  %v1168 = vunpack.c.l.b16 %v1029
  %v1169 = vunpack.c.h.b16 %v1029
  %v1170 = vunpack.c.l.b16 %v1030
  %v1171 = vunpack.c.h.b16 %v1030
  %v1172 = vunpack.c.l.b16 %v1031
  %v1173 = vunpack.c.h.b16 %v1031
  %v1174 = vunpack.c.l.b16 %v1032
  %v1175 = vunpack.c.h.b16 %v1032
  %v1176 = vunpack.c.l.b16 %v1033
  %v1177 = vunpack.c.h.b16 %v1033
  %v1178 = vunpack.c.l.b16 %v1034
  %v1179 = vunpack.c.h.b16 %v1034
  %v1180 = vunpack.c.l.b16 %v1035
  %v1181 = vunpack.c.h.b16 %v1035
  %v1182 = vunpack.c.l.b16 %v1036
  %v1183 = vunpack.c.h.b16 %v1036
  %v1184 = vunpack.c.l.b16 %v1037
  %v1185 = vunpack.c.h.b16 %v1037
  %v1186 = vunpack.c.l.b16 %v1038
  %v1187 = vunpack.c.h.b16 %v1038
  %v1188 = vunpack.c.l.b16 %v1039
  %v1189 = vunpack.c.h.b16 %v1039
  %v1190 = vunpack.c.l.b16 %v1040
  %v1191 = vunpack.c.h.b16 %v1040
  %v1192 = vunpack.c.l.b16 %v1041
  %v1193 = vunpack.c.h.b16 %v1041
  %v1194 = vunpack.c.l.b16 %v1042
  %v1195 = vunpack.c.h.b16 %v1042
  %v1196 = vunpack.c.l.b16 %v1043
  %v1197 = vunpack.c.h.b16 %v1043
  %v1198 = vunpack.c.l.b16 %v1044
  %v1199 = vunpack.c.h.b16 %v1044
  %v1200 = vunpack.c.l.b16 %v1045
  %v1201 = vunpack.c.h.b16 %v1045
  %v1202 = vunpack.c.l.b16 %v1046
  %v1203 = vunpack.c.h.b16 %v1046
  %v1204 = vunpack.c.l.b16 %v1047
  %v1205 = vunpack.c.h.b16 %v1047
  %v1206 = vunpack.c.l.b16 %v1048
  %v1207 = vunpack.c.h.b16 %v1048
  %v1208 = vunpack.c.l.b16 %v1049
  %v1209 = vunpack.c.h.b16 %v1049
  %v1210 = vunpack.c.l.b16 %v1050
  %v1211 = vunpack.c.h.b16 %v1050
  %v1212 = vunpack.c.l.b16 %v1051
  %v1213 = vunpack.c.h.b16 %v1051
  %v1214 = vunpack.c.l.b16 %v1052
  %v1215 = vunpack.c.h.b16 %v1052
  %v1216 = vunpack.c.l.b16 %v1053
  %v1217 = vunpack.c.h.b16 %v1053
  %v1218 = vunpack.c.l.b16 %v1054
  %v1219 = vunpack.c.h.b16 %v1054
  %v1220 = vunpack.c.l.b16 %v1055
  %v1221 = vunpack.c.h.b16 %v1055
  %v1222 = vunpack.c.l.b16 %v1056
  %v1223 = vunpack.c.h.b16 %v1056
  %v1224 = vunpack.c.l.b16 %v1057
  %v1225 = vunpack.c.h.b16 %v1057
  %v1226 = vunpack.c.l.b16 %v1058
  %v1227 = vunpack.c.h.b16 %v1058
  %v1228 = vunpack.c.l.b16 %v1059
  %v1229 = vunpack.c.h.b16 %v1059
  %v1230 = vunpack.c.l.b16 %v1060
  %v1231 = vunpack.c.h.b16 %v1060
  %v1232 = vunpack.c.l.b16 %v1061
  %v1233 = vunpack.c.h.b16 %v1061
  %v1234 = vunpack.c.l.b16 %v1062
  %v1235 = vunpack.c.h.b16 %v1062
  %v1236 = vunpack.c.l.b16 %v1063
  %v1237 = vunpack.c.h.b16 %v1063
  %v1238 = vunpack.c.l.b16 %v1064
  %v1239 = vunpack.c.h.b16 %v1064
  %v1240 = vunpack.c.l.b16 %v1065
  %v1241 = vunpack.c.h.b16 %v1065
  %v1242 = vunpack.c.l.b16 %v1066
  %v1243 = vunpack.c.h.b16 %v1066
  %v1244 = vunpack.c.l.b16 %v1067
  %v1245 = vunpack.c.h.b16 %v1067
  %v1246 = vunpack.c.l.b16 %v1068
  %v1247 = vunpack.c.h.b16 %v1068
  %v1248 = vunpack.c.l.b16 %v1069
  %v1249 = vunpack.c.h.b16 %v1069
  %v1250 = vunpack.c.l.b16 %v1070
  %v1251 = vunpack.c.h.b16 %v1070
  %v1252 = vunpack.c.l.b16 %v1071
  %v1253 = vunpack.c.h.b16 %v1071
  %v1254 = vunpack.c.l.b16 %v1072
  %v1255 = vunpack.c.h.b16 %v1072
  %v1256 = vunpack.c.l.b16 %v1073
  %v1257 = vunpack.c.h.b16 %v1073
  %v1258 = vunpack.c.l.b16 %v1074
  %v1259 = vunpack.c.h.b16 %v1074
  %v1260 = vunpack.c.l.b16 %v1075
  %v1261 = vunpack.c.h.b16 %v1075
  %v1262 = vunpack.c.l.b16 %v1076
  %v1263 = vunpack.c.h.b16 %v1076
  %v1264 = vunpack.c.l.b16 %v1077
  %v1265 = vunpack.c.h.b16 %v1077
  %v1266 = vunpack.c.l.b16 %v1078
  %v1267 = vunpack.c.h.b16 %v1078
  %v1268 = vunpack.c.l.b16 %v1079
  %v1269 = vunpack.c.h.b16 %v1079
  %v1270 = vunpack.c.l.b16 %v1080
  %v1271 = vunpack.c.h.b16 %v1080
  %v1272 = vunpack.c.l.b16 %v1081
  %v1273 = vunpack.c.h.b16 %v1081
  %v1274 = vpack.c.b16 %v1150, %v1146
  %v1275 = vpack.c.b16 %v1151, %v1147
  %v1276 = vpack.c.b16 %v1152, %v1148
  %v1277 = vpack.c.b16 %v1153, %v1149
  %v1278 = vpack.c.b16 %v1158, %v1154
  %v1279 = vpack.c.b16 %v1159, %v1155
  %v1280 = vpack.c.b16 %v1160, %v1156
  %v1281 = vpack.c.b16 %v1161, %v1157
  %v1282 = vpack.c.b16 %v1166, %v1162
  %v1283 = vpack.c.b16 %v1167, %v1163
  %v1284 = vpack.c.b16 %v1168, %v1164
  %v1285 = vpack.c.b16 %v1169, %v1165
  %v1286 = vpack.c.b16 %v1174, %v1170
  %v1287 = vpack.c.b16 %v1175, %v1171
  %v1288 = vpack.c.b16 %v1176, %v1172
  %v1289 = vpack.c.b16 %v1177, %v1173
  %v1290 = vpack.c.b16 %v1182, %v1178
  %v1291 = vpack.c.b16 %v1183, %v1179
  %v1292 = vpack.c.b16 %v1184, %v1180
  %v1293 = vpack.c.b16 %v1185, %v1181
  %v1294 = vpack.c.b16 %v1190, %v1186
  %v1295 = vpack.c.b16 %v1191, %v1187
  %v1296 = vpack.c.b16 %v1192, %v1188
  %v1297 = vpack.c.b16 %v1193, %v1189
  %v1298 = vpack.c.b16 %v1198, %v1194
  %v1299 = vpack.c.b16 %v1199, %v1195
  %v1300 = vpack.c.b16 %v1200, %v1196
  %v1301 = vpack.c.b16 %v1201, %v1197
  %v1302 = vpack.c.b16 %v1206, %v1202
  %v1303 = vpack.c.b16 %v1207, %v1203
  %v1304 = vpack.c.b16 %v1208, %v1204
  %v1305 = vpack.c.b16 %v1209, %v1205
  %v1306 = vpack.c.b16 %v1214, %v1210
  %v1307 = vpack.c.b16 %v1215, %v1211
  %v1308 = vpack.c.b16 %v1216, %v1212
  %v1309 = vpack.c.b16 %v1217, %v1213
  %v1310 = vpack.c.b16 %v1222, %v1218
  %v1311 = vpack.c.b16 %v1223, %v1219
  %v1312 = vpack.c.b16 %v1224, %v1220
  %v1313 = vpack.c.b16 %v1225, %v1221
  %v1314 = vpack.c.b16 %v1230, %v1226
  %v1315 = vpack.c.b16 %v1231, %v1227
  %v1316 = vpack.c.b16 %v1232, %v1228
  %v1317 = vpack.c.b16 %v1233, %v1229
  %v1318 = vpack.c.b16 %v1238, %v1234
  %v1319 = vpack.c.b16 %v1239, %v1235
  %v1320 = vpack.c.b16 %v1240, %v1236
  %v1321 = vpack.c.b16 %v1241, %v1237
  %v1322 = vpack.c.b16 %v1246, %v1242
  %v1323 = vpack.c.b16 %v1247, %v1243
  %v1324 = vpack.c.b16 %v1248, %v1244
  %v1325 = vpack.c.b16 %v1249, %v1245
  %v1326 = vpack.c.b16 %v1254, %v1250
  %v1327 = vpack.c.b16 %v1255, %v1251
  %v1328 = vpack.c.b16 %v1256, %v1252
  %v1329 = vpack.c.b16 %v1257, %v1253
  %v1330 = vpack.c.b16 %v1262, %v1258
  %v1331 = vpack.c.b16 %v1263, %v1259
  %v1332 = vpack.c.b16 %v1264, %v1260
  %v1333 = vpack.c.b16 %v1265, %v1261
  %v1334 = vpack.c.b16 %v1270, %v1266
  %v1335 = vpack.c.b16 %v1271, %v1267
  %v1336 = vpack.c.b16 %v1272, %v1268
  %v1337 = vpack.c.b16 %v1273, %v1269
  %1402 = vmatprep.subr.bf16.mxu0 %v1303
  %1403 = vmatpush1.bf16.msra.mxu0 %v1302
  %1404 = vmatprep.subr.bf16.mxu0 %v1299
  %1405 = vmatpush1.bf16.msra.mxu0 %v1298
  %1406 = vmatprep.subr.bf16.mxu0 %v1295
  %1407 = vmatpush1.bf16.msra.mxu0 %v1294
  %1408 = vmatprep.subr.bf16.mxu0 %v1291
  %1409 = vmatpush1.bf16.msra.mxu0 %v1290
  %1410 = vmatprep.subr.bf16.mxu0 %v1287
  %1411 = vmatpush1.bf16.msra.mxu0 %v1286
  %1412 = vmatprep.subr.bf16.mxu0 %v1283
  %1413 = vmatpush1.bf16.msra.mxu0 %v1282
  %1414 = vmatprep.subr.bf16.mxu0 %v1279
  %1415 = vmatpush1.bf16.msra.mxu0 %v1278
  %1416 = vmatprep.subr.bf16.mxu0 %v1275
  %1417 = vmatpush1.bf16.msra.mxu0 %v1274
  %1418 = vmatprep.subr.bf16.mxu0 %v1335
  %1419 = vmatpush2.bf16.msra.mxu0 %v1334
  %1420 = vmatprep.subr.bf16.mxu0 %v1331
  %1421 = vmatpush2.bf16.msra.mxu0 %v1330
  %1422 = vmatprep.subr.bf16.mxu0 %v1327
  %1423 = vmatpush2.bf16.msra.mxu0 %v1326
  %1424 = vmatprep.subr.bf16.mxu0 %v1323
  %1425 = vmatpush2.bf16.msra.mxu0 %v1322
  %1426 = vmatprep.subr.bf16.mxu0 %v1319
  %1427 = vmatpush2.bf16.msra.mxu0 %v1318
  %1428 = vmatprep.subr.bf16.mxu0 %v1315
  %1429 = vmatpush2.bf16.msra.mxu0 %v1314
  %1430 = vmatprep.subr.bf16.mxu0 %v1311
  %1431 = vmatpush2.bf16.msra.mxu0 %v1310
  %1432 = vmatprep.subr.bf16.mxu0 %v1307
  %1433 = vmatpush2.bf16.msra.mxu0 %v1306
  %1434 = vmatprep.mubr.bf16.mxu0 %v203
  %1435 = vmatmul.mubr.bf16.gmra.mxu0 %v202
  %v1436 = vpop.f32.mrf.mxu0
  %v1437 = vadd.f32 0.0, %v1436
  %v1438 = vpop.f32.mrf.mxu0
  %v1439 = vadd.f32 0.0, %v1438
  %v1440 = vpop.f32.mrf.mxu0
  %v1441 = vadd.f32 0.0, %v1440
  %v1442 = vpop.f32.mrf.mxu0
  %v1443 = vadd.f32 0.0, %v1442
  %1444 = vdwg.mxu0
  %1445 = vmatprep.subr.bf16.mxu0 %v1305
  %1446 = vmatpush1.bf16.msra.mxu0 %v1304
  %1447 = vmatprep.subr.bf16.mxu0 %v1301
  %1448 = vmatpush1.bf16.msra.mxu0 %v1300
  %1449 = vmatprep.subr.bf16.mxu0 %v1297
  %1450 = vmatpush1.bf16.msra.mxu0 %v1296
  %1451 = vmatprep.subr.bf16.mxu0 %v1293
  %1452 = vmatpush1.bf16.msra.mxu0 %v1292
  %1453 = vmatprep.subr.bf16.mxu0 %v1289
  %1454 = vmatpush1.bf16.msra.mxu0 %v1288
  %1455 = vmatprep.subr.bf16.mxu0 %v1285
  %1456 = vmatpush1.bf16.msra.mxu0 %v1284
  %1457 = vmatprep.subr.bf16.mxu0 %v1281
  %1458 = vmatpush1.bf16.msra.mxu0 %v1280
  %1459 = vmatprep.subr.bf16.mxu0 %v1277
  %1460 = vmatpush1.bf16.msra.mxu0 %v1276
  %1461 = vmatprep.subr.bf16.mxu0 %v1337
  %1462 = vmatpush2.bf16.msra.mxu0 %v1336
  %1463 = vmatprep.subr.bf16.mxu0 %v1333
  %1464 = vmatpush2.bf16.msra.mxu0 %v1332
  %1465 = vmatprep.subr.bf16.mxu0 %v1329
  %1466 = vmatpush2.bf16.msra.mxu0 %v1328
  %1467 = vmatprep.subr.bf16.mxu0 %v1325
  %1468 = vmatpush2.bf16.msra.mxu0 %v1324
  %1469 = vmatprep.subr.bf16.mxu0 %v1321
  %1470 = vmatpush2.bf16.msra.mxu0 %v1320
  %1471 = vmatprep.subr.bf16.mxu0 %v1317
  %1472 = vmatpush2.bf16.msra.mxu0 %v1316
  %1473 = vmatprep.subr.bf16.mxu0 %v1313
  %1474 = vmatpush2.bf16.msra.mxu0 %v1312
  %1475 = vmatprep.subr.bf16.mxu0 %v1309
  %1476 = vmatpush2.bf16.msra.mxu0 %v1308
  %1477 = vmatprep.mubr.bf16.mxu0 %v203
  %1478 = vmatmul.mubr.bf16.gmra.mxu0 %v202
  %v1479 = vpop.f32.mrf.mxu0
  %v1480 = vadd.f32 0.0, %v1479
  %v1481 = vpop.f32.mrf.mxu0
  %v1482 = vadd.f32 0.0, %v1481
  %v1483 = vpop.f32.mrf.mxu0
  %v1484 = vadd.f32 0.0, %v1483
  %v1485 = vpop.f32.mrf.mxu0
  %v1486 = vadd.f32 0.0, %v1485
  %1487 = vdwg.mxu0
  %v1488 = vld [vmem:[%s3] sm:$0xff]
  %v1489 = vld [vmem:[%s3 + $0x8] sm:$0xff]
  %v1490 = vld [vmem:[%s3 + $0x10] sm:$0xff]
  %v1491 = vld [vmem:[%s3 + $0x18] sm:$0xff]
  %v1492 = vld [vmem:[%s3 + $0x20] sm:$0xff]
  %v1493 = vld [vmem:[%s3 + $0x28] sm:$0xff]
  %v1494 = vld [vmem:[%s3 + $0x30] sm:$0xff]
  %v1495 = vld [vmem:[%s3 + $0x38] sm:$0xff]
  %v1496 = vld [vmem:[%s3 + $0x40] sm:$0xff]
  %v1497 = vld [vmem:[%s3 + $0x48] sm:$0xff]
  %v1498 = vld [vmem:[%s3 + $0x50] sm:$0xff]
  %v1499 = vld [vmem:[%s3 + $0x58] sm:$0xff]
  %v1500 = vld [vmem:[%s3 + $0x60] sm:$0xff]
  %v1501 = vld [vmem:[%s3 + $0x68] sm:$0xff]
  %v1502 = vld [vmem:[%s3 + $0x70] sm:$0xff]
  %v1503 = vld [vmem:[%s3 + $0x78] sm:$0xff]
  %v1504 = vld [vmem:[%s3 + $0x80] sm:$0xff]
  %v1505 = vld [vmem:[%s3 + $0x88] sm:$0xff]
  %v1506 = vld [vmem:[%s3 + $0x90] sm:$0xff]
  %v1507 = vld [vmem:[%s3 + $0x98] sm:$0xff]
  %v1508 = vld [vmem:[%s3 + $0xa0] sm:$0xff]
  %v1509 = vld [vmem:[%s3 + $0xa8] sm:$0xff]
  %v1510 = vld [vmem:[%s3 + $0xb0] sm:$0xff]
  %v1511 = vld [vmem:[%s3 + $0xb8] sm:$0xff]
  %v1512 = vld [vmem:[%s3 + $0xc0] sm:$0xff]
  %v1513 = vld [vmem:[%s3 + $0xc8] sm:$0xff]
  %v1514 = vld [vmem:[%s3 + $0xd0] sm:$0xff]
  %v1515 = vld [vmem:[%s3 + $0xd8] sm:$0xff]
  %v1516 = vld [vmem:[%s3 + $0xe0] sm:$0xff]
  %v1517 = vld [vmem:[%s3 + $0xe8] sm:$0xff]
  %v1518 = vld [vmem:[%s3 + $0xf0] sm:$0xff]
  %v1519 = vld [vmem:[%s3 + $0xf8] sm:$0xff]
  %v1520 = vld [vmem:[%s3 + $0x100] sm:$0xff]
  %v1521 = vld [vmem:[%s3 + $0x108] sm:$0xff]
  %v1522 = vld [vmem:[%s3 + $0x110] sm:$0xff]
  %v1523 = vld [vmem:[%s3 + $0x118] sm:$0xff]
  %v1524 = vld [vmem:[%s3 + $0x120] sm:$0xff]
  %v1525 = vld [vmem:[%s3 + $0x128] sm:$0xff]
  %v1526 = vld [vmem:[%s3 + $0x130] sm:$0xff]
  %v1527 = vld [vmem:[%s3 + $0x138] sm:$0xff]
  %v1528 = vld [vmem:[%s3 + $0x140] sm:$0xff]
  %v1529 = vld [vmem:[%s3 + $0x148] sm:$0xff]
  %v1530 = vld [vmem:[%s3 + $0x150] sm:$0xff]
  %v1531 = vld [vmem:[%s3 + $0x158] sm:$0xff]
  %v1532 = vld [vmem:[%s3 + $0x160] sm:$0xff]
  %v1533 = vld [vmem:[%s3 + $0x168] sm:$0xff]
  %v1534 = vld [vmem:[%s3 + $0x170] sm:$0xff]
  %v1535 = vld [vmem:[%s3 + $0x178] sm:$0xff]
  %v1536 = vld [vmem:[%s3 + $0x180] sm:$0xff]
  %v1537 = vld [vmem:[%s3 + $0x188] sm:$0xff]
  %v1538 = vld [vmem:[%s3 + $0x190] sm:$0xff]
  %v1539 = vld [vmem:[%s3 + $0x198] sm:$0xff]
  %v1540 = vld [vmem:[%s3 + $0x1a0] sm:$0xff]
  %v1541 = vld [vmem:[%s3 + $0x1a8] sm:$0xff]
  %v1542 = vld [vmem:[%s3 + $0x1b0] sm:$0xff]
  %v1543 = vld [vmem:[%s3 + $0x1b8] sm:$0xff]
  %v1544 = vld [vmem:[%s3 + $0x1c0] sm:$0xff]
  %v1545 = vld [vmem:[%s3 + $0x1c8] sm:$0xff]
  %v1546 = vld [vmem:[%s3 + $0x1d0] sm:$0xff]
  %v1547 = vld [vmem:[%s3 + $0x1d8] sm:$0xff]
  %v1548 = vld [vmem:[%s3 + $0x1e0] sm:$0xff]
  %v1549 = vld [vmem:[%s3 + $0x1e8] sm:$0xff]
  %v1550 = vld [vmem:[%s3 + $0x1f0] sm:$0xff]
  %v1551 = vld [vmem:[%s3 + $0x1f8] sm:$0xff]
  %v1616 = vunpack.c.l.b16 %v1488
  %v1617 = vunpack.c.h.b16 %v1488
  %v1618 = vunpack.c.l.b16 %v1489
  %v1619 = vunpack.c.h.b16 %v1489
  %v1620 = vunpack.c.l.b16 %v1490
  %v1621 = vunpack.c.h.b16 %v1490
  %v1622 = vunpack.c.l.b16 %v1491
  %v1623 = vunpack.c.h.b16 %v1491
  %v1624 = vunpack.c.l.b16 %v1492
  %v1625 = vunpack.c.h.b16 %v1492
  %v1626 = vunpack.c.l.b16 %v1493
  %v1627 = vunpack.c.h.b16 %v1493
  %v1628 = vunpack.c.l.b16 %v1494
  %v1629 = vunpack.c.h.b16 %v1494
  %v1630 = vunpack.c.l.b16 %v1495
  %v1631 = vunpack.c.h.b16 %v1495
  %v1632 = vunpack.c.l.b16 %v1496
  %v1633 = vunpack.c.h.b16 %v1496
  %v1634 = vunpack.c.l.b16 %v1497
  %v1635 = vunpack.c.h.b16 %v1497
  %v1636 = vunpack.c.l.b16 %v1498
  %v1637 = vunpack.c.h.b16 %v1498
  %v1638 = vunpack.c.l.b16 %v1499
  %v1639 = vunpack.c.h.b16 %v1499
  %v1640 = vunpack.c.l.b16 %v1500
  %v1641 = vunpack.c.h.b16 %v1500
  %v1642 = vunpack.c.l.b16 %v1501
  %v1643 = vunpack.c.h.b16 %v1501
  %v1644 = vunpack.c.l.b16 %v1502
  %v1645 = vunpack.c.h.b16 %v1502
  %v1646 = vunpack.c.l.b16 %v1503
  %v1647 = vunpack.c.h.b16 %v1503
  %v1648 = vunpack.c.l.b16 %v1504
  %v1649 = vunpack.c.h.b16 %v1504
  %v1650 = vunpack.c.l.b16 %v1505
  %v1651 = vunpack.c.h.b16 %v1505
  %v1652 = vunpack.c.l.b16 %v1506
  %v1653 = vunpack.c.h.b16 %v1506
  %v1654 = vunpack.c.l.b16 %v1507
  %v1655 = vunpack.c.h.b16 %v1507
  %v1656 = vunpack.c.l.b16 %v1508
  %v1657 = vunpack.c.h.b16 %v1508
  %v1658 = vunpack.c.l.b16 %v1509
  %v1659 = vunpack.c.h.b16 %v1509
  %v1660 = vunpack.c.l.b16 %v1510
  %v1661 = vunpack.c.h.b16 %v1510
  %v1662 = vunpack.c.l.b16 %v1511
  %v1663 = vunpack.c.h.b16 %v1511
  %v1664 = vunpack.c.l.b16 %v1512
  %v1665 = vunpack.c.h.b16 %v1512
  %v1666 = vunpack.c.l.b16 %v1513
  %v1667 = vunpack.c.h.b16 %v1513
  %v1668 = vunpack.c.l.b16 %v1514
  %v1669 = vunpack.c.h.b16 %v1514
  %v1670 = vunpack.c.l.b16 %v1515
  %v1671 = vunpack.c.h.b16 %v1515
  %v1672 = vunpack.c.l.b16 %v1516
  %v1673 = vunpack.c.h.b16 %v1516
  %v1674 = vunpack.c.l.b16 %v1517
  %v1675 = vunpack.c.h.b16 %v1517
  %v1676 = vunpack.c.l.b16 %v1518
  %v1677 = vunpack.c.h.b16 %v1518
  %v1678 = vunpack.c.l.b16 %v1519
  %v1679 = vunpack.c.h.b16 %v1519
  %v1680 = vunpack.c.l.b16 %v1520
  %v1681 = vunpack.c.h.b16 %v1520
  %v1682 = vunpack.c.l.b16 %v1521
  %v1683 = vunpack.c.h.b16 %v1521
  %v1684 = vunpack.c.l.b16 %v1522
  %v1685 = vunpack.c.h.b16 %v1522
  %v1686 = vunpack.c.l.b16 %v1523
  %v1687 = vunpack.c.h.b16 %v1523
  %v1688 = vunpack.c.l.b16 %v1524
  %v1689 = vunpack.c.h.b16 %v1524
  %v1690 = vunpack.c.l.b16 %v1525
  %v1691 = vunpack.c.h.b16 %v1525
  %v1692 = vunpack.c.l.b16 %v1526
  %v1693 = vunpack.c.h.b16 %v1526
  %v1694 = vunpack.c.l.b16 %v1527
  %v1695 = vunpack.c.h.b16 %v1527
  %v1696 = vunpack.c.l.b16 %v1528
  %v1697 = vunpack.c.h.b16 %v1528
  %v1698 = vunpack.c.l.b16 %v1529
  %v1699 = vunpack.c.h.b16 %v1529
  %v1700 = vunpack.c.l.b16 %v1530
  %v1701 = vunpack.c.h.b16 %v1530
  %v1702 = vunpack.c.l.b16 %v1531
  %v1703 = vunpack.c.h.b16 %v1531
  %v1704 = vunpack.c.l.b16 %v1532
  %v1705 = vunpack.c.h.b16 %v1532
  %v1706 = vunpack.c.l.b16 %v1533
  %v1707 = vunpack.c.h.b16 %v1533
  %v1708 = vunpack.c.l.b16 %v1534
  %v1709 = vunpack.c.h.b16 %v1534
  %v1710 = vunpack.c.l.b16 %v1535
  %v1711 = vunpack.c.h.b16 %v1535
  %v1712 = vunpack.c.l.b16 %v1536
  %v1713 = vunpack.c.h.b16 %v1536
  %v1714 = vunpack.c.l.b16 %v1537
  %v1715 = vunpack.c.h.b16 %v1537
  %v1716 = vunpack.c.l.b16 %v1538
  %v1717 = vunpack.c.h.b16 %v1538
  %v1718 = vunpack.c.l.b16 %v1539
  %v1719 = vunpack.c.h.b16 %v1539
  %v1720 = vunpack.c.l.b16 %v1540
  %v1721 = vunpack.c.h.b16 %v1540
  %v1722 = vunpack.c.l.b16 %v1541
  %v1723 = vunpack.c.h.b16 %v1541
  %v1724 = vunpack.c.l.b16 %v1542
  %v1725 = vunpack.c.h.b16 %v1542
  %v1726 = vunpack.c.l.b16 %v1543
  %v1727 = vunpack.c.h.b16 %v1543
  %v1728 = vunpack.c.l.b16 %v1544
  %v1729 = vunpack.c.h.b16 %v1544
  %v1730 = vunpack.c.l.b16 %v1545
  %v1731 = vunpack.c.h.b16 %v1545
  %v1732 = vunpack.c.l.b16 %v1546
  %v1733 = vunpack.c.h.b16 %v1546
  %v1734 = vunpack.c.l.b16 %v1547
  %v1735 = vunpack.c.h.b16 %v1547
  %v1736 = vunpack.c.l.b16 %v1548
  %v1737 = vunpack.c.h.b16 %v1548
  %v1738 = vunpack.c.l.b16 %v1549
  %v1739 = vunpack.c.h.b16 %v1549
  %v1740 = vunpack.c.l.b16 %v1550
  %v1741 = vunpack.c.h.b16 %v1550
  %v1742 = vunpack.c.l.b16 %v1551
  %v1743 = vunpack.c.h.b16 %v1551
  %v1744 = vpack.c.b16 %v1620, %v1616
  %v1745 = vpack.c.b16 %v1621, %v1617
  %v1746 = vpack.c.b16 %v1622, %v1618
  %v1747 = vpack.c.b16 %v1623, %v1619
  %v1748 = vpack.c.b16 %v1628, %v1624
  %v1749 = vpack.c.b16 %v1629, %v1625
  %v1750 = vpack.c.b16 %v1630, %v1626
  %v1751 = vpack.c.b16 %v1631, %v1627
  %v1752 = vpack.c.b16 %v1636, %v1632
  %v1753 = vpack.c.b16 %v1637, %v1633
  %v1754 = vpack.c.b16 %v1638, %v1634
  %v1755 = vpack.c.b16 %v1639, %v1635
  %v1756 = vpack.c.b16 %v1644, %v1640
  %v1757 = vpack.c.b16 %v1645, %v1641
  %v1758 = vpack.c.b16 %v1646, %v1642
  %v1759 = vpack.c.b16 %v1647, %v1643
  %v1760 = vpack.c.b16 %v1652, %v1648
  %v1761 = vpack.c.b16 %v1653, %v1649
  %v1762 = vpack.c.b16 %v1654, %v1650
  %v1763 = vpack.c.b16 %v1655, %v1651
  %v1764 = vpack.c.b16 %v1660, %v1656
  %v1765 = vpack.c.b16 %v1661, %v1657
  %v1766 = vpack.c.b16 %v1662, %v1658
  %v1767 = vpack.c.b16 %v1663, %v1659
  %v1768 = vpack.c.b16 %v1668, %v1664
  %v1769 = vpack.c.b16 %v1669, %v1665
  %v1770 = vpack.c.b16 %v1670, %v1666
  %v1771 = vpack.c.b16 %v1671, %v1667
  %v1772 = vpack.c.b16 %v1676, %v1672
  %v1773 = vpack.c.b16 %v1677, %v1673
  %v1774 = vpack.c.b16 %v1678, %v1674
  %v1775 = vpack.c.b16 %v1679, %v1675
  %v1776 = vpack.c.b16 %v1684, %v1680
  %v1777 = vpack.c.b16 %v1685, %v1681
  %v1778 = vpack.c.b16 %v1686, %v1682
  %v1779 = vpack.c.b16 %v1687, %v1683
  %v1780 = vpack.c.b16 %v1692, %v1688
  %v1781 = vpack.c.b16 %v1693, %v1689
  %v1782 = vpack.c.b16 %v1694, %v1690
  %v1783 = vpack.c.b16 %v1695, %v1691
  %v1784 = vpack.c.b16 %v1700, %v1696
  %v1785 = vpack.c.b16 %v1701, %v1697
  %v1786 = vpack.c.b16 %v1702, %v1698
  %v1787 = vpack.c.b16 %v1703, %v1699
  %v1788 = vpack.c.b16 %v1708, %v1704
  %v1789 = vpack.c.b16 %v1709, %v1705
  %v1790 = vpack.c.b16 %v1710, %v1706
  %v1791 = vpack.c.b16 %v1711, %v1707
  %v1792 = vpack.c.b16 %v1716, %v1712
  %v1793 = vpack.c.b16 %v1717, %v1713
  %v1794 = vpack.c.b16 %v1718, %v1714
  %v1795 = vpack.c.b16 %v1719, %v1715
  %v1796 = vpack.c.b16 %v1724, %v1720
  %v1797 = vpack.c.b16 %v1725, %v1721
  %v1798 = vpack.c.b16 %v1726, %v1722
  %v1799 = vpack.c.b16 %v1727, %v1723
  %v1800 = vpack.c.b16 %v1732, %v1728
  %v1801 = vpack.c.b16 %v1733, %v1729
  %v1802 = vpack.c.b16 %v1734, %v1730
  %v1803 = vpack.c.b16 %v1735, %v1731
  %v1804 = vpack.c.b16 %v1740, %v1736
  %v1805 = vpack.c.b16 %v1741, %v1737
  %v1806 = vpack.c.b16 %v1742, %v1738
  %v1807 = vpack.c.b16 %v1743, %v1739
  %1872 = vmatprep.subr.bf16.mxu0 %v1773
  %1873 = vmatpush1.bf16.msra.mxu0 %v1772
  %1874 = vmatprep.subr.bf16.mxu0 %v1769
  %1875 = vmatpush1.bf16.msra.mxu0 %v1768
  %1876 = vmatprep.subr.bf16.mxu0 %v1765
  %1877 = vmatpush1.bf16.msra.mxu0 %v1764
  %1878 = vmatprep.subr.bf16.mxu0 %v1761
  %1879 = vmatpush1.bf16.msra.mxu0 %v1760
  %1880 = vmatprep.subr.bf16.mxu0 %v1757
  %1881 = vmatpush1.bf16.msra.mxu0 %v1756
  %1882 = vmatprep.subr.bf16.mxu0 %v1753
  %1883 = vmatpush1.bf16.msra.mxu0 %v1752
  %1884 = vmatprep.subr.bf16.mxu0 %v1749
  %1885 = vmatpush1.bf16.msra.mxu0 %v1748
  %1886 = vmatprep.subr.bf16.mxu0 %v1745
  %1887 = vmatpush1.bf16.msra.mxu0 %v1744
  %1888 = vmatprep.subr.bf16.mxu0 %v1805
  %1889 = vmatpush2.bf16.msra.mxu0 %v1804
  %1890 = vmatprep.subr.bf16.mxu0 %v1801
  %1891 = vmatpush2.bf16.msra.mxu0 %v1800
  %1892 = vmatprep.subr.bf16.mxu0 %v1797
  %1893 = vmatpush2.bf16.msra.mxu0 %v1796
  %1894 = vmatprep.subr.bf16.mxu0 %v1793
  %1895 = vmatpush2.bf16.msra.mxu0 %v1792
  %1896 = vmatprep.subr.bf16.mxu0 %v1789
  %1897 = vmatpush2.bf16.msra.mxu0 %v1788
  %1898 = vmatprep.subr.bf16.mxu0 %v1785
  %1899 = vmatpush2.bf16.msra.mxu0 %v1784
  %1900 = vmatprep.subr.bf16.mxu0 %v1781
  %1901 = vmatpush2.bf16.msra.mxu0 %v1780
  %1902 = vmatprep.subr.bf16.mxu0 %v1777
  %1903 = vmatpush2.bf16.msra.mxu0 %v1776
  %1904 = vmatprep.mubr.bf16.mxu0 %v203
  %1905 = vmatmul.mubr.bf16.gmra.mxu0 %v202
  %v1906 = vpop.f32.mrf.mxu0
  %v1907 = vadd.f32 0.0, %v1906
  %v1908 = vpop.f32.mrf.mxu0
  %v1909 = vadd.f32 0.0, %v1908
  %v1910 = vpop.f32.mrf.mxu0
  %v1911 = vadd.f32 0.0, %v1910
  %v1912 = vpop.f32.mrf.mxu0
  %v1913 = vadd.f32 0.0, %v1912
  %1914 = vdwg.mxu0
  %1915 = vmatprep.subr.bf16.mxu0 %v1775
  %1916 = vmatpush1.bf16.msra.mxu0 %v1774
  %1917 = vmatprep.subr.bf16.mxu0 %v1771
  %1918 = vmatpush1.bf16.msra.mxu0 %v1770
  %1919 = vmatprep.subr.bf16.mxu0 %v1767
  %1920 = vmatpush1.bf16.msra.mxu0 %v1766
  %1921 = vmatprep.subr.bf16.mxu0 %v1763
  %1922 = vmatpush1.bf16.msra.mxu0 %v1762
  %1923 = vmatprep.subr.bf16.mxu0 %v1759
  %1924 = vmatpush1.bf16.msra.mxu0 %v1758
  %1925 = vmatprep.subr.bf16.mxu0 %v1755
  %1926 = vmatpush1.bf16.msra.mxu0 %v1754
  %1927 = vmatprep.subr.bf16.mxu0 %v1751
  %1928 = vmatpush1.bf16.msra.mxu0 %v1750
  %1929 = vmatprep.subr.bf16.mxu0 %v1747
  %1930 = vmatpush1.bf16.msra.mxu0 %v1746
  %1931 = vmatprep.subr.bf16.mxu0 %v1807
  %1932 = vmatpush2.bf16.msra.mxu0 %v1806
  %1933 = vmatprep.subr.bf16.mxu0 %v1803
  %1934 = vmatpush2.bf16.msra.mxu0 %v1802
  %1935 = vmatprep.subr.bf16.mxu0 %v1799
  %1936 = vmatpush2.bf16.msra.mxu0 %v1798
  %1937 = vmatprep.subr.bf16.mxu0 %v1795
  %1938 = vmatpush2.bf16.msra.mxu0 %v1794
  %1939 = vmatprep.subr.bf16.mxu0 %v1791
  %1940 = vmatpush2.bf16.msra.mxu0 %v1790
  %1941 = vmatprep.subr.bf16.mxu0 %v1787
  %1942 = vmatpush2.bf16.msra.mxu0 %v1786
  %1943 = vmatprep.subr.bf16.mxu0 %v1783
  %1944 = vmatpush2.bf16.msra.mxu0 %v1782
  %1945 = vmatprep.subr.bf16.mxu0 %v1779
  %1946 = vmatpush2.bf16.msra.mxu0 %v1778
  %1947 = vmatprep.mubr.bf16.mxu0 %v203
  %1948 = vmatmul.mubr.bf16.gmra.mxu0 %v202
  %v1949 = vpop.f32.mrf.mxu0
  %v1950 = vadd.f32 0.0, %v1949
  %v1951 = vpop.f32.mrf.mxu0
  %v1952 = vadd.f32 0.0, %v1951
  %v1953 = vpop.f32.mrf.mxu0
  %v1954 = vadd.f32 0.0, %v1953
  %v1955 = vpop.f32.mrf.mxu0
  %v1956 = vadd.f32 0.0, %v1955
  %1957 = vdwg.mxu0
  %v1958 = vrot.slane %v1437, 7
  %v1959 = vrot.slane %v1439, 7
  %v1960 = vrot.slane %v1480, 7
  %v1961 = vrot.slane %v1482, 7
  %v1962 = vrot.slane %v1441, 7
  %v1963 = vrot.slane %v1443, 7
  %v1964 = vrot.slane %v1484, 7
  %v1965 = vrot.slane %v1486, 7
  %vm1966 = vcmp.lt.s32.totalorder %v38, 1
  %v1967 = vsel %vm1966, %v1958, %v1962
  %v1968 = vsel %vm1966, %v1959, %v1963
  %v1969 = vsel %vm1966, %v1960, %v1964
  %v1970 = vsel %vm1966, %v1961, %v1965
  %v1971 = vsel %vm1966, %v1962, %v1958
  %v1972 = vsel %vm1966, %v1963, %v1959
  %v1973 = vsel %vm1966, %v1964, %v1960
  %v1974 = vsel %vm1966, %v1965, %v1961
  %v1975 = vsel %vm64, %v1971, 0.0
  %v1976 = vsel %vm64, %v1972, 0.0
  %v1977 = vsel %vm64, %v1973, 0.0
  %v1978 = vsel %vm64, %v1974, 0.0
  %v1979 = vsel %vm65, %v1967, 0.0
  %v1980 = vsel %vm65, %v1968, 0.0
  %v1981 = vsel %vm65, %v1969, 0.0
  %v1982 = vsel %vm65, %v1970, 0.0
  %v1983 = vrot.slane %v1907, 1
  %v1984 = vrot.slane %v1909, 1
  %v1985 = vrot.slane %v1950, 1
  %v1986 = vrot.slane %v1952, 1
  %v1987 = vrot.slane %v1911, 1
  %v1988 = vrot.slane %v1913, 1
  %v1989 = vrot.slane %v1954, 1
  %v1990 = vrot.slane %v1956, 1
  %vm1991 = vcmp.lt.s32.totalorder %v38, 7
  %v1992 = vsel %vm1991, %v1983, %v1987
  %v1993 = vsel %vm1991, %v1984, %v1988
  %v1994 = vsel %vm1991, %v1985, %v1989
  %v1995 = vsel %vm1991, %v1986, %v1990
  %v1996 = vsel %vm1991, %v1987, %v1983
  %v1997 = vsel %vm1991, %v1988, %v1984
  %v1998 = vsel %vm1991, %v1989, %v1985
  %v1999 = vsel %vm1991, %v1990, %v1986
  %v2000 = vsel %vm66, %v1992, 0.0
  %v2001 = vsel %vm66, %v1993, 0.0
  %v2002 = vsel %vm66, %v1994, 0.0
  %v2003 = vsel %vm66, %v1995, 0.0
  %v2004 = vsel %vm67, %v1996, 0.0
  %v2005 = vsel %vm67, %v1997, 0.0
  %v2006 = vsel %vm67, %v1998, 0.0
  %v2007 = vsel %vm67, %v1999, 0.0
  %v2008 = vadd.f32 %v1975, %v2000
  %v2009 = vadd.f32 %v1976, %v2001
  %v2010 = vadd.f32 %v1977, %v2002
  %v2011 = vadd.f32 %v1978, %v2003
  %v2012 = vadd.f32 %v1979, %v2004
  %v2013 = vadd.f32 %v1980, %v2005
  %v2014 = vadd.f32 %v1981, %v2006
  %v2015 = vadd.f32 %v1982, %v2007
  %v2016 = vadd.f32 %v881, %v2008
  %v2017 = vadd.f32 %v883, %v2009
  %v2018 = vadd.f32 %v924, %v2010
  %v2019 = vadd.f32 %v926, %v2011
  %v2020 = vadd.f32 %v885, %v2012
  %v2021 = vadd.f32 %v887, %v2013
  %v2022 = vadd.f32 %v928, %v2014
  %v2023 = vadd.f32 %v930, %v2015
  %v2024 = vld [vmem:[%s7] sm:$0xf]
  %v2026 = vlaneseq
  %v2027 = vshrl.u32 %v2026, 7
  %v2028 = vsub.s32 0, %v2027
  %v2029 = vrot.slane %v2024, %v2028
  %v2030 = vlaneseq
  %v2031 = vshrl.u32 %v2030, 7
  %v2032 = vsub.s32 1, %v2031
  %v2033 = vrot.slane %v2024, %v2032
  %v2034 = vlaneseq
  %v2035 = vshrl.u32 %v2034, 7
  %v2036 = vsub.s32 2, %v2035
  %v2037 = vrot.slane %v2024, %v2036
  %v2038 = vlaneseq
  %v2039 = vshrl.u32 %v2038, 7
  %v2040 = vsub.s32 3, %v2039
  %v2041 = vrot.slane %v2024, %v2040
  %v2046 = vadd.f32 %v2016, %v2029
  %v2047 = vadd.f32 %v2017, %v2033
  %v2048 = vadd.f32 %v2018, %v2037
  %v2049 = vadd.f32 %v2019, %v2041
  %v2050 = vadd.f32 %v2020, %v2029
  %v2051 = vadd.f32 %v2021, %v2033
  %v2052 = vadd.f32 %v2022, %v2037
  %v2053 = vadd.f32 %v2023, %v2041
  %v2054 = vmax.f32 %v2046, 0.0
  %v2055 = vmax.f32 %v2047, 0.0
  %v2056 = vmax.f32 %v2048, 0.0
  %v2057 = vmax.f32 %v2049, 0.0
  %v2058 = vmax.f32 %v2050, 0.0
  %v2059 = vmax.f32 %v2051, 0.0
  %v2060 = vmax.f32 %v2052, 0.0
  %v2061 = vmax.f32 %v2053, 0.0
  %v2062 = vld [vmem:[%s9] sm:$0xf]
  %v2064 = vlaneseq
  %v2065 = vshrl.u32 %v2064, 7
  %v2066 = vsub.s32 0, %v2065
  %v2067 = vrot.slane %v2062, %v2066
  %v2068 = vlaneseq
  %v2069 = vshrl.u32 %v2068, 7
  %v2070 = vsub.s32 1, %v2069
  %v2071 = vrot.slane %v2062, %v2070
  %v2072 = vlaneseq
  %v2073 = vshrl.u32 %v2072, 7
  %v2074 = vsub.s32 2, %v2073
  %v2075 = vrot.slane %v2062, %v2074
  %v2076 = vlaneseq
  %v2077 = vshrl.u32 %v2076, 7
  %v2078 = vsub.s32 3, %v2077
  %v2079 = vrot.slane %v2062, %v2078
  %v2084 = vadd.f32 %v967, %v2067
  %v2085 = vadd.f32 %v969, %v2071
  %v2086 = vadd.f32 %v1010, %v2075
  %v2087 = vadd.f32 %v1012, %v2079
  %v2088 = vadd.f32 %v971, %v2067
  %v2089 = vadd.f32 %v973, %v2071
  %v2090 = vadd.f32 %v1014, %v2075
  %v2091 = vadd.f32 %v1016, %v2079
  %v2092 = vpack.c.bf16 %v2058, %v2054
  %v2093 = vpack.c.bf16 %v2059, %v2055
  %v2094 = vpack.c.bf16 %v2060, %v2056
  %v2095 = vpack.c.bf16 %v2061, %v2057
  %v2096 = vld [vmem:[%s4] sm:$0xff]
  %v2097 = vld [vmem:[%s4 + $0x8] sm:$0xff]
  %v2098 = vld [vmem:[%s4 + $0x10] sm:$0xff]
  %v2099 = vld [vmem:[%s4 + $0x18] sm:$0xff]
  %v2100 = vld [vmem:[%s4 + $0x20] sm:$0xff]
  %v2101 = vld [vmem:[%s4 + $0x28] sm:$0xff]
  %v2102 = vld [vmem:[%s4 + $0x30] sm:$0xff]
  %v2103 = vld [vmem:[%s4 + $0x38] sm:$0xff]
  %v2104 = vld [vmem:[%s4 + $0x40] sm:$0xff]
  %v2105 = vld [vmem:[%s4 + $0x48] sm:$0xff]
  %v2106 = vld [vmem:[%s4 + $0x50] sm:$0xff]
  %v2107 = vld [vmem:[%s4 + $0x58] sm:$0xff]
  %v2108 = vld [vmem:[%s4 + $0x60] sm:$0xff]
  %v2109 = vld [vmem:[%s4 + $0x68] sm:$0xff]
  %v2110 = vld [vmem:[%s4 + $0x70] sm:$0xff]
  %v2111 = vld [vmem:[%s4 + $0x78] sm:$0xff]
  %v2112 = vld [vmem:[%s4 + $0x80] sm:$0xff]
  %v2113 = vld [vmem:[%s4 + $0x88] sm:$0xff]
  %v2114 = vld [vmem:[%s4 + $0x90] sm:$0xff]
  %v2115 = vld [vmem:[%s4 + $0x98] sm:$0xff]
  %v2116 = vld [vmem:[%s4 + $0xa0] sm:$0xff]
  %v2117 = vld [vmem:[%s4 + $0xa8] sm:$0xff]
  %v2118 = vld [vmem:[%s4 + $0xb0] sm:$0xff]
  %v2119 = vld [vmem:[%s4 + $0xb8] sm:$0xff]
  %v2120 = vld [vmem:[%s4 + $0xc0] sm:$0xff]
  %v2121 = vld [vmem:[%s4 + $0xc8] sm:$0xff]
  %v2122 = vld [vmem:[%s4 + $0xd0] sm:$0xff]
  %v2123 = vld [vmem:[%s4 + $0xd8] sm:$0xff]
  %v2124 = vld [vmem:[%s4 + $0xe0] sm:$0xff]
  %v2125 = vld [vmem:[%s4 + $0xe8] sm:$0xff]
  %v2126 = vld [vmem:[%s4 + $0xf0] sm:$0xff]
  %v2127 = vld [vmem:[%s4 + $0xf8] sm:$0xff]
  %v2128 = vld [vmem:[%s4 + $0x100] sm:$0xff]
  %v2129 = vld [vmem:[%s4 + $0x108] sm:$0xff]
  %v2130 = vld [vmem:[%s4 + $0x110] sm:$0xff]
  %v2131 = vld [vmem:[%s4 + $0x118] sm:$0xff]
  %v2132 = vld [vmem:[%s4 + $0x120] sm:$0xff]
  %v2133 = vld [vmem:[%s4 + $0x128] sm:$0xff]
  %v2134 = vld [vmem:[%s4 + $0x130] sm:$0xff]
  %v2135 = vld [vmem:[%s4 + $0x138] sm:$0xff]
  %v2136 = vld [vmem:[%s4 + $0x140] sm:$0xff]
  %v2137 = vld [vmem:[%s4 + $0x148] sm:$0xff]
  %v2138 = vld [vmem:[%s4 + $0x150] sm:$0xff]
  %v2139 = vld [vmem:[%s4 + $0x158] sm:$0xff]
  %v2140 = vld [vmem:[%s4 + $0x160] sm:$0xff]
  %v2141 = vld [vmem:[%s4 + $0x168] sm:$0xff]
  %v2142 = vld [vmem:[%s4 + $0x170] sm:$0xff]
  %v2143 = vld [vmem:[%s4 + $0x178] sm:$0xff]
  %v2144 = vld [vmem:[%s4 + $0x180] sm:$0xff]
  %v2145 = vld [vmem:[%s4 + $0x188] sm:$0xff]
  %v2146 = vld [vmem:[%s4 + $0x190] sm:$0xff]
  %v2147 = vld [vmem:[%s4 + $0x198] sm:$0xff]
  %v2148 = vld [vmem:[%s4 + $0x1a0] sm:$0xff]
  %v2149 = vld [vmem:[%s4 + $0x1a8] sm:$0xff]
  %v2150 = vld [vmem:[%s4 + $0x1b0] sm:$0xff]
  %v2151 = vld [vmem:[%s4 + $0x1b8] sm:$0xff]
  %v2152 = vld [vmem:[%s4 + $0x1c0] sm:$0xff]
  %v2153 = vld [vmem:[%s4 + $0x1c8] sm:$0xff]
  %v2154 = vld [vmem:[%s4 + $0x1d0] sm:$0xff]
  %v2155 = vld [vmem:[%s4 + $0x1d8] sm:$0xff]
  %v2156 = vld [vmem:[%s4 + $0x1e0] sm:$0xff]
  %v2157 = vld [vmem:[%s4 + $0x1e8] sm:$0xff]
  %v2158 = vld [vmem:[%s4 + $0x1f0] sm:$0xff]
  %v2159 = vld [vmem:[%s4 + $0x1f8] sm:$0xff]
  %v2160 = vld [vmem:[%s4 + $0x200] sm:$0xff]
  %v2161 = vld [vmem:[%s4 + $0x208] sm:$0xff]
  %v2162 = vld [vmem:[%s4 + $0x210] sm:$0xff]
  %v2163 = vld [vmem:[%s4 + $0x218] sm:$0xff]
  %v2164 = vld [vmem:[%s4 + $0x220] sm:$0xff]
  %v2165 = vld [vmem:[%s4 + $0x228] sm:$0xff]
  %v2166 = vld [vmem:[%s4 + $0x230] sm:$0xff]
  %v2167 = vld [vmem:[%s4 + $0x238] sm:$0xff]
  %v2168 = vld [vmem:[%s4 + $0x240] sm:$0xff]
  %v2169 = vld [vmem:[%s4 + $0x248] sm:$0xff]
  %v2170 = vld [vmem:[%s4 + $0x250] sm:$0xff]
  %v2171 = vld [vmem:[%s4 + $0x258] sm:$0xff]
  %v2172 = vld [vmem:[%s4 + $0x260] sm:$0xff]
  %v2173 = vld [vmem:[%s4 + $0x268] sm:$0xff]
  %v2174 = vld [vmem:[%s4 + $0x270] sm:$0xff]
  %v2175 = vld [vmem:[%s4 + $0x278] sm:$0xff]
  %v2176 = vld [vmem:[%s4 + $0x280] sm:$0xff]
  %v2177 = vld [vmem:[%s4 + $0x288] sm:$0xff]
  %v2178 = vld [vmem:[%s4 + $0x290] sm:$0xff]
  %v2179 = vld [vmem:[%s4 + $0x298] sm:$0xff]
  %v2180 = vld [vmem:[%s4 + $0x2a0] sm:$0xff]
  %v2181 = vld [vmem:[%s4 + $0x2a8] sm:$0xff]
  %v2182 = vld [vmem:[%s4 + $0x2b0] sm:$0xff]
  %v2183 = vld [vmem:[%s4 + $0x2b8] sm:$0xff]
  %v2184 = vld [vmem:[%s4 + $0x2c0] sm:$0xff]
  %v2185 = vld [vmem:[%s4 + $0x2c8] sm:$0xff]
  %v2186 = vld [vmem:[%s4 + $0x2d0] sm:$0xff]
  %v2187 = vld [vmem:[%s4 + $0x2d8] sm:$0xff]
  %v2188 = vld [vmem:[%s4 + $0x2e0] sm:$0xff]
  %v2189 = vld [vmem:[%s4 + $0x2e8] sm:$0xff]
  %v2190 = vld [vmem:[%s4 + $0x2f0] sm:$0xff]
  %v2191 = vld [vmem:[%s4 + $0x2f8] sm:$0xff]
  %v2192 = vld [vmem:[%s4 + $0x300] sm:$0xff]
  %v2193 = vld [vmem:[%s4 + $0x308] sm:$0xff]
  %v2194 = vld [vmem:[%s4 + $0x310] sm:$0xff]
  %v2195 = vld [vmem:[%s4 + $0x318] sm:$0xff]
  %v2196 = vld [vmem:[%s4 + $0x320] sm:$0xff]
  %v2197 = vld [vmem:[%s4 + $0x328] sm:$0xff]
  %v2198 = vld [vmem:[%s4 + $0x330] sm:$0xff]
  %v2199 = vld [vmem:[%s4 + $0x338] sm:$0xff]
  %v2200 = vld [vmem:[%s4 + $0x340] sm:$0xff]
  %v2201 = vld [vmem:[%s4 + $0x348] sm:$0xff]
  %v2202 = vld [vmem:[%s4 + $0x350] sm:$0xff]
  %v2203 = vld [vmem:[%s4 + $0x358] sm:$0xff]
  %v2204 = vld [vmem:[%s4 + $0x360] sm:$0xff]
  %v2205 = vld [vmem:[%s4 + $0x368] sm:$0xff]
  %v2206 = vld [vmem:[%s4 + $0x370] sm:$0xff]
  %v2207 = vld [vmem:[%s4 + $0x378] sm:$0xff]
  %v2208 = vld [vmem:[%s4 + $0x380] sm:$0xff]
  %v2209 = vld [vmem:[%s4 + $0x388] sm:$0xff]
  %v2210 = vld [vmem:[%s4 + $0x390] sm:$0xff]
  %v2211 = vld [vmem:[%s4 + $0x398] sm:$0xff]
  %v2212 = vld [vmem:[%s4 + $0x3a0] sm:$0xff]
  %v2213 = vld [vmem:[%s4 + $0x3a8] sm:$0xff]
  %v2214 = vld [vmem:[%s4 + $0x3b0] sm:$0xff]
  %v2215 = vld [vmem:[%s4 + $0x3b8] sm:$0xff]
  %v2216 = vld [vmem:[%s4 + $0x3c0] sm:$0xff]
  %v2217 = vld [vmem:[%s4 + $0x3c8] sm:$0xff]
  %v2218 = vld [vmem:[%s4 + $0x3d0] sm:$0xff]
  %v2219 = vld [vmem:[%s4 + $0x3d8] sm:$0xff]
  %v2220 = vld [vmem:[%s4 + $0x3e0] sm:$0xff]
  %v2221 = vld [vmem:[%s4 + $0x3e8] sm:$0xff]
  %v2222 = vld [vmem:[%s4 + $0x3f0] sm:$0xff]
  %v2223 = vld [vmem:[%s4 + $0x3f8] sm:$0xff]
  %v2224 = vld [vmem:[%s5] sm:$0xff]
  %v2225 = vld [vmem:[%s5 + $0x8] sm:$0xff]
  %v2226 = vld [vmem:[%s5 + $0x10] sm:$0xff]
  %v2227 = vld [vmem:[%s5 + $0x18] sm:$0xff]
  %v2228 = vld [vmem:[%s5 + $0x20] sm:$0xff]
  %v2229 = vld [vmem:[%s5 + $0x28] sm:$0xff]
  %v2230 = vld [vmem:[%s5 + $0x30] sm:$0xff]
  %v2231 = vld [vmem:[%s5 + $0x38] sm:$0xff]
  %v2232 = vld [vmem:[%s5 + $0x40] sm:$0xff]
  %v2233 = vld [vmem:[%s5 + $0x48] sm:$0xff]
  %v2234 = vld [vmem:[%s5 + $0x50] sm:$0xff]
  %v2235 = vld [vmem:[%s5 + $0x58] sm:$0xff]
  %v2236 = vld [vmem:[%s5 + $0x60] sm:$0xff]
  %v2237 = vld [vmem:[%s5 + $0x68] sm:$0xff]
  %v2238 = vld [vmem:[%s5 + $0x70] sm:$0xff]
  %v2239 = vld [vmem:[%s5 + $0x78] sm:$0xff]
  %v2240 = vld [vmem:[%s5 + $0x80] sm:$0xff]
  %v2241 = vld [vmem:[%s5 + $0x88] sm:$0xff]
  %v2242 = vld [vmem:[%s5 + $0x90] sm:$0xff]
  %v2243 = vld [vmem:[%s5 + $0x98] sm:$0xff]
  %v2244 = vld [vmem:[%s5 + $0xa0] sm:$0xff]
  %v2245 = vld [vmem:[%s5 + $0xa8] sm:$0xff]
  %v2246 = vld [vmem:[%s5 + $0xb0] sm:$0xff]
  %v2247 = vld [vmem:[%s5 + $0xb8] sm:$0xff]
  %v2248 = vld [vmem:[%s5 + $0xc0] sm:$0xff]
  %v2249 = vld [vmem:[%s5 + $0xc8] sm:$0xff]
  %v2250 = vld [vmem:[%s5 + $0xd0] sm:$0xff]
  %v2251 = vld [vmem:[%s5 + $0xd8] sm:$0xff]
  %v2252 = vld [vmem:[%s5 + $0xe0] sm:$0xff]
  %v2253 = vld [vmem:[%s5 + $0xe8] sm:$0xff]
  %v2254 = vld [vmem:[%s5 + $0xf0] sm:$0xff]
  %v2255 = vld [vmem:[%s5 + $0xf8] sm:$0xff]
  %v2256 = vld [vmem:[%s5 + $0x100] sm:$0xff]
  %v2257 = vld [vmem:[%s5 + $0x108] sm:$0xff]
  %v2258 = vld [vmem:[%s5 + $0x110] sm:$0xff]
  %v2259 = vld [vmem:[%s5 + $0x118] sm:$0xff]
  %v2260 = vld [vmem:[%s5 + $0x120] sm:$0xff]
  %v2261 = vld [vmem:[%s5 + $0x128] sm:$0xff]
  %v2262 = vld [vmem:[%s5 + $0x130] sm:$0xff]
  %v2263 = vld [vmem:[%s5 + $0x138] sm:$0xff]
  %v2264 = vld [vmem:[%s5 + $0x140] sm:$0xff]
  %v2265 = vld [vmem:[%s5 + $0x148] sm:$0xff]
  %v2266 = vld [vmem:[%s5 + $0x150] sm:$0xff]
  %v2267 = vld [vmem:[%s5 + $0x158] sm:$0xff]
  %v2268 = vld [vmem:[%s5 + $0x160] sm:$0xff]
  %v2269 = vld [vmem:[%s5 + $0x168] sm:$0xff]
  %v2270 = vld [vmem:[%s5 + $0x170] sm:$0xff]
  %v2271 = vld [vmem:[%s5 + $0x178] sm:$0xff]
  %v2272 = vld [vmem:[%s5 + $0x180] sm:$0xff]
  %v2273 = vld [vmem:[%s5 + $0x188] sm:$0xff]
  %v2274 = vld [vmem:[%s5 + $0x190] sm:$0xff]
  %v2275 = vld [vmem:[%s5 + $0x198] sm:$0xff]
  %v2276 = vld [vmem:[%s5 + $0x1a0] sm:$0xff]
  %v2277 = vld [vmem:[%s5 + $0x1a8] sm:$0xff]
  %v2278 = vld [vmem:[%s5 + $0x1b0] sm:$0xff]
  %v2279 = vld [vmem:[%s5 + $0x1b8] sm:$0xff]
  %v2280 = vld [vmem:[%s5 + $0x1c0] sm:$0xff]
  %v2281 = vld [vmem:[%s5 + $0x1c8] sm:$0xff]
  %v2282 = vld [vmem:[%s5 + $0x1d0] sm:$0xff]
  %v2283 = vld [vmem:[%s5 + $0x1d8] sm:$0xff]
  %v2284 = vld [vmem:[%s5 + $0x1e0] sm:$0xff]
  %v2285 = vld [vmem:[%s5 + $0x1e8] sm:$0xff]
  %v2286 = vld [vmem:[%s5 + $0x1f0] sm:$0xff]
  %v2287 = vld [vmem:[%s5 + $0x1f8] sm:$0xff]
  %v2288 = vld [vmem:[%s5 + $0x200] sm:$0xff]
  %v2289 = vld [vmem:[%s5 + $0x208] sm:$0xff]
  %v2290 = vld [vmem:[%s5 + $0x210] sm:$0xff]
  %v2291 = vld [vmem:[%s5 + $0x218] sm:$0xff]
  %v2292 = vld [vmem:[%s5 + $0x220] sm:$0xff]
  %v2293 = vld [vmem:[%s5 + $0x228] sm:$0xff]
  %v2294 = vld [vmem:[%s5 + $0x230] sm:$0xff]
  %v2295 = vld [vmem:[%s5 + $0x238] sm:$0xff]
  %v2296 = vld [vmem:[%s5 + $0x240] sm:$0xff]
  %v2297 = vld [vmem:[%s5 + $0x248] sm:$0xff]
  %v2298 = vld [vmem:[%s5 + $0x250] sm:$0xff]
  %v2299 = vld [vmem:[%s5 + $0x258] sm:$0xff]
  %v2300 = vld [vmem:[%s5 + $0x260] sm:$0xff]
  %v2301 = vld [vmem:[%s5 + $0x268] sm:$0xff]
  %v2302 = vld [vmem:[%s5 + $0x270] sm:$0xff]
  %v2303 = vld [vmem:[%s5 + $0x278] sm:$0xff]
  %v2304 = vld [vmem:[%s5 + $0x280] sm:$0xff]
  %v2305 = vld [vmem:[%s5 + $0x288] sm:$0xff]
  %v2306 = vld [vmem:[%s5 + $0x290] sm:$0xff]
  %v2307 = vld [vmem:[%s5 + $0x298] sm:$0xff]
  %v2308 = vld [vmem:[%s5 + $0x2a0] sm:$0xff]
  %v2309 = vld [vmem:[%s5 + $0x2a8] sm:$0xff]
  %v2310 = vld [vmem:[%s5 + $0x2b0] sm:$0xff]
  %v2311 = vld [vmem:[%s5 + $0x2b8] sm:$0xff]
  %v2312 = vld [vmem:[%s5 + $0x2c0] sm:$0xff]
  %v2313 = vld [vmem:[%s5 + $0x2c8] sm:$0xff]
  %v2314 = vld [vmem:[%s5 + $0x2d0] sm:$0xff]
  %v2315 = vld [vmem:[%s5 + $0x2d8] sm:$0xff]
  %v2316 = vld [vmem:[%s5 + $0x2e0] sm:$0xff]
  %v2317 = vld [vmem:[%s5 + $0x2e8] sm:$0xff]
  %v2318 = vld [vmem:[%s5 + $0x2f0] sm:$0xff]
  %v2319 = vld [vmem:[%s5 + $0x2f8] sm:$0xff]
  %v2320 = vld [vmem:[%s5 + $0x300] sm:$0xff]
  %v2321 = vld [vmem:[%s5 + $0x308] sm:$0xff]
  %v2322 = vld [vmem:[%s5 + $0x310] sm:$0xff]
  %v2323 = vld [vmem:[%s5 + $0x318] sm:$0xff]
  %v2324 = vld [vmem:[%s5 + $0x320] sm:$0xff]
  %v2325 = vld [vmem:[%s5 + $0x328] sm:$0xff]
  %v2326 = vld [vmem:[%s5 + $0x330] sm:$0xff]
  %v2327 = vld [vmem:[%s5 + $0x338] sm:$0xff]
  %v2328 = vld [vmem:[%s5 + $0x340] sm:$0xff]
  %v2329 = vld [vmem:[%s5 + $0x348] sm:$0xff]
  %v2330 = vld [vmem:[%s5 + $0x350] sm:$0xff]
  %v2331 = vld [vmem:[%s5 + $0x358] sm:$0xff]
  %v2332 = vld [vmem:[%s5 + $0x360] sm:$0xff]
  %v2333 = vld [vmem:[%s5 + $0x368] sm:$0xff]
  %v2334 = vld [vmem:[%s5 + $0x370] sm:$0xff]
  %v2335 = vld [vmem:[%s5 + $0x378] sm:$0xff]
  %v2336 = vld [vmem:[%s5 + $0x380] sm:$0xff]
  %v2337 = vld [vmem:[%s5 + $0x388] sm:$0xff]
  %v2338 = vld [vmem:[%s5 + $0x390] sm:$0xff]
  %v2339 = vld [vmem:[%s5 + $0x398] sm:$0xff]
  %v2340 = vld [vmem:[%s5 + $0x3a0] sm:$0xff]
  %v2341 = vld [vmem:[%s5 + $0x3a8] sm:$0xff]
  %v2342 = vld [vmem:[%s5 + $0x3b0] sm:$0xff]
  %v2343 = vld [vmem:[%s5 + $0x3b8] sm:$0xff]
  %v2344 = vld [vmem:[%s5 + $0x3c0] sm:$0xff]
  %v2345 = vld [vmem:[%s5 + $0x3c8] sm:$0xff]
  %v2346 = vld [vmem:[%s5 + $0x3d0] sm:$0xff]
  %v2347 = vld [vmem:[%s5 + $0x3d8] sm:$0xff]
  %v2348 = vld [vmem:[%s5 + $0x3e0] sm:$0xff]
  %v2349 = vld [vmem:[%s5 + $0x3e8] sm:$0xff]
  %v2350 = vld [vmem:[%s5 + $0x3f0] sm:$0xff]
  %v2351 = vld [vmem:[%s5 + $0x3f8] sm:$0xff]
  %v2480 = vunpack.c.l.b16 %v2224
  %v2481 = vunpack.c.h.b16 %v2224
  %v2482 = vunpack.c.l.b16 %v2225
  %v2483 = vunpack.c.h.b16 %v2225
  %v2484 = vunpack.c.l.b16 %v2226
  %v2485 = vunpack.c.h.b16 %v2226
  %v2486 = vunpack.c.l.b16 %v2227
  %v2487 = vunpack.c.h.b16 %v2227
  %v2488 = vunpack.c.l.b16 %v2228
  %v2489 = vunpack.c.h.b16 %v2228
  %v2490 = vunpack.c.l.b16 %v2229
  %v2491 = vunpack.c.h.b16 %v2229
  %v2492 = vunpack.c.l.b16 %v2230
  %v2493 = vunpack.c.h.b16 %v2230
  %v2494 = vunpack.c.l.b16 %v2231
  %v2495 = vunpack.c.h.b16 %v2231
  %v2496 = vunpack.c.l.b16 %v2232
  %v2497 = vunpack.c.h.b16 %v2232
  %v2498 = vunpack.c.l.b16 %v2233
  %v2499 = vunpack.c.h.b16 %v2233
  %v2500 = vunpack.c.l.b16 %v2234
  %v2501 = vunpack.c.h.b16 %v2234
  %v2502 = vunpack.c.l.b16 %v2235
  %v2503 = vunpack.c.h.b16 %v2235
  %v2504 = vunpack.c.l.b16 %v2236
  %v2505 = vunpack.c.h.b16 %v2236
  %v2506 = vunpack.c.l.b16 %v2237
  %v2507 = vunpack.c.h.b16 %v2237
  %v2508 = vunpack.c.l.b16 %v2238
  %v2509 = vunpack.c.h.b16 %v2238
  %v2510 = vunpack.c.l.b16 %v2239
  %v2511 = vunpack.c.h.b16 %v2239
  %v2512 = vunpack.c.l.b16 %v2240
  %v2513 = vunpack.c.h.b16 %v2240
  %v2514 = vunpack.c.l.b16 %v2241
  %v2515 = vunpack.c.h.b16 %v2241
  %v2516 = vunpack.c.l.b16 %v2242
  %v2517 = vunpack.c.h.b16 %v2242
  %v2518 = vunpack.c.l.b16 %v2243
  %v2519 = vunpack.c.h.b16 %v2243
  %v2520 = vunpack.c.l.b16 %v2244
  %v2521 = vunpack.c.h.b16 %v2244
  %v2522 = vunpack.c.l.b16 %v2245
  %v2523 = vunpack.c.h.b16 %v2245
  %v2524 = vunpack.c.l.b16 %v2246
  %v2525 = vunpack.c.h.b16 %v2246
  %v2526 = vunpack.c.l.b16 %v2247
  %v2527 = vunpack.c.h.b16 %v2247
  %v2528 = vunpack.c.l.b16 %v2248
  %v2529 = vunpack.c.h.b16 %v2248
  %v2530 = vunpack.c.l.b16 %v2249
  %v2531 = vunpack.c.h.b16 %v2249
  %v2532 = vunpack.c.l.b16 %v2250
  %v2533 = vunpack.c.h.b16 %v2250
  %v2534 = vunpack.c.l.b16 %v2251
  %v2535 = vunpack.c.h.b16 %v2251
  %v2536 = vunpack.c.l.b16 %v2252
  %v2537 = vunpack.c.h.b16 %v2252
  %v2538 = vunpack.c.l.b16 %v2253
  %v2539 = vunpack.c.h.b16 %v2253
  %v2540 = vunpack.c.l.b16 %v2254
  %v2541 = vunpack.c.h.b16 %v2254
  %v2542 = vunpack.c.l.b16 %v2255
  %v2543 = vunpack.c.h.b16 %v2255
  %v2544 = vunpack.c.l.b16 %v2256
  %v2545 = vunpack.c.h.b16 %v2256
  %v2546 = vunpack.c.l.b16 %v2257
  %v2547 = vunpack.c.h.b16 %v2257
  %v2548 = vunpack.c.l.b16 %v2258
  %v2549 = vunpack.c.h.b16 %v2258
  %v2550 = vunpack.c.l.b16 %v2259
  %v2551 = vunpack.c.h.b16 %v2259
  %v2552 = vunpack.c.l.b16 %v2260
  %v2553 = vunpack.c.h.b16 %v2260
  %v2554 = vunpack.c.l.b16 %v2261
  %v2555 = vunpack.c.h.b16 %v2261
  %v2556 = vunpack.c.l.b16 %v2262
  %v2557 = vunpack.c.h.b16 %v2262
  %v2558 = vunpack.c.l.b16 %v2263
  %v2559 = vunpack.c.h.b16 %v2263
  %v2560 = vunpack.c.l.b16 %v2264
  %v2561 = vunpack.c.h.b16 %v2264
  %v2562 = vunpack.c.l.b16 %v2265
  %v2563 = vunpack.c.h.b16 %v2265
  %v2564 = vunpack.c.l.b16 %v2266
  %v2565 = vunpack.c.h.b16 %v2266
  %v2566 = vunpack.c.l.b16 %v2267
  %v2567 = vunpack.c.h.b16 %v2267
  %v2568 = vunpack.c.l.b16 %v2268
  %v2569 = vunpack.c.h.b16 %v2268
  %v2570 = vunpack.c.l.b16 %v2269
  %v2571 = vunpack.c.h.b16 %v2269
  %v2572 = vunpack.c.l.b16 %v2270
  %v2573 = vunpack.c.h.b16 %v2270
  %v2574 = vunpack.c.l.b16 %v2271
  %v2575 = vunpack.c.h.b16 %v2271
  %v2576 = vunpack.c.l.b16 %v2272
  %v2577 = vunpack.c.h.b16 %v2272
  %v2578 = vunpack.c.l.b16 %v2273
  %v2579 = vunpack.c.h.b16 %v2273
  %v2580 = vunpack.c.l.b16 %v2274
  %v2581 = vunpack.c.h.b16 %v2274
  %v2582 = vunpack.c.l.b16 %v2275
  %v2583 = vunpack.c.h.b16 %v2275
  %v2584 = vunpack.c.l.b16 %v2276
  %v2585 = vunpack.c.h.b16 %v2276
  %v2586 = vunpack.c.l.b16 %v2277
  %v2587 = vunpack.c.h.b16 %v2277
  %v2588 = vunpack.c.l.b16 %v2278
  %v2589 = vunpack.c.h.b16 %v2278
  %v2590 = vunpack.c.l.b16 %v2279
  %v2591 = vunpack.c.h.b16 %v2279
  %v2592 = vunpack.c.l.b16 %v2280
  %v2593 = vunpack.c.h.b16 %v2280
  %v2594 = vunpack.c.l.b16 %v2281
  %v2595 = vunpack.c.h.b16 %v2281
  %v2596 = vunpack.c.l.b16 %v2282
  %v2597 = vunpack.c.h.b16 %v2282
  %v2598 = vunpack.c.l.b16 %v2283
  %v2599 = vunpack.c.h.b16 %v2283
  %v2600 = vunpack.c.l.b16 %v2284
  %v2601 = vunpack.c.h.b16 %v2284
  %v2602 = vunpack.c.l.b16 %v2285
  %v2603 = vunpack.c.h.b16 %v2285
  %v2604 = vunpack.c.l.b16 %v2286
  %v2605 = vunpack.c.h.b16 %v2286
  %v2606 = vunpack.c.l.b16 %v2287
  %v2607 = vunpack.c.h.b16 %v2287
  %v2608 = vunpack.c.l.b16 %v2288
  %v2609 = vunpack.c.h.b16 %v2288
  %v2610 = vunpack.c.l.b16 %v2289
  %v2611 = vunpack.c.h.b16 %v2289
  %v2612 = vunpack.c.l.b16 %v2290
  %v2613 = vunpack.c.h.b16 %v2290
  %v2614 = vunpack.c.l.b16 %v2291
  %v2615 = vunpack.c.h.b16 %v2291
  %v2616 = vunpack.c.l.b16 %v2292
  %v2617 = vunpack.c.h.b16 %v2292
  %v2618 = vunpack.c.l.b16 %v2293
  %v2619 = vunpack.c.h.b16 %v2293
  %v2620 = vunpack.c.l.b16 %v2294
  %v2621 = vunpack.c.h.b16 %v2294
  %v2622 = vunpack.c.l.b16 %v2295
  %v2623 = vunpack.c.h.b16 %v2295
  %v2624 = vunpack.c.l.b16 %v2296
  %v2625 = vunpack.c.h.b16 %v2296
  %v2626 = vunpack.c.l.b16 %v2297
  %v2627 = vunpack.c.h.b16 %v2297
  %v2628 = vunpack.c.l.b16 %v2298
  %v2629 = vunpack.c.h.b16 %v2298
  %v2630 = vunpack.c.l.b16 %v2299
  %v2631 = vunpack.c.h.b16 %v2299
  %v2632 = vunpack.c.l.b16 %v2300
  %v2633 = vunpack.c.h.b16 %v2300
  %v2634 = vunpack.c.l.b16 %v2301
  %v2635 = vunpack.c.h.b16 %v2301
  %v2636 = vunpack.c.l.b16 %v2302
  %v2637 = vunpack.c.h.b16 %v2302
  %v2638 = vunpack.c.l.b16 %v2303
  %v2639 = vunpack.c.h.b16 %v2303
  %v2640 = vunpack.c.l.b16 %v2304
  %v2641 = vunpack.c.h.b16 %v2304
  %v2642 = vunpack.c.l.b16 %v2305
  %v2643 = vunpack.c.h.b16 %v2305
  %v2644 = vunpack.c.l.b16 %v2306
  %v2645 = vunpack.c.h.b16 %v2306
  %v2646 = vunpack.c.l.b16 %v2307
  %v2647 = vunpack.c.h.b16 %v2307
  %v2648 = vunpack.c.l.b16 %v2308
  %v2649 = vunpack.c.h.b16 %v2308
  %v2650 = vunpack.c.l.b16 %v2309
  %v2651 = vunpack.c.h.b16 %v2309
  %v2652 = vunpack.c.l.b16 %v2310
  %v2653 = vunpack.c.h.b16 %v2310
  %v2654 = vunpack.c.l.b16 %v2311
  %v2655 = vunpack.c.h.b16 %v2311
  %v2656 = vunpack.c.l.b16 %v2312
  %v2657 = vunpack.c.h.b16 %v2312
  %v2658 = vunpack.c.l.b16 %v2313
  %v2659 = vunpack.c.h.b16 %v2313
  %v2660 = vunpack.c.l.b16 %v2314
  %v2661 = vunpack.c.h.b16 %v2314
  %v2662 = vunpack.c.l.b16 %v2315
  %v2663 = vunpack.c.h.b16 %v2315
  %v2664 = vunpack.c.l.b16 %v2316
  %v2665 = vunpack.c.h.b16 %v2316
  %v2666 = vunpack.c.l.b16 %v2317
  %v2667 = vunpack.c.h.b16 %v2317
  %v2668 = vunpack.c.l.b16 %v2318
  %v2669 = vunpack.c.h.b16 %v2318
  %v2670 = vunpack.c.l.b16 %v2319
  %v2671 = vunpack.c.h.b16 %v2319
  %v2672 = vunpack.c.l.b16 %v2320
  %v2673 = vunpack.c.h.b16 %v2320
  %v2674 = vunpack.c.l.b16 %v2321
  %v2675 = vunpack.c.h.b16 %v2321
  %v2676 = vunpack.c.l.b16 %v2322
  %v2677 = vunpack.c.h.b16 %v2322
  %v2678 = vunpack.c.l.b16 %v2323
  %v2679 = vunpack.c.h.b16 %v2323
  %v2680 = vunpack.c.l.b16 %v2324
  %v2681 = vunpack.c.h.b16 %v2324
  %v2682 = vunpack.c.l.b16 %v2325
  %v2683 = vunpack.c.h.b16 %v2325
  %v2684 = vunpack.c.l.b16 %v2326
  %v2685 = vunpack.c.h.b16 %v2326
  %v2686 = vunpack.c.l.b16 %v2327
  %v2687 = vunpack.c.h.b16 %v2327
  %v2688 = vunpack.c.l.b16 %v2328
  %v2689 = vunpack.c.h.b16 %v2328
  %v2690 = vunpack.c.l.b16 %v2329
  %v2691 = vunpack.c.h.b16 %v2329
  %v2692 = vunpack.c.l.b16 %v2330
  %v2693 = vunpack.c.h.b16 %v2330
  %v2694 = vunpack.c.l.b16 %v2331
  %v2695 = vunpack.c.h.b16 %v2331
  %v2696 = vunpack.c.l.b16 %v2332
  %v2697 = vunpack.c.h.b16 %v2332
  %v2698 = vunpack.c.l.b16 %v2333
  %v2699 = vunpack.c.h.b16 %v2333
  %v2700 = vunpack.c.l.b16 %v2334
  %v2701 = vunpack.c.h.b16 %v2334
  %v2702 = vunpack.c.l.b16 %v2335
  %v2703 = vunpack.c.h.b16 %v2335
  %v2704 = vunpack.c.l.b16 %v2336
  %v2705 = vunpack.c.h.b16 %v2336
  %v2706 = vunpack.c.l.b16 %v2337
  %v2707 = vunpack.c.h.b16 %v2337
  %v2708 = vunpack.c.l.b16 %v2338
  %v2709 = vunpack.c.h.b16 %v2338
  %v2710 = vunpack.c.l.b16 %v2339
  %v2711 = vunpack.c.h.b16 %v2339
  %v2712 = vunpack.c.l.b16 %v2340
  %v2713 = vunpack.c.h.b16 %v2340
  %v2714 = vunpack.c.l.b16 %v2341
  %v2715 = vunpack.c.h.b16 %v2341
  %v2716 = vunpack.c.l.b16 %v2342
  %v2717 = vunpack.c.h.b16 %v2342
  %v2718 = vunpack.c.l.b16 %v2343
  %v2719 = vunpack.c.h.b16 %v2343
  %v2720 = vunpack.c.l.b16 %v2344
  %v2721 = vunpack.c.h.b16 %v2344
  %v2722 = vunpack.c.l.b16 %v2345
  %v2723 = vunpack.c.h.b16 %v2345
  %v2724 = vunpack.c.l.b16 %v2346
  %v2725 = vunpack.c.h.b16 %v2346
  %v2726 = vunpack.c.l.b16 %v2347
  %v2727 = vunpack.c.h.b16 %v2347
  %v2728 = vunpack.c.l.b16 %v2348
  %v2729 = vunpack.c.h.b16 %v2348
  %v2730 = vunpack.c.l.b16 %v2349
  %v2731 = vunpack.c.h.b16 %v2349
  %v2732 = vunpack.c.l.b16 %v2350
  %v2733 = vunpack.c.h.b16 %v2350
  %v2734 = vunpack.c.l.b16 %v2351
  %v2735 = vunpack.c.h.b16 %v2351
  %v2736 = vpack.c.b16 %v2484, %v2480
  %v2737 = vpack.c.b16 %v2485, %v2481
  %v2738 = vpack.c.b16 %v2486, %v2482
  %v2739 = vpack.c.b16 %v2487, %v2483
  %v2740 = vpack.c.b16 %v2492, %v2488
  %v2741 = vpack.c.b16 %v2493, %v2489
  %v2742 = vpack.c.b16 %v2494, %v2490
  %v2743 = vpack.c.b16 %v2495, %v2491
  %v2744 = vpack.c.b16 %v2500, %v2496
  %v2745 = vpack.c.b16 %v2501, %v2497
  %v2746 = vpack.c.b16 %v2502, %v2498
  %v2747 = vpack.c.b16 %v2503, %v2499
  %v2748 = vpack.c.b16 %v2508, %v2504
  %v2749 = vpack.c.b16 %v2509, %v2505
  %v2750 = vpack.c.b16 %v2510, %v2506
  %v2751 = vpack.c.b16 %v2511, %v2507
  %v2752 = vpack.c.b16 %v2516, %v2512
  %v2753 = vpack.c.b16 %v2517, %v2513
  %v2754 = vpack.c.b16 %v2518, %v2514
  %v2755 = vpack.c.b16 %v2519, %v2515
  %v2756 = vpack.c.b16 %v2524, %v2520
  %v2757 = vpack.c.b16 %v2525, %v2521
  %v2758 = vpack.c.b16 %v2526, %v2522
  %v2759 = vpack.c.b16 %v2527, %v2523
  %v2760 = vpack.c.b16 %v2532, %v2528
  %v2761 = vpack.c.b16 %v2533, %v2529
  %v2762 = vpack.c.b16 %v2534, %v2530
  %v2763 = vpack.c.b16 %v2535, %v2531
  %v2764 = vpack.c.b16 %v2540, %v2536
  %v2765 = vpack.c.b16 %v2541, %v2537
  %v2766 = vpack.c.b16 %v2542, %v2538
  %v2767 = vpack.c.b16 %v2543, %v2539
  %v2768 = vpack.c.b16 %v2548, %v2544
  %v2769 = vpack.c.b16 %v2549, %v2545
  %v2770 = vpack.c.b16 %v2550, %v2546
  %v2771 = vpack.c.b16 %v2551, %v2547
  %v2772 = vpack.c.b16 %v2556, %v2552
  %v2773 = vpack.c.b16 %v2557, %v2553
  %v2774 = vpack.c.b16 %v2558, %v2554
  %v2775 = vpack.c.b16 %v2559, %v2555
  %v2776 = vpack.c.b16 %v2564, %v2560
  %v2777 = vpack.c.b16 %v2565, %v2561
  %v2778 = vpack.c.b16 %v2566, %v2562
  %v2779 = vpack.c.b16 %v2567, %v2563
  %v2780 = vpack.c.b16 %v2572, %v2568
  %v2781 = vpack.c.b16 %v2573, %v2569
  %v2782 = vpack.c.b16 %v2574, %v2570
  %v2783 = vpack.c.b16 %v2575, %v2571
  %v2784 = vpack.c.b16 %v2580, %v2576
  %v2785 = vpack.c.b16 %v2581, %v2577
  %v2786 = vpack.c.b16 %v2582, %v2578
  %v2787 = vpack.c.b16 %v2583, %v2579
  %v2788 = vpack.c.b16 %v2588, %v2584
  %v2789 = vpack.c.b16 %v2589, %v2585
  %v2790 = vpack.c.b16 %v2590, %v2586
  %v2791 = vpack.c.b16 %v2591, %v2587
  %v2792 = vpack.c.b16 %v2596, %v2592
  %v2793 = vpack.c.b16 %v2597, %v2593
  %v2794 = vpack.c.b16 %v2598, %v2594
  %v2795 = vpack.c.b16 %v2599, %v2595
  %v2796 = vpack.c.b16 %v2604, %v2600
  %v2797 = vpack.c.b16 %v2605, %v2601
  %v2798 = vpack.c.b16 %v2606, %v2602
  %v2799 = vpack.c.b16 %v2607, %v2603
  %v2800 = vpack.c.b16 %v2612, %v2608
  %v2801 = vpack.c.b16 %v2613, %v2609
  %v2802 = vpack.c.b16 %v2614, %v2610
  %v2803 = vpack.c.b16 %v2615, %v2611
  %v2804 = vpack.c.b16 %v2620, %v2616
  %v2805 = vpack.c.b16 %v2621, %v2617
  %v2806 = vpack.c.b16 %v2622, %v2618
  %v2807 = vpack.c.b16 %v2623, %v2619
  %v2808 = vpack.c.b16 %v2628, %v2624
  %v2809 = vpack.c.b16 %v2629, %v2625
  %v2810 = vpack.c.b16 %v2630, %v2626
  %v2811 = vpack.c.b16 %v2631, %v2627
  %v2812 = vpack.c.b16 %v2636, %v2632
  %v2813 = vpack.c.b16 %v2637, %v2633
  %v2814 = vpack.c.b16 %v2638, %v2634
  %v2815 = vpack.c.b16 %v2639, %v2635
  %v2816 = vpack.c.b16 %v2644, %v2640
  %v2817 = vpack.c.b16 %v2645, %v2641
  %v2818 = vpack.c.b16 %v2646, %v2642
  %v2819 = vpack.c.b16 %v2647, %v2643
  %v2820 = vpack.c.b16 %v2652, %v2648
  %v2821 = vpack.c.b16 %v2653, %v2649
  %v2822 = vpack.c.b16 %v2654, %v2650
  %v2823 = vpack.c.b16 %v2655, %v2651
  %v2824 = vpack.c.b16 %v2660, %v2656
  %v2825 = vpack.c.b16 %v2661, %v2657
  %v2826 = vpack.c.b16 %v2662, %v2658
  %v2827 = vpack.c.b16 %v2663, %v2659
  %v2828 = vpack.c.b16 %v2668, %v2664
  %v2829 = vpack.c.b16 %v2669, %v2665
  %v2830 = vpack.c.b16 %v2670, %v2666
  %v2831 = vpack.c.b16 %v2671, %v2667
  %v2832 = vpack.c.b16 %v2676, %v2672
  %v2833 = vpack.c.b16 %v2677, %v2673
  %v2834 = vpack.c.b16 %v2678, %v2674
  %v2835 = vpack.c.b16 %v2679, %v2675
  %v2836 = vpack.c.b16 %v2684, %v2680
  %v2837 = vpack.c.b16 %v2685, %v2681
  %v2838 = vpack.c.b16 %v2686, %v2682
  %v2839 = vpack.c.b16 %v2687, %v2683
  %v2840 = vpack.c.b16 %v2692, %v2688
  %v2841 = vpack.c.b16 %v2693, %v2689
  %v2842 = vpack.c.b16 %v2694, %v2690
  %v2843 = vpack.c.b16 %v2695, %v2691
  %v2844 = vpack.c.b16 %v2700, %v2696
  %v2845 = vpack.c.b16 %v2701, %v2697
  %v2846 = vpack.c.b16 %v2702, %v2698
  %v2847 = vpack.c.b16 %v2703, %v2699
  %v2848 = vpack.c.b16 %v2708, %v2704
  %v2849 = vpack.c.b16 %v2709, %v2705
  %v2850 = vpack.c.b16 %v2710, %v2706
  %v2851 = vpack.c.b16 %v2711, %v2707
  %v2852 = vpack.c.b16 %v2716, %v2712
  %v2853 = vpack.c.b16 %v2717, %v2713
  %v2854 = vpack.c.b16 %v2718, %v2714
  %v2855 = vpack.c.b16 %v2719, %v2715
  %v2856 = vpack.c.b16 %v2724, %v2720
  %v2857 = vpack.c.b16 %v2725, %v2721
  %v2858 = vpack.c.b16 %v2726, %v2722
  %v2859 = vpack.c.b16 %v2727, %v2723
  %v2860 = vpack.c.b16 %v2732, %v2728
  %v2861 = vpack.c.b16 %v2733, %v2729
  %v2862 = vpack.c.b16 %v2734, %v2730
  %v2863 = vpack.c.b16 %v2735, %v2731
  %2992 = vmatprep.subr.bf16.mxu0 %v2765
  %2993 = vmatpush1.bf16.msra.mxu0 %v2764
  %2994 = vmatprep.subr.bf16.mxu0 %v2761
  %2995 = vmatpush1.bf16.msra.mxu0 %v2760
  %2996 = vmatprep.subr.bf16.mxu0 %v2757
  %2997 = vmatpush1.bf16.msra.mxu0 %v2756
  %2998 = vmatprep.subr.bf16.mxu0 %v2753
  %2999 = vmatpush1.bf16.msra.mxu0 %v2752
  %3000 = vmatprep.subr.bf16.mxu0 %v2749
  %3001 = vmatpush1.bf16.msra.mxu0 %v2748
  %3002 = vmatprep.subr.bf16.mxu0 %v2745
  %3003 = vmatpush1.bf16.msra.mxu0 %v2744
  %3004 = vmatprep.subr.bf16.mxu0 %v2741
  %3005 = vmatpush1.bf16.msra.mxu0 %v2740
  %3006 = vmatprep.subr.bf16.mxu0 %v2737
  %3007 = vmatpush1.bf16.msra.mxu0 %v2736
  %3008 = vmatprep.subr.bf16.mxu0 %v2797
  %3009 = vmatpush2.bf16.msra.mxu0 %v2796
  %3010 = vmatprep.subr.bf16.mxu0 %v2793
  %3011 = vmatpush2.bf16.msra.mxu0 %v2792
  %3012 = vmatprep.subr.bf16.mxu0 %v2789
  %3013 = vmatpush2.bf16.msra.mxu0 %v2788
  %3014 = vmatprep.subr.bf16.mxu0 %v2785
  %3015 = vmatpush2.bf16.msra.mxu0 %v2784
  %3016 = vmatprep.subr.bf16.mxu0 %v2781
  %3017 = vmatpush2.bf16.msra.mxu0 %v2780
  %3018 = vmatprep.subr.bf16.mxu0 %v2777
  %3019 = vmatpush2.bf16.msra.mxu0 %v2776
  %3020 = vmatprep.subr.bf16.mxu0 %v2773
  %3021 = vmatpush2.bf16.msra.mxu0 %v2772
  %3022 = vmatprep.subr.bf16.mxu0 %v2769
  %3023 = vmatpush2.bf16.msra.mxu0 %v2768
  %3024 = vmatprep.mubr.bf16.mxu0 %v2093
  %3025 = vmatmul.mubr.bf16.gmra.mxu0 %v2092
  %v3026 = vpop.f32.mrf.mxu0
  %v3027 = vadd.f32 0.0, %v3026
  %v3028 = vpop.f32.mrf.mxu0
  %v3029 = vadd.f32 0.0, %v3028
  %v3030 = vpop.f32.mrf.mxu0
  %v3031 = vadd.f32 0.0, %v3030
  %v3032 = vpop.f32.mrf.mxu0
  %v3033 = vadd.f32 0.0, %v3032
  %3034 = vdwg.mxu0
  %3035 = vmatprep.subr.bf16.mxu0 %v2829
  %3036 = vmatpush1.bf16.msra.mxu0 %v2828
  %3037 = vmatprep.subr.bf16.mxu0 %v2825
  %3038 = vmatpush1.bf16.msra.mxu0 %v2824
  %3039 = vmatprep.subr.bf16.mxu0 %v2821
  %3040 = vmatpush1.bf16.msra.mxu0 %v2820
  %3041 = vmatprep.subr.bf16.mxu0 %v2817
  %3042 = vmatpush1.bf16.msra.mxu0 %v2816
  %3043 = vmatprep.subr.bf16.mxu0 %v2813
  %3044 = vmatpush1.bf16.msra.mxu0 %v2812
  %3045 = vmatprep.subr.bf16.mxu0 %v2809
  %3046 = vmatpush1.bf16.msra.mxu0 %v2808
  %3047 = vmatprep.subr.bf16.mxu0 %v2805
  %3048 = vmatpush1.bf16.msra.mxu0 %v2804
  %3049 = vmatprep.subr.bf16.mxu0 %v2801
  %3050 = vmatpush1.bf16.msra.mxu0 %v2800
  %3051 = vmatprep.subr.bf16.mxu0 %v2861
  %3052 = vmatpush2.bf16.msra.mxu0 %v2860
  %3053 = vmatprep.subr.bf16.mxu0 %v2857
  %3054 = vmatpush2.bf16.msra.mxu0 %v2856
  %3055 = vmatprep.subr.bf16.mxu0 %v2853
  %3056 = vmatpush2.bf16.msra.mxu0 %v2852
  %3057 = vmatprep.subr.bf16.mxu0 %v2849
  %3058 = vmatpush2.bf16.msra.mxu0 %v2848
  %3059 = vmatprep.subr.bf16.mxu0 %v2845
  %3060 = vmatpush2.bf16.msra.mxu0 %v2844
  %3061 = vmatprep.subr.bf16.mxu0 %v2841
  %3062 = vmatpush2.bf16.msra.mxu0 %v2840
  %3063 = vmatprep.subr.bf16.mxu0 %v2837
  %3064 = vmatpush2.bf16.msra.mxu0 %v2836
  %3065 = vmatprep.subr.bf16.mxu0 %v2833
  %3066 = vmatpush2.bf16.msra.mxu0 %v2832
  %3067 = vmatprep.mubr.bf16.mxu0 %v2095
  %3068 = vmatmul.mubr.bf16.gmra.mxu0 %v2094
  %v3069 = vpop.f32.mrf.mxu0
  %v3070 = vadd.f32 %v3027, %v3069
  %v3071 = vpop.f32.mrf.mxu0
  %v3072 = vadd.f32 %v3029, %v3071
  %v3073 = vpop.f32.mrf.mxu0
  %v3074 = vadd.f32 %v3031, %v3073
  %v3075 = vpop.f32.mrf.mxu0
  %v3076 = vadd.f32 %v3033, %v3075
  %3077 = vdwg.mxu0
  %3078 = vmatprep.subr.bf16.mxu0 %v2767
  %3079 = vmatpush1.bf16.msra.mxu0 %v2766
  %3080 = vmatprep.subr.bf16.mxu0 %v2763
  %3081 = vmatpush1.bf16.msra.mxu0 %v2762
  %3082 = vmatprep.subr.bf16.mxu0 %v2759
  %3083 = vmatpush1.bf16.msra.mxu0 %v2758
  %3084 = vmatprep.subr.bf16.mxu0 %v2755
  %3085 = vmatpush1.bf16.msra.mxu0 %v2754
  %3086 = vmatprep.subr.bf16.mxu0 %v2751
  %3087 = vmatpush1.bf16.msra.mxu0 %v2750
  %3088 = vmatprep.subr.bf16.mxu0 %v2747
  %3089 = vmatpush1.bf16.msra.mxu0 %v2746
  %3090 = vmatprep.subr.bf16.mxu0 %v2743
  %3091 = vmatpush1.bf16.msra.mxu0 %v2742
  %3092 = vmatprep.subr.bf16.mxu0 %v2739
  %3093 = vmatpush1.bf16.msra.mxu0 %v2738
  %3094 = vmatprep.subr.bf16.mxu0 %v2799
  %3095 = vmatpush2.bf16.msra.mxu0 %v2798
  %3096 = vmatprep.subr.bf16.mxu0 %v2795
  %3097 = vmatpush2.bf16.msra.mxu0 %v2794
  %3098 = vmatprep.subr.bf16.mxu0 %v2791
  %3099 = vmatpush2.bf16.msra.mxu0 %v2790
  %3100 = vmatprep.subr.bf16.mxu0 %v2787
  %3101 = vmatpush2.bf16.msra.mxu0 %v2786
  %3102 = vmatprep.subr.bf16.mxu0 %v2783
  %3103 = vmatpush2.bf16.msra.mxu0 %v2782
  %3104 = vmatprep.subr.bf16.mxu0 %v2779
  %3105 = vmatpush2.bf16.msra.mxu0 %v2778
  %3106 = vmatprep.subr.bf16.mxu0 %v2775
  %3107 = vmatpush2.bf16.msra.mxu0 %v2774
  %3108 = vmatprep.subr.bf16.mxu0 %v2771
  %3109 = vmatpush2.bf16.msra.mxu0 %v2770
  %3110 = vmatprep.mubr.bf16.mxu0 %v2093
  %3111 = vmatmul.mubr.bf16.gmra.mxu0 %v2092
  %v3112 = vpop.f32.mrf.mxu0
  %v3113 = vadd.f32 0.0, %v3112
  %v3114 = vpop.f32.mrf.mxu0
  %v3115 = vadd.f32 0.0, %v3114
  %v3116 = vpop.f32.mrf.mxu0
  %v3117 = vadd.f32 0.0, %v3116
  %v3118 = vpop.f32.mrf.mxu0
  %v3119 = vadd.f32 0.0, %v3118
  %3120 = vdwg.mxu0
  %3121 = vmatprep.subr.bf16.mxu0 %v2831
  %3122 = vmatpush1.bf16.msra.mxu0 %v2830
  %3123 = vmatprep.subr.bf16.mxu0 %v2827
  %3124 = vmatpush1.bf16.msra.mxu0 %v2826
  %3125 = vmatprep.subr.bf16.mxu0 %v2823
  %3126 = vmatpush1.bf16.msra.mxu0 %v2822
  %3127 = vmatprep.subr.bf16.mxu0 %v2819
  %3128 = vmatpush1.bf16.msra.mxu0 %v2818
  %3129 = vmatprep.subr.bf16.mxu0 %v2815
  %3130 = vmatpush1.bf16.msra.mxu0 %v2814
  %3131 = vmatprep.subr.bf16.mxu0 %v2811
  %3132 = vmatpush1.bf16.msra.mxu0 %v2810
  %3133 = vmatprep.subr.bf16.mxu0 %v2807
  %3134 = vmatpush1.bf16.msra.mxu0 %v2806
  %3135 = vmatprep.subr.bf16.mxu0 %v2803
  %3136 = vmatpush1.bf16.msra.mxu0 %v2802
  %3137 = vmatprep.subr.bf16.mxu0 %v2863
  %3138 = vmatpush2.bf16.msra.mxu0 %v2862
  %3139 = vmatprep.subr.bf16.mxu0 %v2859
  %3140 = vmatpush2.bf16.msra.mxu0 %v2858
  %3141 = vmatprep.subr.bf16.mxu0 %v2855
  %3142 = vmatpush2.bf16.msra.mxu0 %v2854
  %3143 = vmatprep.subr.bf16.mxu0 %v2851
  %3144 = vmatpush2.bf16.msra.mxu0 %v2850
  %3145 = vmatprep.subr.bf16.mxu0 %v2847
  %3146 = vmatpush2.bf16.msra.mxu0 %v2846
  %3147 = vmatprep.subr.bf16.mxu0 %v2843
  %3148 = vmatpush2.bf16.msra.mxu0 %v2842
  %3149 = vmatprep.subr.bf16.mxu0 %v2839
  %3150 = vmatpush2.bf16.msra.mxu0 %v2838
  %3151 = vmatprep.subr.bf16.mxu0 %v2835
  %3152 = vmatpush2.bf16.msra.mxu0 %v2834
  %3153 = vmatprep.mubr.bf16.mxu0 %v2095
  %3154 = vmatmul.mubr.bf16.gmra.mxu0 %v2094
  %v3155 = vpop.f32.mrf.mxu0
  %v3156 = vadd.f32 %v3113, %v3155
  %v3157 = vpop.f32.mrf.mxu0
  %v3158 = vadd.f32 %v3115, %v3157
  %v3159 = vpop.f32.mrf.mxu0
  %v3160 = vadd.f32 %v3117, %v3159
  %v3161 = vpop.f32.mrf.mxu0
  %v3162 = vadd.f32 %v3119, %v3161
  %3163 = vdwg.mxu0
  %v3164 = vld [vmem:[%s6] sm:$0xff]
  %v3165 = vld [vmem:[%s6 + $0x8] sm:$0xff]
  %v3166 = vld [vmem:[%s6 + $0x10] sm:$0xff]
  %v3167 = vld [vmem:[%s6 + $0x18] sm:$0xff]
  %v3168 = vld [vmem:[%s6 + $0x20] sm:$0xff]
  %v3169 = vld [vmem:[%s6 + $0x28] sm:$0xff]
  %v3170 = vld [vmem:[%s6 + $0x30] sm:$0xff]
  %v3171 = vld [vmem:[%s6 + $0x38] sm:$0xff]
  %v3172 = vld [vmem:[%s6 + $0x40] sm:$0xff]
  %v3173 = vld [vmem:[%s6 + $0x48] sm:$0xff]
  %v3174 = vld [vmem:[%s6 + $0x50] sm:$0xff]
  %v3175 = vld [vmem:[%s6 + $0x58] sm:$0xff]
  %v3176 = vld [vmem:[%s6 + $0x60] sm:$0xff]
  %v3177 = vld [vmem:[%s6 + $0x68] sm:$0xff]
  %v3178 = vld [vmem:[%s6 + $0x70] sm:$0xff]
  %v3179 = vld [vmem:[%s6 + $0x78] sm:$0xff]
  %v3180 = vld [vmem:[%s6 + $0x80] sm:$0xff]
  %v3181 = vld [vmem:[%s6 + $0x88] sm:$0xff]
  %v3182 = vld [vmem:[%s6 + $0x90] sm:$0xff]
  %v3183 = vld [vmem:[%s6 + $0x98] sm:$0xff]
  %v3184 = vld [vmem:[%s6 + $0xa0] sm:$0xff]
  %v3185 = vld [vmem:[%s6 + $0xa8] sm:$0xff]
  %v3186 = vld [vmem:[%s6 + $0xb0] sm:$0xff]
  %v3187 = vld [vmem:[%s6 + $0xb8] sm:$0xff]
  %v3188 = vld [vmem:[%s6 + $0xc0] sm:$0xff]
  %v3189 = vld [vmem:[%s6 + $0xc8] sm:$0xff]
  %v3190 = vld [vmem:[%s6 + $0xd0] sm:$0xff]
  %v3191 = vld [vmem:[%s6 + $0xd8] sm:$0xff]
  %v3192 = vld [vmem:[%s6 + $0xe0] sm:$0xff]
  %v3193 = vld [vmem:[%s6 + $0xe8] sm:$0xff]
  %v3194 = vld [vmem:[%s6 + $0xf0] sm:$0xff]
  %v3195 = vld [vmem:[%s6 + $0xf8] sm:$0xff]
  %v3196 = vld [vmem:[%s6 + $0x100] sm:$0xff]
  %v3197 = vld [vmem:[%s6 + $0x108] sm:$0xff]
  %v3198 = vld [vmem:[%s6 + $0x110] sm:$0xff]
  %v3199 = vld [vmem:[%s6 + $0x118] sm:$0xff]
  %v3200 = vld [vmem:[%s6 + $0x120] sm:$0xff]
  %v3201 = vld [vmem:[%s6 + $0x128] sm:$0xff]
  %v3202 = vld [vmem:[%s6 + $0x130] sm:$0xff]
  %v3203 = vld [vmem:[%s6 + $0x138] sm:$0xff]
  %v3204 = vld [vmem:[%s6 + $0x140] sm:$0xff]
  %v3205 = vld [vmem:[%s6 + $0x148] sm:$0xff]
  %v3206 = vld [vmem:[%s6 + $0x150] sm:$0xff]
  %v3207 = vld [vmem:[%s6 + $0x158] sm:$0xff]
  %v3208 = vld [vmem:[%s6 + $0x160] sm:$0xff]
  %v3209 = vld [vmem:[%s6 + $0x168] sm:$0xff]
  %v3210 = vld [vmem:[%s6 + $0x170] sm:$0xff]
  %v3211 = vld [vmem:[%s6 + $0x178] sm:$0xff]
  %v3212 = vld [vmem:[%s6 + $0x180] sm:$0xff]
  %v3213 = vld [vmem:[%s6 + $0x188] sm:$0xff]
  %v3214 = vld [vmem:[%s6 + $0x190] sm:$0xff]
  %v3215 = vld [vmem:[%s6 + $0x198] sm:$0xff]
  %v3216 = vld [vmem:[%s6 + $0x1a0] sm:$0xff]
  %v3217 = vld [vmem:[%s6 + $0x1a8] sm:$0xff]
  %v3218 = vld [vmem:[%s6 + $0x1b0] sm:$0xff]
  %v3219 = vld [vmem:[%s6 + $0x1b8] sm:$0xff]
  %v3220 = vld [vmem:[%s6 + $0x1c0] sm:$0xff]
  %v3221 = vld [vmem:[%s6 + $0x1c8] sm:$0xff]
  %v3222 = vld [vmem:[%s6 + $0x1d0] sm:$0xff]
  %v3223 = vld [vmem:[%s6 + $0x1d8] sm:$0xff]
  %v3224 = vld [vmem:[%s6 + $0x1e0] sm:$0xff]
  %v3225 = vld [vmem:[%s6 + $0x1e8] sm:$0xff]
  %v3226 = vld [vmem:[%s6 + $0x1f0] sm:$0xff]
  %v3227 = vld [vmem:[%s6 + $0x1f8] sm:$0xff]
  %v3228 = vld [vmem:[%s6 + $0x200] sm:$0xff]
  %v3229 = vld [vmem:[%s6 + $0x208] sm:$0xff]
  %v3230 = vld [vmem:[%s6 + $0x210] sm:$0xff]
  %v3231 = vld [vmem:[%s6 + $0x218] sm:$0xff]
  %v3232 = vld [vmem:[%s6 + $0x220] sm:$0xff]
  %v3233 = vld [vmem:[%s6 + $0x228] sm:$0xff]
  %v3234 = vld [vmem:[%s6 + $0x230] sm:$0xff]
  %v3235 = vld [vmem:[%s6 + $0x238] sm:$0xff]
  %v3236 = vld [vmem:[%s6 + $0x240] sm:$0xff]
  %v3237 = vld [vmem:[%s6 + $0x248] sm:$0xff]
  %v3238 = vld [vmem:[%s6 + $0x250] sm:$0xff]
  %v3239 = vld [vmem:[%s6 + $0x258] sm:$0xff]
  %v3240 = vld [vmem:[%s6 + $0x260] sm:$0xff]
  %v3241 = vld [vmem:[%s6 + $0x268] sm:$0xff]
  %v3242 = vld [vmem:[%s6 + $0x270] sm:$0xff]
  %v3243 = vld [vmem:[%s6 + $0x278] sm:$0xff]
  %v3244 = vld [vmem:[%s6 + $0x280] sm:$0xff]
  %v3245 = vld [vmem:[%s6 + $0x288] sm:$0xff]
  %v3246 = vld [vmem:[%s6 + $0x290] sm:$0xff]
  %v3247 = vld [vmem:[%s6 + $0x298] sm:$0xff]
  %v3248 = vld [vmem:[%s6 + $0x2a0] sm:$0xff]
  %v3249 = vld [vmem:[%s6 + $0x2a8] sm:$0xff]
  %v3250 = vld [vmem:[%s6 + $0x2b0] sm:$0xff]
  %v3251 = vld [vmem:[%s6 + $0x2b8] sm:$0xff]
  %v3252 = vld [vmem:[%s6 + $0x2c0] sm:$0xff]
  %v3253 = vld [vmem:[%s6 + $0x2c8] sm:$0xff]
  %v3254 = vld [vmem:[%s6 + $0x2d0] sm:$0xff]
  %v3255 = vld [vmem:[%s6 + $0x2d8] sm:$0xff]
  %v3256 = vld [vmem:[%s6 + $0x2e0] sm:$0xff]
  %v3257 = vld [vmem:[%s6 + $0x2e8] sm:$0xff]
  %v3258 = vld [vmem:[%s6 + $0x2f0] sm:$0xff]
  %v3259 = vld [vmem:[%s6 + $0x2f8] sm:$0xff]
  %v3260 = vld [vmem:[%s6 + $0x300] sm:$0xff]
  %v3261 = vld [vmem:[%s6 + $0x308] sm:$0xff]
  %v3262 = vld [vmem:[%s6 + $0x310] sm:$0xff]
  %v3263 = vld [vmem:[%s6 + $0x318] sm:$0xff]
  %v3264 = vld [vmem:[%s6 + $0x320] sm:$0xff]
  %v3265 = vld [vmem:[%s6 + $0x328] sm:$0xff]
  %v3266 = vld [vmem:[%s6 + $0x330] sm:$0xff]
  %v3267 = vld [vmem:[%s6 + $0x338] sm:$0xff]
  %v3268 = vld [vmem:[%s6 + $0x340] sm:$0xff]
  %v3269 = vld [vmem:[%s6 + $0x348] sm:$0xff]
  %v3270 = vld [vmem:[%s6 + $0x350] sm:$0xff]
  %v3271 = vld [vmem:[%s6 + $0x358] sm:$0xff]
  %v3272 = vld [vmem:[%s6 + $0x360] sm:$0xff]
  %v3273 = vld [vmem:[%s6 + $0x368] sm:$0xff]
  %v3274 = vld [vmem:[%s6 + $0x370] sm:$0xff]
  %v3275 = vld [vmem:[%s6 + $0x378] sm:$0xff]
  %v3276 = vld [vmem:[%s6 + $0x380] sm:$0xff]
  %v3277 = vld [vmem:[%s6 + $0x388] sm:$0xff]
  %v3278 = vld [vmem:[%s6 + $0x390] sm:$0xff]
  %v3279 = vld [vmem:[%s6 + $0x398] sm:$0xff]
  %v3280 = vld [vmem:[%s6 + $0x3a0] sm:$0xff]
  %v3281 = vld [vmem:[%s6 + $0x3a8] sm:$0xff]
  %v3282 = vld [vmem:[%s6 + $0x3b0] sm:$0xff]
  %v3283 = vld [vmem:[%s6 + $0x3b8] sm:$0xff]
  %v3284 = vld [vmem:[%s6 + $0x3c0] sm:$0xff]
  %v3285 = vld [vmem:[%s6 + $0x3c8] sm:$0xff]
  %v3286 = vld [vmem:[%s6 + $0x3d0] sm:$0xff]
  %v3287 = vld [vmem:[%s6 + $0x3d8] sm:$0xff]
  %v3288 = vld [vmem:[%s6 + $0x3e0] sm:$0xff]
  %v3289 = vld [vmem:[%s6 + $0x3e8] sm:$0xff]
  %v3290 = vld [vmem:[%s6 + $0x3f0] sm:$0xff]
  %v3291 = vld [vmem:[%s6 + $0x3f8] sm:$0xff]
  %v3420 = vunpack.c.l.b16 %v3164
  %v3421 = vunpack.c.h.b16 %v3164
  %v3422 = vunpack.c.l.b16 %v3165
  %v3423 = vunpack.c.h.b16 %v3165
  %v3424 = vunpack.c.l.b16 %v3166
  %v3425 = vunpack.c.h.b16 %v3166
  %v3426 = vunpack.c.l.b16 %v3167
  %v3427 = vunpack.c.h.b16 %v3167
  %v3428 = vunpack.c.l.b16 %v3168
  %v3429 = vunpack.c.h.b16 %v3168
  %v3430 = vunpack.c.l.b16 %v3169
  %v3431 = vunpack.c.h.b16 %v3169
  %v3432 = vunpack.c.l.b16 %v3170
  %v3433 = vunpack.c.h.b16 %v3170
  %v3434 = vunpack.c.l.b16 %v3171
  %v3435 = vunpack.c.h.b16 %v3171
  %v3436 = vunpack.c.l.b16 %v3172
  %v3437 = vunpack.c.h.b16 %v3172
  %v3438 = vunpack.c.l.b16 %v3173
  %v3439 = vunpack.c.h.b16 %v3173
  %v3440 = vunpack.c.l.b16 %v3174
  %v3441 = vunpack.c.h.b16 %v3174
  %v3442 = vunpack.c.l.b16 %v3175
  %v3443 = vunpack.c.h.b16 %v3175
  %v3444 = vunpack.c.l.b16 %v3176
  %v3445 = vunpack.c.h.b16 %v3176
  %v3446 = vunpack.c.l.b16 %v3177
  %v3447 = vunpack.c.h.b16 %v3177
  %v3448 = vunpack.c.l.b16 %v3178
  %v3449 = vunpack.c.h.b16 %v3178
  %v3450 = vunpack.c.l.b16 %v3179
  %v3451 = vunpack.c.h.b16 %v3179
  %v3452 = vunpack.c.l.b16 %v3180
  %v3453 = vunpack.c.h.b16 %v3180
  %v3454 = vunpack.c.l.b16 %v3181
  %v3455 = vunpack.c.h.b16 %v3181
  %v3456 = vunpack.c.l.b16 %v3182
  %v3457 = vunpack.c.h.b16 %v3182
  %v3458 = vunpack.c.l.b16 %v3183
  %v3459 = vunpack.c.h.b16 %v3183
  %v3460 = vunpack.c.l.b16 %v3184
  %v3461 = vunpack.c.h.b16 %v3184
  %v3462 = vunpack.c.l.b16 %v3185
  %v3463 = vunpack.c.h.b16 %v3185
  %v3464 = vunpack.c.l.b16 %v3186
  %v3465 = vunpack.c.h.b16 %v3186
  %v3466 = vunpack.c.l.b16 %v3187
  %v3467 = vunpack.c.h.b16 %v3187
  %v3468 = vunpack.c.l.b16 %v3188
  %v3469 = vunpack.c.h.b16 %v3188
  %v3470 = vunpack.c.l.b16 %v3189
  %v3471 = vunpack.c.h.b16 %v3189
  %v3472 = vunpack.c.l.b16 %v3190
  %v3473 = vunpack.c.h.b16 %v3190
  %v3474 = vunpack.c.l.b16 %v3191
  %v3475 = vunpack.c.h.b16 %v3191
  %v3476 = vunpack.c.l.b16 %v3192
  %v3477 = vunpack.c.h.b16 %v3192
  %v3478 = vunpack.c.l.b16 %v3193
  %v3479 = vunpack.c.h.b16 %v3193
  %v3480 = vunpack.c.l.b16 %v3194
  %v3481 = vunpack.c.h.b16 %v3194
  %v3482 = vunpack.c.l.b16 %v3195
  %v3483 = vunpack.c.h.b16 %v3195
  %v3484 = vunpack.c.l.b16 %v3196
  %v3485 = vunpack.c.h.b16 %v3196
  %v3486 = vunpack.c.l.b16 %v3197
  %v3487 = vunpack.c.h.b16 %v3197
  %v3488 = vunpack.c.l.b16 %v3198
  %v3489 = vunpack.c.h.b16 %v3198
  %v3490 = vunpack.c.l.b16 %v3199
  %v3491 = vunpack.c.h.b16 %v3199
  %v3492 = vunpack.c.l.b16 %v3200
  %v3493 = vunpack.c.h.b16 %v3200
  %v3494 = vunpack.c.l.b16 %v3201
  %v3495 = vunpack.c.h.b16 %v3201
  %v3496 = vunpack.c.l.b16 %v3202
  %v3497 = vunpack.c.h.b16 %v3202
  %v3498 = vunpack.c.l.b16 %v3203
  %v3499 = vunpack.c.h.b16 %v3203
  %v3500 = vunpack.c.l.b16 %v3204
  %v3501 = vunpack.c.h.b16 %v3204
  %v3502 = vunpack.c.l.b16 %v3205
  %v3503 = vunpack.c.h.b16 %v3205
  %v3504 = vunpack.c.l.b16 %v3206
  %v3505 = vunpack.c.h.b16 %v3206
  %v3506 = vunpack.c.l.b16 %v3207
  %v3507 = vunpack.c.h.b16 %v3207
  %v3508 = vunpack.c.l.b16 %v3208
  %v3509 = vunpack.c.h.b16 %v3208
  %v3510 = vunpack.c.l.b16 %v3209
  %v3511 = vunpack.c.h.b16 %v3209
  %v3512 = vunpack.c.l.b16 %v3210
  %v3513 = vunpack.c.h.b16 %v3210
  %v3514 = vunpack.c.l.b16 %v3211
  %v3515 = vunpack.c.h.b16 %v3211
  %v3516 = vunpack.c.l.b16 %v3212
  %v3517 = vunpack.c.h.b16 %v3212
  %v3518 = vunpack.c.l.b16 %v3213
  %v3519 = vunpack.c.h.b16 %v3213
  %v3520 = vunpack.c.l.b16 %v3214
  %v3521 = vunpack.c.h.b16 %v3214
  %v3522 = vunpack.c.l.b16 %v3215
  %v3523 = vunpack.c.h.b16 %v3215
  %v3524 = vunpack.c.l.b16 %v3216
  %v3525 = vunpack.c.h.b16 %v3216
  %v3526 = vunpack.c.l.b16 %v3217
  %v3527 = vunpack.c.h.b16 %v3217
  %v3528 = vunpack.c.l.b16 %v3218
  %v3529 = vunpack.c.h.b16 %v3218
  %v3530 = vunpack.c.l.b16 %v3219
  %v3531 = vunpack.c.h.b16 %v3219
  %v3532 = vunpack.c.l.b16 %v3220
  %v3533 = vunpack.c.h.b16 %v3220
  %v3534 = vunpack.c.l.b16 %v3221
  %v3535 = vunpack.c.h.b16 %v3221
  %v3536 = vunpack.c.l.b16 %v3222
  %v3537 = vunpack.c.h.b16 %v3222
  %v3538 = vunpack.c.l.b16 %v3223
  %v3539 = vunpack.c.h.b16 %v3223
  %v3540 = vunpack.c.l.b16 %v3224
  %v3541 = vunpack.c.h.b16 %v3224
  %v3542 = vunpack.c.l.b16 %v3225
  %v3543 = vunpack.c.h.b16 %v3225
  %v3544 = vunpack.c.l.b16 %v3226
  %v3545 = vunpack.c.h.b16 %v3226
  %v3546 = vunpack.c.l.b16 %v3227
  %v3547 = vunpack.c.h.b16 %v3227
  %v3548 = vunpack.c.l.b16 %v3228
  %v3549 = vunpack.c.h.b16 %v3228
  %v3550 = vunpack.c.l.b16 %v3229
  %v3551 = vunpack.c.h.b16 %v3229
  %v3552 = vunpack.c.l.b16 %v3230
  %v3553 = vunpack.c.h.b16 %v3230
  %v3554 = vunpack.c.l.b16 %v3231
  %v3555 = vunpack.c.h.b16 %v3231
  %v3556 = vunpack.c.l.b16 %v3232
  %v3557 = vunpack.c.h.b16 %v3232
  %v3558 = vunpack.c.l.b16 %v3233
  %v3559 = vunpack.c.h.b16 %v3233
  %v3560 = vunpack.c.l.b16 %v3234
  %v3561 = vunpack.c.h.b16 %v3234
  %v3562 = vunpack.c.l.b16 %v3235
  %v3563 = vunpack.c.h.b16 %v3235
  %v3564 = vunpack.c.l.b16 %v3236
  %v3565 = vunpack.c.h.b16 %v3236
  %v3566 = vunpack.c.l.b16 %v3237
  %v3567 = vunpack.c.h.b16 %v3237
  %v3568 = vunpack.c.l.b16 %v3238
  %v3569 = vunpack.c.h.b16 %v3238
  %v3570 = vunpack.c.l.b16 %v3239
  %v3571 = vunpack.c.h.b16 %v3239
  %v3572 = vunpack.c.l.b16 %v3240
  %v3573 = vunpack.c.h.b16 %v3240
  %v3574 = vunpack.c.l.b16 %v3241
  %v3575 = vunpack.c.h.b16 %v3241
  %v3576 = vunpack.c.l.b16 %v3242
  %v3577 = vunpack.c.h.b16 %v3242
  %v3578 = vunpack.c.l.b16 %v3243
  %v3579 = vunpack.c.h.b16 %v3243
  %v3580 = vunpack.c.l.b16 %v3244
  %v3581 = vunpack.c.h.b16 %v3244
  %v3582 = vunpack.c.l.b16 %v3245
  %v3583 = vunpack.c.h.b16 %v3245
  %v3584 = vunpack.c.l.b16 %v3246
  %v3585 = vunpack.c.h.b16 %v3246
  %v3586 = vunpack.c.l.b16 %v3247
  %v3587 = vunpack.c.h.b16 %v3247
  %v3588 = vunpack.c.l.b16 %v3248
  %v3589 = vunpack.c.h.b16 %v3248
  %v3590 = vunpack.c.l.b16 %v3249
  %v3591 = vunpack.c.h.b16 %v3249
  %v3592 = vunpack.c.l.b16 %v3250
  %v3593 = vunpack.c.h.b16 %v3250
  %v3594 = vunpack.c.l.b16 %v3251
  %v3595 = vunpack.c.h.b16 %v3251
  %v3596 = vunpack.c.l.b16 %v3252
  %v3597 = vunpack.c.h.b16 %v3252
  %v3598 = vunpack.c.l.b16 %v3253
  %v3599 = vunpack.c.h.b16 %v3253
  %v3600 = vunpack.c.l.b16 %v3254
  %v3601 = vunpack.c.h.b16 %v3254
  %v3602 = vunpack.c.l.b16 %v3255
  %v3603 = vunpack.c.h.b16 %v3255
  %v3604 = vunpack.c.l.b16 %v3256
  %v3605 = vunpack.c.h.b16 %v3256
  %v3606 = vunpack.c.l.b16 %v3257
  %v3607 = vunpack.c.h.b16 %v3257
  %v3608 = vunpack.c.l.b16 %v3258
  %v3609 = vunpack.c.h.b16 %v3258
  %v3610 = vunpack.c.l.b16 %v3259
  %v3611 = vunpack.c.h.b16 %v3259
  %v3612 = vunpack.c.l.b16 %v3260
  %v3613 = vunpack.c.h.b16 %v3260
  %v3614 = vunpack.c.l.b16 %v3261
  %v3615 = vunpack.c.h.b16 %v3261
  %v3616 = vunpack.c.l.b16 %v3262
  %v3617 = vunpack.c.h.b16 %v3262
  %v3618 = vunpack.c.l.b16 %v3263
  %v3619 = vunpack.c.h.b16 %v3263
  %v3620 = vunpack.c.l.b16 %v3264
  %v3621 = vunpack.c.h.b16 %v3264
  %v3622 = vunpack.c.l.b16 %v3265
  %v3623 = vunpack.c.h.b16 %v3265
  %v3624 = vunpack.c.l.b16 %v3266
  %v3625 = vunpack.c.h.b16 %v3266
  %v3626 = vunpack.c.l.b16 %v3267
  %v3627 = vunpack.c.h.b16 %v3267
  %v3628 = vunpack.c.l.b16 %v3268
  %v3629 = vunpack.c.h.b16 %v3268
  %v3630 = vunpack.c.l.b16 %v3269
  %v3631 = vunpack.c.h.b16 %v3269
  %v3632 = vunpack.c.l.b16 %v3270
  %v3633 = vunpack.c.h.b16 %v3270
  %v3634 = vunpack.c.l.b16 %v3271
  %v3635 = vunpack.c.h.b16 %v3271
  %v3636 = vunpack.c.l.b16 %v3272
  %v3637 = vunpack.c.h.b16 %v3272
  %v3638 = vunpack.c.l.b16 %v3273
  %v3639 = vunpack.c.h.b16 %v3273
  %v3640 = vunpack.c.l.b16 %v3274
  %v3641 = vunpack.c.h.b16 %v3274
  %v3642 = vunpack.c.l.b16 %v3275
  %v3643 = vunpack.c.h.b16 %v3275
  %v3644 = vunpack.c.l.b16 %v3276
  %v3645 = vunpack.c.h.b16 %v3276
  %v3646 = vunpack.c.l.b16 %v3277
  %v3647 = vunpack.c.h.b16 %v3277
  %v3648 = vunpack.c.l.b16 %v3278
  %v3649 = vunpack.c.h.b16 %v3278
  %v3650 = vunpack.c.l.b16 %v3279
  %v3651 = vunpack.c.h.b16 %v3279
  %v3652 = vunpack.c.l.b16 %v3280
  %v3653 = vunpack.c.h.b16 %v3280
  %v3654 = vunpack.c.l.b16 %v3281
  %v3655 = vunpack.c.h.b16 %v3281
  %v3656 = vunpack.c.l.b16 %v3282
  %v3657 = vunpack.c.h.b16 %v3282
  %v3658 = vunpack.c.l.b16 %v3283
  %v3659 = vunpack.c.h.b16 %v3283
  %v3660 = vunpack.c.l.b16 %v3284
  %v3661 = vunpack.c.h.b16 %v3284
  %v3662 = vunpack.c.l.b16 %v3285
  %v3663 = vunpack.c.h.b16 %v3285
  %v3664 = vunpack.c.l.b16 %v3286
  %v3665 = vunpack.c.h.b16 %v3286
  %v3666 = vunpack.c.l.b16 %v3287
  %v3667 = vunpack.c.h.b16 %v3287
  %v3668 = vunpack.c.l.b16 %v3288
  %v3669 = vunpack.c.h.b16 %v3288
  %v3670 = vunpack.c.l.b16 %v3289
  %v3671 = vunpack.c.h.b16 %v3289
  %v3672 = vunpack.c.l.b16 %v3290
  %v3673 = vunpack.c.h.b16 %v3290
  %v3674 = vunpack.c.l.b16 %v3291
  %v3675 = vunpack.c.h.b16 %v3291
  %v3676 = vpack.c.b16 %v3424, %v3420
  %v3677 = vpack.c.b16 %v3425, %v3421
  %v3678 = vpack.c.b16 %v3426, %v3422
  %v3679 = vpack.c.b16 %v3427, %v3423
  %v3680 = vpack.c.b16 %v3432, %v3428
  %v3681 = vpack.c.b16 %v3433, %v3429
  %v3682 = vpack.c.b16 %v3434, %v3430
  %v3683 = vpack.c.b16 %v3435, %v3431
  %v3684 = vpack.c.b16 %v3440, %v3436
  %v3685 = vpack.c.b16 %v3441, %v3437
  %v3686 = vpack.c.b16 %v3442, %v3438
  %v3687 = vpack.c.b16 %v3443, %v3439
  %v3688 = vpack.c.b16 %v3448, %v3444
  %v3689 = vpack.c.b16 %v3449, %v3445
  %v3690 = vpack.c.b16 %v3450, %v3446
  %v3691 = vpack.c.b16 %v3451, %v3447
  %v3692 = vpack.c.b16 %v3456, %v3452
  %v3693 = vpack.c.b16 %v3457, %v3453
  %v3694 = vpack.c.b16 %v3458, %v3454
  %v3695 = vpack.c.b16 %v3459, %v3455
  %v3696 = vpack.c.b16 %v3464, %v3460
  %v3697 = vpack.c.b16 %v3465, %v3461
  %v3698 = vpack.c.b16 %v3466, %v3462
  %v3699 = vpack.c.b16 %v3467, %v3463
  %v3700 = vpack.c.b16 %v3472, %v3468
  %v3701 = vpack.c.b16 %v3473, %v3469
  %v3702 = vpack.c.b16 %v3474, %v3470
  %v3703 = vpack.c.b16 %v3475, %v3471
  %v3704 = vpack.c.b16 %v3480, %v3476
  %v3705 = vpack.c.b16 %v3481, %v3477
  %v3706 = vpack.c.b16 %v3482, %v3478
  %v3707 = vpack.c.b16 %v3483, %v3479
  %v3708 = vpack.c.b16 %v3488, %v3484
  %v3709 = vpack.c.b16 %v3489, %v3485
  %v3710 = vpack.c.b16 %v3490, %v3486
  %v3711 = vpack.c.b16 %v3491, %v3487
  %v3712 = vpack.c.b16 %v3496, %v3492
  %v3713 = vpack.c.b16 %v3497, %v3493
  %v3714 = vpack.c.b16 %v3498, %v3494
  %v3715 = vpack.c.b16 %v3499, %v3495
  %v3716 = vpack.c.b16 %v3504, %v3500
  %v3717 = vpack.c.b16 %v3505, %v3501
  %v3718 = vpack.c.b16 %v3506, %v3502
  %v3719 = vpack.c.b16 %v3507, %v3503
  %v3720 = vpack.c.b16 %v3512, %v3508
  %v3721 = vpack.c.b16 %v3513, %v3509
  %v3722 = vpack.c.b16 %v3514, %v3510
  %v3723 = vpack.c.b16 %v3515, %v3511
  %v3724 = vpack.c.b16 %v3520, %v3516
  %v3725 = vpack.c.b16 %v3521, %v3517
  %v3726 = vpack.c.b16 %v3522, %v3518
  %v3727 = vpack.c.b16 %v3523, %v3519
  %v3728 = vpack.c.b16 %v3528, %v3524
  %v3729 = vpack.c.b16 %v3529, %v3525
  %v3730 = vpack.c.b16 %v3530, %v3526
  %v3731 = vpack.c.b16 %v3531, %v3527
  %v3732 = vpack.c.b16 %v3536, %v3532
  %v3733 = vpack.c.b16 %v3537, %v3533
  %v3734 = vpack.c.b16 %v3538, %v3534
  %v3735 = vpack.c.b16 %v3539, %v3535
  %v3736 = vpack.c.b16 %v3544, %v3540
  %v3737 = vpack.c.b16 %v3545, %v3541
  %v3738 = vpack.c.b16 %v3546, %v3542
  %v3739 = vpack.c.b16 %v3547, %v3543
  %v3740 = vpack.c.b16 %v3552, %v3548
  %v3741 = vpack.c.b16 %v3553, %v3549
  %v3742 = vpack.c.b16 %v3554, %v3550
  %v3743 = vpack.c.b16 %v3555, %v3551
  %v3744 = vpack.c.b16 %v3560, %v3556
  %v3745 = vpack.c.b16 %v3561, %v3557
  %v3746 = vpack.c.b16 %v3562, %v3558
  %v3747 = vpack.c.b16 %v3563, %v3559
  %v3748 = vpack.c.b16 %v3568, %v3564
  %v3749 = vpack.c.b16 %v3569, %v3565
  %v3750 = vpack.c.b16 %v3570, %v3566
  %v3751 = vpack.c.b16 %v3571, %v3567
  %v3752 = vpack.c.b16 %v3576, %v3572
  %v3753 = vpack.c.b16 %v3577, %v3573
  %v3754 = vpack.c.b16 %v3578, %v3574
  %v3755 = vpack.c.b16 %v3579, %v3575
  %v3756 = vpack.c.b16 %v3584, %v3580
  %v3757 = vpack.c.b16 %v3585, %v3581
  %v3758 = vpack.c.b16 %v3586, %v3582
  %v3759 = vpack.c.b16 %v3587, %v3583
  %v3760 = vpack.c.b16 %v3592, %v3588
  %v3761 = vpack.c.b16 %v3593, %v3589
  %v3762 = vpack.c.b16 %v3594, %v3590
  %v3763 = vpack.c.b16 %v3595, %v3591
  %v3764 = vpack.c.b16 %v3600, %v3596
  %v3765 = vpack.c.b16 %v3601, %v3597
  %v3766 = vpack.c.b16 %v3602, %v3598
  %v3767 = vpack.c.b16 %v3603, %v3599
  %v3768 = vpack.c.b16 %v3608, %v3604
  %v3769 = vpack.c.b16 %v3609, %v3605
  %v3770 = vpack.c.b16 %v3610, %v3606
  %v3771 = vpack.c.b16 %v3611, %v3607
  %v3772 = vpack.c.b16 %v3616, %v3612
  %v3773 = vpack.c.b16 %v3617, %v3613
  %v3774 = vpack.c.b16 %v3618, %v3614
  %v3775 = vpack.c.b16 %v3619, %v3615
  %v3776 = vpack.c.b16 %v3624, %v3620
  %v3777 = vpack.c.b16 %v3625, %v3621
  %v3778 = vpack.c.b16 %v3626, %v3622
  %v3779 = vpack.c.b16 %v3627, %v3623
  %v3780 = vpack.c.b16 %v3632, %v3628
  %v3781 = vpack.c.b16 %v3633, %v3629
  %v3782 = vpack.c.b16 %v3634, %v3630
  %v3783 = vpack.c.b16 %v3635, %v3631
  %v3784 = vpack.c.b16 %v3640, %v3636
  %v3785 = vpack.c.b16 %v3641, %v3637
  %v3786 = vpack.c.b16 %v3642, %v3638
  %v3787 = vpack.c.b16 %v3643, %v3639
  %v3788 = vpack.c.b16 %v3648, %v3644
  %v3789 = vpack.c.b16 %v3649, %v3645
  %v3790 = vpack.c.b16 %v3650, %v3646
  %v3791 = vpack.c.b16 %v3651, %v3647
  %v3792 = vpack.c.b16 %v3656, %v3652
  %v3793 = vpack.c.b16 %v3657, %v3653
  %v3794 = vpack.c.b16 %v3658, %v3654
  %v3795 = vpack.c.b16 %v3659, %v3655
  %v3796 = vpack.c.b16 %v3664, %v3660
  %v3797 = vpack.c.b16 %v3665, %v3661
  %v3798 = vpack.c.b16 %v3666, %v3662
  %v3799 = vpack.c.b16 %v3667, %v3663
  %v3800 = vpack.c.b16 %v3672, %v3668
  %v3801 = vpack.c.b16 %v3673, %v3669
  %v3802 = vpack.c.b16 %v3674, %v3670
  %v3803 = vpack.c.b16 %v3675, %v3671
  %3932 = vmatprep.subr.bf16.mxu0 %v3705
  %3933 = vmatpush1.bf16.msra.mxu0 %v3704
  %3934 = vmatprep.subr.bf16.mxu0 %v3701
  %3935 = vmatpush1.bf16.msra.mxu0 %v3700
  %3936 = vmatprep.subr.bf16.mxu0 %v3697
  %3937 = vmatpush1.bf16.msra.mxu0 %v3696
  %3938 = vmatprep.subr.bf16.mxu0 %v3693
  %3939 = vmatpush1.bf16.msra.mxu0 %v3692
  %3940 = vmatprep.subr.bf16.mxu0 %v3689
  %3941 = vmatpush1.bf16.msra.mxu0 %v3688
  %3942 = vmatprep.subr.bf16.mxu0 %v3685
  %3943 = vmatpush1.bf16.msra.mxu0 %v3684
  %3944 = vmatprep.subr.bf16.mxu0 %v3681
  %3945 = vmatpush1.bf16.msra.mxu0 %v3680
  %3946 = vmatprep.subr.bf16.mxu0 %v3677
  %3947 = vmatpush1.bf16.msra.mxu0 %v3676
  %3948 = vmatprep.subr.bf16.mxu0 %v3737
  %3949 = vmatpush2.bf16.msra.mxu0 %v3736
  %3950 = vmatprep.subr.bf16.mxu0 %v3733
  %3951 = vmatpush2.bf16.msra.mxu0 %v3732
  %3952 = vmatprep.subr.bf16.mxu0 %v3729
  %3953 = vmatpush2.bf16.msra.mxu0 %v3728
  %3954 = vmatprep.subr.bf16.mxu0 %v3725
  %3955 = vmatpush2.bf16.msra.mxu0 %v3724
  %3956 = vmatprep.subr.bf16.mxu0 %v3721
  %3957 = vmatpush2.bf16.msra.mxu0 %v3720
  %3958 = vmatprep.subr.bf16.mxu0 %v3717
  %3959 = vmatpush2.bf16.msra.mxu0 %v3716
  %3960 = vmatprep.subr.bf16.mxu0 %v3713
  %3961 = vmatpush2.bf16.msra.mxu0 %v3712
  %3962 = vmatprep.subr.bf16.mxu0 %v3709
  %3963 = vmatpush2.bf16.msra.mxu0 %v3708
  %3964 = vmatprep.mubr.bf16.mxu0 %v2093
  %3965 = vmatmul.mubr.bf16.gmra.mxu0 %v2092
  %v3966 = vpop.f32.mrf.mxu0
  %v3967 = vadd.f32 0.0, %v3966
  %v3968 = vpop.f32.mrf.mxu0
  %v3969 = vadd.f32 0.0, %v3968
  %v3970 = vpop.f32.mrf.mxu0
  %v3971 = vadd.f32 0.0, %v3970
  %v3972 = vpop.f32.mrf.mxu0
  %v3973 = vadd.f32 0.0, %v3972
  %3974 = vdwg.mxu0
  %3975 = vmatprep.subr.bf16.mxu0 %v3769
  %3976 = vmatpush1.bf16.msra.mxu0 %v3768
  %3977 = vmatprep.subr.bf16.mxu0 %v3765
  %3978 = vmatpush1.bf16.msra.mxu0 %v3764
  %3979 = vmatprep.subr.bf16.mxu0 %v3761
  %3980 = vmatpush1.bf16.msra.mxu0 %v3760
  %3981 = vmatprep.subr.bf16.mxu0 %v3757
  %3982 = vmatpush1.bf16.msra.mxu0 %v3756
  %3983 = vmatprep.subr.bf16.mxu0 %v3753
  %3984 = vmatpush1.bf16.msra.mxu0 %v3752
  %3985 = vmatprep.subr.bf16.mxu0 %v3749
  %3986 = vmatpush1.bf16.msra.mxu0 %v3748
  %3987 = vmatprep.subr.bf16.mxu0 %v3745
  %3988 = vmatpush1.bf16.msra.mxu0 %v3744
  %3989 = vmatprep.subr.bf16.mxu0 %v3741
  %3990 = vmatpush1.bf16.msra.mxu0 %v3740
  %3991 = vmatprep.subr.bf16.mxu0 %v3801
  %3992 = vmatpush2.bf16.msra.mxu0 %v3800
  %3993 = vmatprep.subr.bf16.mxu0 %v3797
  %3994 = vmatpush2.bf16.msra.mxu0 %v3796
  %3995 = vmatprep.subr.bf16.mxu0 %v3793
  %3996 = vmatpush2.bf16.msra.mxu0 %v3792
  %3997 = vmatprep.subr.bf16.mxu0 %v3789
  %3998 = vmatpush2.bf16.msra.mxu0 %v3788
  %3999 = vmatprep.subr.bf16.mxu0 %v3785
  %4000 = vmatpush2.bf16.msra.mxu0 %v3784
  %4001 = vmatprep.subr.bf16.mxu0 %v3781
  %4002 = vmatpush2.bf16.msra.mxu0 %v3780
  %4003 = vmatprep.subr.bf16.mxu0 %v3777
  %4004 = vmatpush2.bf16.msra.mxu0 %v3776
  %4005 = vmatprep.subr.bf16.mxu0 %v3773
  %4006 = vmatpush2.bf16.msra.mxu0 %v3772
  %4007 = vmatprep.mubr.bf16.mxu0 %v2095
  %4008 = vmatmul.mubr.bf16.gmra.mxu0 %v2094
  %v4009 = vpop.f32.mrf.mxu0
  %v4010 = vadd.f32 %v3967, %v4009
  %v4011 = vpop.f32.mrf.mxu0
  %v4012 = vadd.f32 %v3969, %v4011
  %v4013 = vpop.f32.mrf.mxu0
  %v4014 = vadd.f32 %v3971, %v4013
  %v4015 = vpop.f32.mrf.mxu0
  %v4016 = vadd.f32 %v3973, %v4015
  %4017 = vdwg.mxu0
  %4018 = vmatprep.subr.bf16.mxu0 %v3707
  %4019 = vmatpush1.bf16.msra.mxu0 %v3706
  %4020 = vmatprep.subr.bf16.mxu0 %v3703
  %4021 = vmatpush1.bf16.msra.mxu0 %v3702
  %4022 = vmatprep.subr.bf16.mxu0 %v3699
  %4023 = vmatpush1.bf16.msra.mxu0 %v3698
  %4024 = vmatprep.subr.bf16.mxu0 %v3695
  %4025 = vmatpush1.bf16.msra.mxu0 %v3694
  %4026 = vmatprep.subr.bf16.mxu0 %v3691
  %4027 = vmatpush1.bf16.msra.mxu0 %v3690
  %4028 = vmatprep.subr.bf16.mxu0 %v3687
  %4029 = vmatpush1.bf16.msra.mxu0 %v3686
  %4030 = vmatprep.subr.bf16.mxu0 %v3683
  %4031 = vmatpush1.bf16.msra.mxu0 %v3682
  %4032 = vmatprep.subr.bf16.mxu0 %v3679
  %4033 = vmatpush1.bf16.msra.mxu0 %v3678
  %4034 = vmatprep.subr.bf16.mxu0 %v3739
  %4035 = vmatpush2.bf16.msra.mxu0 %v3738
  %4036 = vmatprep.subr.bf16.mxu0 %v3735
  %4037 = vmatpush2.bf16.msra.mxu0 %v3734
  %4038 = vmatprep.subr.bf16.mxu0 %v3731
  %4039 = vmatpush2.bf16.msra.mxu0 %v3730
  %4040 = vmatprep.subr.bf16.mxu0 %v3727
  %4041 = vmatpush2.bf16.msra.mxu0 %v3726
  %4042 = vmatprep.subr.bf16.mxu0 %v3723
  %4043 = vmatpush2.bf16.msra.mxu0 %v3722
  %4044 = vmatprep.subr.bf16.mxu0 %v3719
  %4045 = vmatpush2.bf16.msra.mxu0 %v3718
  %4046 = vmatprep.subr.bf16.mxu0 %v3715
  %4047 = vmatpush2.bf16.msra.mxu0 %v3714
  %4048 = vmatprep.subr.bf16.mxu0 %v3711
  %4049 = vmatpush2.bf16.msra.mxu0 %v3710
  %4050 = vmatprep.mubr.bf16.mxu0 %v2093
  %4051 = vmatmul.mubr.bf16.gmra.mxu0 %v2092
  %v4052 = vpop.f32.mrf.mxu0
  %v4053 = vadd.f32 0.0, %v4052
  %v4054 = vpop.f32.mrf.mxu0
  %v4055 = vadd.f32 0.0, %v4054
  %v4056 = vpop.f32.mrf.mxu0
  %v4057 = vadd.f32 0.0, %v4056
  %v4058 = vpop.f32.mrf.mxu0
  %v4059 = vadd.f32 0.0, %v4058
  %4060 = vdwg.mxu0
  %4061 = vmatprep.subr.bf16.mxu0 %v3771
  %4062 = vmatpush1.bf16.msra.mxu0 %v3770
  %4063 = vmatprep.subr.bf16.mxu0 %v3767
  %4064 = vmatpush1.bf16.msra.mxu0 %v3766
  %4065 = vmatprep.subr.bf16.mxu0 %v3763
  %4066 = vmatpush1.bf16.msra.mxu0 %v3762
  %4067 = vmatprep.subr.bf16.mxu0 %v3759
  %4068 = vmatpush1.bf16.msra.mxu0 %v3758
  %4069 = vmatprep.subr.bf16.mxu0 %v3755
  %4070 = vmatpush1.bf16.msra.mxu0 %v3754
  %4071 = vmatprep.subr.bf16.mxu0 %v3751
  %4072 = vmatpush1.bf16.msra.mxu0 %v3750
  %4073 = vmatprep.subr.bf16.mxu0 %v3747
  %4074 = vmatpush1.bf16.msra.mxu0 %v3746
  %4075 = vmatprep.subr.bf16.mxu0 %v3743
  %4076 = vmatpush1.bf16.msra.mxu0 %v3742
  %4077 = vmatprep.subr.bf16.mxu0 %v3803
  %4078 = vmatpush2.bf16.msra.mxu0 %v3802
  %4079 = vmatprep.subr.bf16.mxu0 %v3799
  %4080 = vmatpush2.bf16.msra.mxu0 %v3798
  %4081 = vmatprep.subr.bf16.mxu0 %v3795
  %4082 = vmatpush2.bf16.msra.mxu0 %v3794
  %4083 = vmatprep.subr.bf16.mxu0 %v3791
  %4084 = vmatpush2.bf16.msra.mxu0 %v3790
  %4085 = vmatprep.subr.bf16.mxu0 %v3787
  %4086 = vmatpush2.bf16.msra.mxu0 %v3786
  %4087 = vmatprep.subr.bf16.mxu0 %v3783
  %4088 = vmatpush2.bf16.msra.mxu0 %v3782
  %4089 = vmatprep.subr.bf16.mxu0 %v3779
  %4090 = vmatpush2.bf16.msra.mxu0 %v3778
  %4091 = vmatprep.subr.bf16.mxu0 %v3775
  %4092 = vmatpush2.bf16.msra.mxu0 %v3774
  %4093 = vmatprep.mubr.bf16.mxu0 %v2095
  %4094 = vmatmul.mubr.bf16.gmra.mxu0 %v2094
  %v4095 = vpop.f32.mrf.mxu0
  %v4096 = vadd.f32 %v4053, %v4095
  %v4097 = vpop.f32.mrf.mxu0
  %v4098 = vadd.f32 %v4055, %v4097
  %v4099 = vpop.f32.mrf.mxu0
  %v4100 = vadd.f32 %v4057, %v4099
  %v4101 = vpop.f32.mrf.mxu0
  %v4102 = vadd.f32 %v4059, %v4101
  %4103 = vdwg.mxu0
  %v4104 = vrot.slane %v3070, 7
  %v4105 = vrot.slane %v3072, 7
  %v4106 = vrot.slane %v3156, 7
  %v4107 = vrot.slane %v3158, 7
  %v4108 = vrot.slane %v3074, 7
  %v4109 = vrot.slane %v3076, 7
  %v4110 = vrot.slane %v3160, 7
  %v4111 = vrot.slane %v3162, 7
  %v4112 = vsel %vm1966, %v4104, %v4108
  %v4113 = vsel %vm1966, %v4105, %v4109
  %v4114 = vsel %vm1966, %v4106, %v4110
  %v4115 = vsel %vm1966, %v4107, %v4111
  %v4116 = vsel %vm1966, %v4108, %v4104
  %v4117 = vsel %vm1966, %v4109, %v4105
  %v4118 = vsel %vm1966, %v4110, %v4106
  %v4119 = vsel %vm1966, %v4111, %v4107
  %v4120 = vsel %vm64, %v4116, 0.0
  %v4121 = vsel %vm64, %v4117, 0.0
  %v4122 = vsel %vm64, %v4118, 0.0
  %v4123 = vsel %vm64, %v4119, 0.0
  %v4124 = vsel %vm65, %v4112, 0.0
  %v4125 = vsel %vm65, %v4113, 0.0
  %v4126 = vsel %vm65, %v4114, 0.0
  %v4127 = vsel %vm65, %v4115, 0.0
  %v4128 = vrot.slane %v4010, 1
  %v4129 = vrot.slane %v4012, 1
  %v4130 = vrot.slane %v4096, 1
  %v4131 = vrot.slane %v4098, 1
  %v4132 = vrot.slane %v4014, 1
  %v4133 = vrot.slane %v4016, 1
  %v4134 = vrot.slane %v4100, 1
  %v4135 = vrot.slane %v4102, 1
  %v4136 = vsel %vm1991, %v4128, %v4132
  %v4137 = vsel %vm1991, %v4129, %v4133
  %v4138 = vsel %vm1991, %v4130, %v4134
  %v4139 = vsel %vm1991, %v4131, %v4135
  %v4140 = vsel %vm1991, %v4132, %v4128
  %v4141 = vsel %vm1991, %v4133, %v4129
  %v4142 = vsel %vm1991, %v4134, %v4130
  %v4143 = vsel %vm1991, %v4135, %v4131
  %v4144 = vsel %vm66, %v4136, 0.0
  %v4145 = vsel %vm66, %v4137, 0.0
  %v4146 = vsel %vm66, %v4138, 0.0
  %v4147 = vsel %vm66, %v4139, 0.0
  %v4148 = vsel %vm67, %v4140, 0.0
  %v4149 = vsel %vm67, %v4141, 0.0
  %v4150 = vsel %vm67, %v4142, 0.0
  %v4151 = vsel %vm67, %v4143, 0.0
  %v4152 = vadd.f32 %v4120, %v4144
  %v4153 = vadd.f32 %v4121, %v4145
  %v4154 = vadd.f32 %v4122, %v4146
  %v4155 = vadd.f32 %v4123, %v4147
  %v4156 = vadd.f32 %v4124, %v4148
  %v4157 = vadd.f32 %v4125, %v4149
  %v4158 = vadd.f32 %v4126, %v4150
  %v4159 = vadd.f32 %v4127, %v4151
  %v4288 = vunpack.c.l.b16 %v2096
  %v4289 = vunpack.c.h.b16 %v2096
  %v4290 = vunpack.c.l.b16 %v2097
  %v4291 = vunpack.c.h.b16 %v2097
  %v4292 = vunpack.c.l.b16 %v2098
  %v4293 = vunpack.c.h.b16 %v2098
  %v4294 = vunpack.c.l.b16 %v2099
  %v4295 = vunpack.c.h.b16 %v2099
  %v4296 = vunpack.c.l.b16 %v2100
  %v4297 = vunpack.c.h.b16 %v2100
  %v4298 = vunpack.c.l.b16 %v2101
  %v4299 = vunpack.c.h.b16 %v2101
  %v4300 = vunpack.c.l.b16 %v2102
  %v4301 = vunpack.c.h.b16 %v2102
  %v4302 = vunpack.c.l.b16 %v2103
  %v4303 = vunpack.c.h.b16 %v2103
  %v4304 = vunpack.c.l.b16 %v2104
  %v4305 = vunpack.c.h.b16 %v2104
  %v4306 = vunpack.c.l.b16 %v2105
  %v4307 = vunpack.c.h.b16 %v2105
  %v4308 = vunpack.c.l.b16 %v2106
  %v4309 = vunpack.c.h.b16 %v2106
  %v4310 = vunpack.c.l.b16 %v2107
  %v4311 = vunpack.c.h.b16 %v2107
  %v4312 = vunpack.c.l.b16 %v2108
  %v4313 = vunpack.c.h.b16 %v2108
  %v4314 = vunpack.c.l.b16 %v2109
  %v4315 = vunpack.c.h.b16 %v2109
  %v4316 = vunpack.c.l.b16 %v2110
  %v4317 = vunpack.c.h.b16 %v2110
  %v4318 = vunpack.c.l.b16 %v2111
  %v4319 = vunpack.c.h.b16 %v2111
  %v4320 = vunpack.c.l.b16 %v2112
  %v4321 = vunpack.c.h.b16 %v2112
  %v4322 = vunpack.c.l.b16 %v2113
  %v4323 = vunpack.c.h.b16 %v2113
  %v4324 = vunpack.c.l.b16 %v2114
  %v4325 = vunpack.c.h.b16 %v2114
  %v4326 = vunpack.c.l.b16 %v2115
  %v4327 = vunpack.c.h.b16 %v2115
  %v4328 = vunpack.c.l.b16 %v2116
  %v4329 = vunpack.c.h.b16 %v2116
  %v4330 = vunpack.c.l.b16 %v2117
  %v4331 = vunpack.c.h.b16 %v2117
  %v4332 = vunpack.c.l.b16 %v2118
  %v4333 = vunpack.c.h.b16 %v2118
  %v4334 = vunpack.c.l.b16 %v2119
  %v4335 = vunpack.c.h.b16 %v2119
  %v4336 = vunpack.c.l.b16 %v2120
  %v4337 = vunpack.c.h.b16 %v2120
  %v4338 = vunpack.c.l.b16 %v2121
  %v4339 = vunpack.c.h.b16 %v2121
  %v4340 = vunpack.c.l.b16 %v2122
  %v4341 = vunpack.c.h.b16 %v2122
  %v4342 = vunpack.c.l.b16 %v2123
  %v4343 = vunpack.c.h.b16 %v2123
  %v4344 = vunpack.c.l.b16 %v2124
  %v4345 = vunpack.c.h.b16 %v2124
  %v4346 = vunpack.c.l.b16 %v2125
  %v4347 = vunpack.c.h.b16 %v2125
  %v4348 = vunpack.c.l.b16 %v2126
  %v4349 = vunpack.c.h.b16 %v2126
  %v4350 = vunpack.c.l.b16 %v2127
  %v4351 = vunpack.c.h.b16 %v2127
  %v4352 = vunpack.c.l.b16 %v2128
  %v4353 = vunpack.c.h.b16 %v2128
  %v4354 = vunpack.c.l.b16 %v2129
  %v4355 = vunpack.c.h.b16 %v2129
  %v4356 = vunpack.c.l.b16 %v2130
  %v4357 = vunpack.c.h.b16 %v2130
  %v4358 = vunpack.c.l.b16 %v2131
  %v4359 = vunpack.c.h.b16 %v2131
  %v4360 = vunpack.c.l.b16 %v2132
  %v4361 = vunpack.c.h.b16 %v2132
  %v4362 = vunpack.c.l.b16 %v2133
  %v4363 = vunpack.c.h.b16 %v2133
  %v4364 = vunpack.c.l.b16 %v2134
  %v4365 = vunpack.c.h.b16 %v2134
  %v4366 = vunpack.c.l.b16 %v2135
  %v4367 = vunpack.c.h.b16 %v2135
  %v4368 = vunpack.c.l.b16 %v2136
  %v4369 = vunpack.c.h.b16 %v2136
  %v4370 = vunpack.c.l.b16 %v2137
  %v4371 = vunpack.c.h.b16 %v2137
  %v4372 = vunpack.c.l.b16 %v2138
  %v4373 = vunpack.c.h.b16 %v2138
  %v4374 = vunpack.c.l.b16 %v2139
  %v4375 = vunpack.c.h.b16 %v2139
  %v4376 = vunpack.c.l.b16 %v2140
  %v4377 = vunpack.c.h.b16 %v2140
  %v4378 = vunpack.c.l.b16 %v2141
  %v4379 = vunpack.c.h.b16 %v2141
  %v4380 = vunpack.c.l.b16 %v2142
  %v4381 = vunpack.c.h.b16 %v2142
  %v4382 = vunpack.c.l.b16 %v2143
  %v4383 = vunpack.c.h.b16 %v2143
  %v4384 = vunpack.c.l.b16 %v2144
  %v4385 = vunpack.c.h.b16 %v2144
  %v4386 = vunpack.c.l.b16 %v2145
  %v4387 = vunpack.c.h.b16 %v2145
  %v4388 = vunpack.c.l.b16 %v2146
  %v4389 = vunpack.c.h.b16 %v2146
  %v4390 = vunpack.c.l.b16 %v2147
  %v4391 = vunpack.c.h.b16 %v2147
  %v4392 = vunpack.c.l.b16 %v2148
  %v4393 = vunpack.c.h.b16 %v2148
  %v4394 = vunpack.c.l.b16 %v2149
  %v4395 = vunpack.c.h.b16 %v2149
  %v4396 = vunpack.c.l.b16 %v2150
  %v4397 = vunpack.c.h.b16 %v2150
  %v4398 = vunpack.c.l.b16 %v2151
  %v4399 = vunpack.c.h.b16 %v2151
  %v4400 = vunpack.c.l.b16 %v2152
  %v4401 = vunpack.c.h.b16 %v2152
  %v4402 = vunpack.c.l.b16 %v2153
  %v4403 = vunpack.c.h.b16 %v2153
  %v4404 = vunpack.c.l.b16 %v2154
  %v4405 = vunpack.c.h.b16 %v2154
  %v4406 = vunpack.c.l.b16 %v2155
  %v4407 = vunpack.c.h.b16 %v2155
  %v4408 = vunpack.c.l.b16 %v2156
  %v4409 = vunpack.c.h.b16 %v2156
  %v4410 = vunpack.c.l.b16 %v2157
  %v4411 = vunpack.c.h.b16 %v2157
  %v4412 = vunpack.c.l.b16 %v2158
  %v4413 = vunpack.c.h.b16 %v2158
  %v4414 = vunpack.c.l.b16 %v2159
  %v4415 = vunpack.c.h.b16 %v2159
  %v4416 = vunpack.c.l.b16 %v2160
  %v4417 = vunpack.c.h.b16 %v2160
  %v4418 = vunpack.c.l.b16 %v2161
  %v4419 = vunpack.c.h.b16 %v2161
  %v4420 = vunpack.c.l.b16 %v2162
  %v4421 = vunpack.c.h.b16 %v2162
  %v4422 = vunpack.c.l.b16 %v2163
  %v4423 = vunpack.c.h.b16 %v2163
  %v4424 = vunpack.c.l.b16 %v2164
  %v4425 = vunpack.c.h.b16 %v2164
  %v4426 = vunpack.c.l.b16 %v2165
  %v4427 = vunpack.c.h.b16 %v2165
  %v4428 = vunpack.c.l.b16 %v2166
  %v4429 = vunpack.c.h.b16 %v2166
  %v4430 = vunpack.c.l.b16 %v2167
  %v4431 = vunpack.c.h.b16 %v2167
  %v4432 = vunpack.c.l.b16 %v2168
  %v4433 = vunpack.c.h.b16 %v2168
  %v4434 = vunpack.c.l.b16 %v2169
  %v4435 = vunpack.c.h.b16 %v2169
  %v4436 = vunpack.c.l.b16 %v2170
  %v4437 = vunpack.c.h.b16 %v2170
  %v4438 = vunpack.c.l.b16 %v2171
  %v4439 = vunpack.c.h.b16 %v2171
  %v4440 = vunpack.c.l.b16 %v2172
  %v4441 = vunpack.c.h.b16 %v2172
  %v4442 = vunpack.c.l.b16 %v2173
  %v4443 = vunpack.c.h.b16 %v2173
  %v4444 = vunpack.c.l.b16 %v2174
  %v4445 = vunpack.c.h.b16 %v2174
  %v4446 = vunpack.c.l.b16 %v2175
  %v4447 = vunpack.c.h.b16 %v2175
  %v4448 = vunpack.c.l.b16 %v2176
  %v4449 = vunpack.c.h.b16 %v2176
  %v4450 = vunpack.c.l.b16 %v2177
  %v4451 = vunpack.c.h.b16 %v2177
  %v4452 = vunpack.c.l.b16 %v2178
  %v4453 = vunpack.c.h.b16 %v2178
  %v4454 = vunpack.c.l.b16 %v2179
  %v4455 = vunpack.c.h.b16 %v2179
  %v4456 = vunpack.c.l.b16 %v2180
  %v4457 = vunpack.c.h.b16 %v2180
  %v4458 = vunpack.c.l.b16 %v2181
  %v4459 = vunpack.c.h.b16 %v2181
  %v4460 = vunpack.c.l.b16 %v2182
  %v4461 = vunpack.c.h.b16 %v2182
  %v4462 = vunpack.c.l.b16 %v2183
  %v4463 = vunpack.c.h.b16 %v2183
  %v4464 = vunpack.c.l.b16 %v2184
  %v4465 = vunpack.c.h.b16 %v2184
  %v4466 = vunpack.c.l.b16 %v2185
  %v4467 = vunpack.c.h.b16 %v2185
  %v4468 = vunpack.c.l.b16 %v2186
  %v4469 = vunpack.c.h.b16 %v2186
  %v4470 = vunpack.c.l.b16 %v2187
  %v4471 = vunpack.c.h.b16 %v2187
  %v4472 = vunpack.c.l.b16 %v2188
  %v4473 = vunpack.c.h.b16 %v2188
  %v4474 = vunpack.c.l.b16 %v2189
  %v4475 = vunpack.c.h.b16 %v2189
  %v4476 = vunpack.c.l.b16 %v2190
  %v4477 = vunpack.c.h.b16 %v2190
  %v4478 = vunpack.c.l.b16 %v2191
  %v4479 = vunpack.c.h.b16 %v2191
  %v4480 = vunpack.c.l.b16 %v2192
  %v4481 = vunpack.c.h.b16 %v2192
  %v4482 = vunpack.c.l.b16 %v2193
  %v4483 = vunpack.c.h.b16 %v2193
  %v4484 = vunpack.c.l.b16 %v2194
  %v4485 = vunpack.c.h.b16 %v2194
  %v4486 = vunpack.c.l.b16 %v2195
  %v4487 = vunpack.c.h.b16 %v2195
  %v4488 = vunpack.c.l.b16 %v2196
  %v4489 = vunpack.c.h.b16 %v2196
  %v4490 = vunpack.c.l.b16 %v2197
  %v4491 = vunpack.c.h.b16 %v2197
  %v4492 = vunpack.c.l.b16 %v2198
  %v4493 = vunpack.c.h.b16 %v2198
  %v4494 = vunpack.c.l.b16 %v2199
  %v4495 = vunpack.c.h.b16 %v2199
  %v4496 = vunpack.c.l.b16 %v2200
  %v4497 = vunpack.c.h.b16 %v2200
  %v4498 = vunpack.c.l.b16 %v2201
  %v4499 = vunpack.c.h.b16 %v2201
  %v4500 = vunpack.c.l.b16 %v2202
  %v4501 = vunpack.c.h.b16 %v2202
  %v4502 = vunpack.c.l.b16 %v2203
  %v4503 = vunpack.c.h.b16 %v2203
  %v4504 = vunpack.c.l.b16 %v2204
  %v4505 = vunpack.c.h.b16 %v2204
  %v4506 = vunpack.c.l.b16 %v2205
  %v4507 = vunpack.c.h.b16 %v2205
  %v4508 = vunpack.c.l.b16 %v2206
  %v4509 = vunpack.c.h.b16 %v2206
  %v4510 = vunpack.c.l.b16 %v2207
  %v4511 = vunpack.c.h.b16 %v2207
  %v4512 = vunpack.c.l.b16 %v2208
  %v4513 = vunpack.c.h.b16 %v2208
  %v4514 = vunpack.c.l.b16 %v2209
  %v4515 = vunpack.c.h.b16 %v2209
  %v4516 = vunpack.c.l.b16 %v2210
  %v4517 = vunpack.c.h.b16 %v2210
  %v4518 = vunpack.c.l.b16 %v2211
  %v4519 = vunpack.c.h.b16 %v2211
  %v4520 = vunpack.c.l.b16 %v2212
  %v4521 = vunpack.c.h.b16 %v2212
  %v4522 = vunpack.c.l.b16 %v2213
  %v4523 = vunpack.c.h.b16 %v2213
  %v4524 = vunpack.c.l.b16 %v2214
  %v4525 = vunpack.c.h.b16 %v2214
  %v4526 = vunpack.c.l.b16 %v2215
  %v4527 = vunpack.c.h.b16 %v2215
  %v4528 = vunpack.c.l.b16 %v2216
  %v4529 = vunpack.c.h.b16 %v2216
  %v4530 = vunpack.c.l.b16 %v2217
  %v4531 = vunpack.c.h.b16 %v2217
  %v4532 = vunpack.c.l.b16 %v2218
  %v4533 = vunpack.c.h.b16 %v2218
  %v4534 = vunpack.c.l.b16 %v2219
  %v4535 = vunpack.c.h.b16 %v2219
  %v4536 = vunpack.c.l.b16 %v2220
  %v4537 = vunpack.c.h.b16 %v2220
  %v4538 = vunpack.c.l.b16 %v2221
  %v4539 = vunpack.c.h.b16 %v2221
  %v4540 = vunpack.c.l.b16 %v2222
  %v4541 = vunpack.c.h.b16 %v2222
  %v4542 = vunpack.c.l.b16 %v2223
  %v4543 = vunpack.c.h.b16 %v2223
  %v4544 = vpack.c.b16 %v4292, %v4288
  %v4545 = vpack.c.b16 %v4293, %v4289
  %v4546 = vpack.c.b16 %v4294, %v4290
  %v4547 = vpack.c.b16 %v4295, %v4291
  %v4548 = vpack.c.b16 %v4300, %v4296
  %v4549 = vpack.c.b16 %v4301, %v4297
  %v4550 = vpack.c.b16 %v4302, %v4298
  %v4551 = vpack.c.b16 %v4303, %v4299
  %v4552 = vpack.c.b16 %v4308, %v4304
  %v4553 = vpack.c.b16 %v4309, %v4305
  %v4554 = vpack.c.b16 %v4310, %v4306
  %v4555 = vpack.c.b16 %v4311, %v4307
  %v4556 = vpack.c.b16 %v4316, %v4312
  %v4557 = vpack.c.b16 %v4317, %v4313
  %v4558 = vpack.c.b16 %v4318, %v4314
  %v4559 = vpack.c.b16 %v4319, %v4315
  %v4560 = vpack.c.b16 %v4324, %v4320
  %v4561 = vpack.c.b16 %v4325, %v4321
  %v4562 = vpack.c.b16 %v4326, %v4322
  %v4563 = vpack.c.b16 %v4327, %v4323
  %v4564 = vpack.c.b16 %v4332, %v4328
  %v4565 = vpack.c.b16 %v4333, %v4329
  %v4566 = vpack.c.b16 %v4334, %v4330
  %v4567 = vpack.c.b16 %v4335, %v4331
  %v4568 = vpack.c.b16 %v4340, %v4336
  %v4569 = vpack.c.b16 %v4341, %v4337
  %v4570 = vpack.c.b16 %v4342, %v4338
  %v4571 = vpack.c.b16 %v4343, %v4339
  %v4572 = vpack.c.b16 %v4348, %v4344
  %v4573 = vpack.c.b16 %v4349, %v4345
  %v4574 = vpack.c.b16 %v4350, %v4346
  %v4575 = vpack.c.b16 %v4351, %v4347
  %v4576 = vpack.c.b16 %v4356, %v4352
  %v4577 = vpack.c.b16 %v4357, %v4353
  %v4578 = vpack.c.b16 %v4358, %v4354
  %v4579 = vpack.c.b16 %v4359, %v4355
  %v4580 = vpack.c.b16 %v4364, %v4360
  %v4581 = vpack.c.b16 %v4365, %v4361
  %v4582 = vpack.c.b16 %v4366, %v4362
  %v4583 = vpack.c.b16 %v4367, %v4363
  %v4584 = vpack.c.b16 %v4372, %v4368
  %v4585 = vpack.c.b16 %v4373, %v4369
  %v4586 = vpack.c.b16 %v4374, %v4370
  %v4587 = vpack.c.b16 %v4375, %v4371
  %v4588 = vpack.c.b16 %v4380, %v4376
  %v4589 = vpack.c.b16 %v4381, %v4377
  %v4590 = vpack.c.b16 %v4382, %v4378
  %v4591 = vpack.c.b16 %v4383, %v4379
  %v4592 = vpack.c.b16 %v4388, %v4384
  %v4593 = vpack.c.b16 %v4389, %v4385
  %v4594 = vpack.c.b16 %v4390, %v4386
  %v4595 = vpack.c.b16 %v4391, %v4387
  %v4596 = vpack.c.b16 %v4396, %v4392
  %v4597 = vpack.c.b16 %v4397, %v4393
  %v4598 = vpack.c.b16 %v4398, %v4394
  %v4599 = vpack.c.b16 %v4399, %v4395
  %v4600 = vpack.c.b16 %v4404, %v4400
  %v4601 = vpack.c.b16 %v4405, %v4401
  %v4602 = vpack.c.b16 %v4406, %v4402
  %v4603 = vpack.c.b16 %v4407, %v4403
  %v4604 = vpack.c.b16 %v4412, %v4408
  %v4605 = vpack.c.b16 %v4413, %v4409
  %v4606 = vpack.c.b16 %v4414, %v4410
  %v4607 = vpack.c.b16 %v4415, %v4411
  %v4608 = vpack.c.b16 %v4420, %v4416
  %v4609 = vpack.c.b16 %v4421, %v4417
  %v4610 = vpack.c.b16 %v4422, %v4418
  %v4611 = vpack.c.b16 %v4423, %v4419
  %v4612 = vpack.c.b16 %v4428, %v4424
  %v4613 = vpack.c.b16 %v4429, %v4425
  %v4614 = vpack.c.b16 %v4430, %v4426
  %v4615 = vpack.c.b16 %v4431, %v4427
  %v4616 = vpack.c.b16 %v4436, %v4432
  %v4617 = vpack.c.b16 %v4437, %v4433
  %v4618 = vpack.c.b16 %v4438, %v4434
  %v4619 = vpack.c.b16 %v4439, %v4435
  %v4620 = vpack.c.b16 %v4444, %v4440
  %v4621 = vpack.c.b16 %v4445, %v4441
  %v4622 = vpack.c.b16 %v4446, %v4442
  %v4623 = vpack.c.b16 %v4447, %v4443
  %v4624 = vpack.c.b16 %v4452, %v4448
  %v4625 = vpack.c.b16 %v4453, %v4449
  %v4626 = vpack.c.b16 %v4454, %v4450
  %v4627 = vpack.c.b16 %v4455, %v4451
  %v4628 = vpack.c.b16 %v4460, %v4456
  %v4629 = vpack.c.b16 %v4461, %v4457
  %v4630 = vpack.c.b16 %v4462, %v4458
  %v4631 = vpack.c.b16 %v4463, %v4459
  %v4632 = vpack.c.b16 %v4468, %v4464
  %v4633 = vpack.c.b16 %v4469, %v4465
  %v4634 = vpack.c.b16 %v4470, %v4466
  %v4635 = vpack.c.b16 %v4471, %v4467
  %v4636 = vpack.c.b16 %v4476, %v4472
  %v4637 = vpack.c.b16 %v4477, %v4473
  %v4638 = vpack.c.b16 %v4478, %v4474
  %v4639 = vpack.c.b16 %v4479, %v4475
  %v4640 = vpack.c.b16 %v4484, %v4480
  %v4641 = vpack.c.b16 %v4485, %v4481
  %v4642 = vpack.c.b16 %v4486, %v4482
  %v4643 = vpack.c.b16 %v4487, %v4483
  %v4644 = vpack.c.b16 %v4492, %v4488
  %v4645 = vpack.c.b16 %v4493, %v4489
  %v4646 = vpack.c.b16 %v4494, %v4490
  %v4647 = vpack.c.b16 %v4495, %v4491
  %v4648 = vpack.c.b16 %v4500, %v4496
  %v4649 = vpack.c.b16 %v4501, %v4497
  %v4650 = vpack.c.b16 %v4502, %v4498
  %v4651 = vpack.c.b16 %v4503, %v4499
  %v4652 = vpack.c.b16 %v4508, %v4504
  %v4653 = vpack.c.b16 %v4509, %v4505
  %v4654 = vpack.c.b16 %v4510, %v4506
  %v4655 = vpack.c.b16 %v4511, %v4507
  %v4656 = vpack.c.b16 %v4516, %v4512
  %v4657 = vpack.c.b16 %v4517, %v4513
  %v4658 = vpack.c.b16 %v4518, %v4514
  %v4659 = vpack.c.b16 %v4519, %v4515
  %v4660 = vpack.c.b16 %v4524, %v4520
  %v4661 = vpack.c.b16 %v4525, %v4521
  %v4662 = vpack.c.b16 %v4526, %v4522
  %v4663 = vpack.c.b16 %v4527, %v4523
  %v4664 = vpack.c.b16 %v4532, %v4528
  %v4665 = vpack.c.b16 %v4533, %v4529
  %v4666 = vpack.c.b16 %v4534, %v4530
  %v4667 = vpack.c.b16 %v4535, %v4531
  %v4668 = vpack.c.b16 %v4540, %v4536
  %v4669 = vpack.c.b16 %v4541, %v4537
  %v4670 = vpack.c.b16 %v4542, %v4538
  %v4671 = vpack.c.b16 %v4543, %v4539
  %4800 = vmatprep.subr.bf16.mxu0 %v4573
  %4801 = vmatpush1.bf16.msra.mxu0 %v4572
  %4802 = vmatprep.subr.bf16.mxu0 %v4569
  %4803 = vmatpush1.bf16.msra.mxu0 %v4568
  %4804 = vmatprep.subr.bf16.mxu0 %v4565
  %4805 = vmatpush1.bf16.msra.mxu0 %v4564
  %4806 = vmatprep.subr.bf16.mxu0 %v4561
  %4807 = vmatpush1.bf16.msra.mxu0 %v4560
  %4808 = vmatprep.subr.bf16.mxu0 %v4557
  %4809 = vmatpush1.bf16.msra.mxu0 %v4556
  %4810 = vmatprep.subr.bf16.mxu0 %v4553
  %4811 = vmatpush1.bf16.msra.mxu0 %v4552
  %4812 = vmatprep.subr.bf16.mxu0 %v4549
  %4813 = vmatpush1.bf16.msra.mxu0 %v4548
  %4814 = vmatprep.subr.bf16.mxu0 %v4545
  %4815 = vmatpush1.bf16.msra.mxu0 %v4544
  %4816 = vmatprep.subr.bf16.mxu0 %v4605
  %4817 = vmatpush2.bf16.msra.mxu0 %v4604
  %4818 = vmatprep.subr.bf16.mxu0 %v4601
  %4819 = vmatpush2.bf16.msra.mxu0 %v4600
  %4820 = vmatprep.subr.bf16.mxu0 %v4597
  %4821 = vmatpush2.bf16.msra.mxu0 %v4596
  %4822 = vmatprep.subr.bf16.mxu0 %v4593
  %4823 = vmatpush2.bf16.msra.mxu0 %v4592
  %4824 = vmatprep.subr.bf16.mxu0 %v4589
  %4825 = vmatpush2.bf16.msra.mxu0 %v4588
  %4826 = vmatprep.subr.bf16.mxu0 %v4585
  %4827 = vmatpush2.bf16.msra.mxu0 %v4584
  %4828 = vmatprep.subr.bf16.mxu0 %v4581
  %4829 = vmatpush2.bf16.msra.mxu0 %v4580
  %4830 = vmatprep.subr.bf16.mxu0 %v4577
  %4831 = vmatpush2.bf16.msra.mxu0 %v4576
  %4832 = vmatprep.mubr.bf16.mxu0 %v2093
  %4833 = vmatmul.mubr.bf16.gmra.mxu0 %v2092
  %v4834 = vpop.f32.mrf.mxu0
  %v4835 = vadd.f32 %v4152, %v4834
  %v4836 = vpop.f32.mrf.mxu0
  %v4837 = vadd.f32 %v4153, %v4836
  %v4838 = vpop.f32.mrf.mxu0
  %v4839 = vadd.f32 %v4156, %v4838
  %v4840 = vpop.f32.mrf.mxu0
  %v4841 = vadd.f32 %v4157, %v4840
  %4842 = vdwg.mxu0
  %4843 = vmatprep.subr.bf16.mxu0 %v4637
  %4844 = vmatpush1.bf16.msra.mxu0 %v4636
  %4845 = vmatprep.subr.bf16.mxu0 %v4633
  %4846 = vmatpush1.bf16.msra.mxu0 %v4632
  %4847 = vmatprep.subr.bf16.mxu0 %v4629
  %4848 = vmatpush1.bf16.msra.mxu0 %v4628
  %4849 = vmatprep.subr.bf16.mxu0 %v4625
  %4850 = vmatpush1.bf16.msra.mxu0 %v4624
  %4851 = vmatprep.subr.bf16.mxu0 %v4621
  %4852 = vmatpush1.bf16.msra.mxu0 %v4620
  %4853 = vmatprep.subr.bf16.mxu0 %v4617
  %4854 = vmatpush1.bf16.msra.mxu0 %v4616
  %4855 = vmatprep.subr.bf16.mxu0 %v4613
  %4856 = vmatpush1.bf16.msra.mxu0 %v4612
  %4857 = vmatprep.subr.bf16.mxu0 %v4609
  %4858 = vmatpush1.bf16.msra.mxu0 %v4608
  %4859 = vmatprep.subr.bf16.mxu0 %v4669
  %4860 = vmatpush2.bf16.msra.mxu0 %v4668
  %4861 = vmatprep.subr.bf16.mxu0 %v4665
  %4862 = vmatpush2.bf16.msra.mxu0 %v4664
  %4863 = vmatprep.subr.bf16.mxu0 %v4661
  %4864 = vmatpush2.bf16.msra.mxu0 %v4660
  %4865 = vmatprep.subr.bf16.mxu0 %v4657
  %4866 = vmatpush2.bf16.msra.mxu0 %v4656
  %4867 = vmatprep.subr.bf16.mxu0 %v4653
  %4868 = vmatpush2.bf16.msra.mxu0 %v4652
  %4869 = vmatprep.subr.bf16.mxu0 %v4649
  %4870 = vmatpush2.bf16.msra.mxu0 %v4648
  %4871 = vmatprep.subr.bf16.mxu0 %v4645
  %4872 = vmatpush2.bf16.msra.mxu0 %v4644
  %4873 = vmatprep.subr.bf16.mxu0 %v4641
  %4874 = vmatpush2.bf16.msra.mxu0 %v4640
  %4875 = vmatprep.mubr.bf16.mxu0 %v2095
  %4876 = vmatmul.mubr.bf16.gmra.mxu0 %v2094
  %v4877 = vpop.f32.mrf.mxu0
  %v4878 = vadd.f32 %v4835, %v4877
  %v4879 = vpop.f32.mrf.mxu0
  %v4880 = vadd.f32 %v4837, %v4879
  %v4881 = vpop.f32.mrf.mxu0
  %v4882 = vadd.f32 %v4839, %v4881
  %v4883 = vpop.f32.mrf.mxu0
  %v4884 = vadd.f32 %v4841, %v4883
  %4885 = vdwg.mxu0
  %4886 = vmatprep.subr.bf16.mxu0 %v4575
  %4887 = vmatpush1.bf16.msra.mxu0 %v4574
  %4888 = vmatprep.subr.bf16.mxu0 %v4571
  %4889 = vmatpush1.bf16.msra.mxu0 %v4570
  %4890 = vmatprep.subr.bf16.mxu0 %v4567
  %4891 = vmatpush1.bf16.msra.mxu0 %v4566
  %4892 = vmatprep.subr.bf16.mxu0 %v4563
  %4893 = vmatpush1.bf16.msra.mxu0 %v4562
  %4894 = vmatprep.subr.bf16.mxu0 %v4559
  %4895 = vmatpush1.bf16.msra.mxu0 %v4558
  %4896 = vmatprep.subr.bf16.mxu0 %v4555
  %4897 = vmatpush1.bf16.msra.mxu0 %v4554
  %4898 = vmatprep.subr.bf16.mxu0 %v4551
  %4899 = vmatpush1.bf16.msra.mxu0 %v4550
  %4900 = vmatprep.subr.bf16.mxu0 %v4547
  %4901 = vmatpush1.bf16.msra.mxu0 %v4546
  %4902 = vmatprep.subr.bf16.mxu0 %v4607
  %4903 = vmatpush2.bf16.msra.mxu0 %v4606
  %4904 = vmatprep.subr.bf16.mxu0 %v4603
  %4905 = vmatpush2.bf16.msra.mxu0 %v4602
  %4906 = vmatprep.subr.bf16.mxu0 %v4599
  %4907 = vmatpush2.bf16.msra.mxu0 %v4598
  %4908 = vmatprep.subr.bf16.mxu0 %v4595
  %4909 = vmatpush2.bf16.msra.mxu0 %v4594
  %4910 = vmatprep.subr.bf16.mxu0 %v4591
  %4911 = vmatpush2.bf16.msra.mxu0 %v4590
  %4912 = vmatprep.subr.bf16.mxu0 %v4587
  %4913 = vmatpush2.bf16.msra.mxu0 %v4586
  %4914 = vmatprep.subr.bf16.mxu0 %v4583
  %4915 = vmatpush2.bf16.msra.mxu0 %v4582
  %4916 = vmatprep.subr.bf16.mxu0 %v4579
  %4917 = vmatpush2.bf16.msra.mxu0 %v4578
  %4918 = vmatprep.mubr.bf16.mxu0 %v2093
  %4919 = vmatmul.mubr.bf16.gmra.mxu0 %v2092
  %v4920 = vpop.f32.mrf.mxu0
  %v4921 = vadd.f32 %v4154, %v4920
  %v4922 = vpop.f32.mrf.mxu0
  %v4923 = vadd.f32 %v4155, %v4922
  %v4924 = vpop.f32.mrf.mxu0
  %v4925 = vadd.f32 %v4158, %v4924
  %v4926 = vpop.f32.mrf.mxu0
  %v4927 = vadd.f32 %v4159, %v4926
  %4928 = vdwg.mxu0
  %4929 = vmatprep.subr.bf16.mxu0 %v4639
  %4930 = vmatpush1.bf16.msra.mxu0 %v4638
  %4931 = vmatprep.subr.bf16.mxu0 %v4635
  %4932 = vmatpush1.bf16.msra.mxu0 %v4634
  %4933 = vmatprep.subr.bf16.mxu0 %v4631
  %4934 = vmatpush1.bf16.msra.mxu0 %v4630
  %4935 = vmatprep.subr.bf16.mxu0 %v4627
  %4936 = vmatpush1.bf16.msra.mxu0 %v4626
  %4937 = vmatprep.subr.bf16.mxu0 %v4623
  %4938 = vmatpush1.bf16.msra.mxu0 %v4622
  %4939 = vmatprep.subr.bf16.mxu0 %v4619
  %4940 = vmatpush1.bf16.msra.mxu0 %v4618
  %4941 = vmatprep.subr.bf16.mxu0 %v4615
  %4942 = vmatpush1.bf16.msra.mxu0 %v4614
  %4943 = vmatprep.subr.bf16.mxu0 %v4611
  %4944 = vmatpush1.bf16.msra.mxu0 %v4610
  %4945 = vmatprep.subr.bf16.mxu0 %v4671
  %4946 = vmatpush2.bf16.msra.mxu0 %v4670
  %4947 = vmatprep.subr.bf16.mxu0 %v4667
  %4948 = vmatpush2.bf16.msra.mxu0 %v4666
  %4949 = vmatprep.subr.bf16.mxu0 %v4663
  %4950 = vmatpush2.bf16.msra.mxu0 %v4662
  %4951 = vmatprep.subr.bf16.mxu0 %v4659
  %4952 = vmatpush2.bf16.msra.mxu0 %v4658
  %4953 = vmatprep.subr.bf16.mxu0 %v4655
  %4954 = vmatpush2.bf16.msra.mxu0 %v4654
  %4955 = vmatprep.subr.bf16.mxu0 %v4651
  %4956 = vmatpush2.bf16.msra.mxu0 %v4650
  %4957 = vmatprep.subr.bf16.mxu0 %v4647
  %4958 = vmatpush2.bf16.msra.mxu0 %v4646
  %4959 = vmatprep.subr.bf16.mxu0 %v4643
  %4960 = vmatpush2.bf16.msra.mxu0 %v4642
  %4961 = vmatprep.mubr.bf16.mxu0 %v2095
  %4962 = vmatmul.mubr.bf16.gmra.mxu0 %v2094
  %v4963 = vpop.f32.mrf.mxu0
  %v4964 = vadd.f32 %v4921, %v4963
  %v4965 = vpop.f32.mrf.mxu0
  %v4966 = vadd.f32 %v4923, %v4965
  %v4967 = vpop.f32.mrf.mxu0
  %v4968 = vadd.f32 %v4925, %v4967
  %v4969 = vpop.f32.mrf.mxu0
  %v4970 = vadd.f32 %v4927, %v4969
  %4971 = vdwg.mxu0
  %v4972 = vld [vmem:[%s8] sm:$0xf]
  %v4974 = vlaneseq
  %v4975 = vshrl.u32 %v4974, 7
  %v4976 = vsub.s32 0, %v4975
  %v4977 = vrot.slane %v4972, %v4976
  %v4978 = vlaneseq
  %v4979 = vshrl.u32 %v4978, 7
  %v4980 = vsub.s32 1, %v4979
  %v4981 = vrot.slane %v4972, %v4980
  %v4982 = vlaneseq
  %v4983 = vshrl.u32 %v4982, 7
  %v4984 = vsub.s32 2, %v4983
  %v4985 = vrot.slane %v4972, %v4984
  %v4986 = vlaneseq
  %v4987 = vshrl.u32 %v4986, 7
  %v4988 = vsub.s32 3, %v4987
  %v4989 = vrot.slane %v4972, %v4988
  %v4994 = vadd.f32 %v4878, %v4977
  %v4995 = vadd.f32 %v4880, %v4981
  %v4996 = vadd.f32 %v4964, %v4985
  %v4997 = vadd.f32 %v4966, %v4989
  %v4998 = vadd.f32 %v4882, %v4977
  %v4999 = vadd.f32 %v4884, %v4981
  %v5000 = vadd.f32 %v4968, %v4985
  %v5001 = vadd.f32 %v4970, %v4989
  %v5002 = vadd.f32 %v4994, %v2084
  %v5003 = vadd.f32 %v4995, %v2085
  %v5004 = vadd.f32 %v4996, %v2086
  %v5005 = vadd.f32 %v4997, %v2087
  %v5006 = vadd.f32 %v4998, %v2088
  %v5007 = vadd.f32 %v4999, %v2089
  %v5008 = vadd.f32 %v5000, %v2090
  %v5009 = vadd.f32 %v5001, %v2091
  %v5010 = vmax.f32 %v5002, 0.0
  %v5011 = vmax.f32 %v5003, 0.0
  %v5012 = vmax.f32 %v5004, 0.0
  %v5013 = vmax.f32 %v5005, 0.0
  %v5014 = vmax.f32 %v5006, 0.0
  %v5015 = vmax.f32 %v5007, 0.0
  %v5016 = vmax.f32 %v5008, 0.0
  %v5017 = vmax.f32 %v5009, 0.0
  %5018 = vst [vmem:[%s10] sm:$0xff] %v5010
  %5019 = vst [vmem:[%s10 + $0x8] sm:$0xff] %v5011
  %5020 = vst [vmem:[%s10 + $0x10] sm:$0xff] %v5012
  %5021 = vst [vmem:[%s10 + $0x18] sm:$0xff] %v5013
  %5022 = vst [vmem:[%s10 + $0x20] sm:$0xff] %v5014
  %5023 = vst [vmem:[%s10 + $0x28] sm:$0xff] %v5015
  %5024 = vst [vmem:[%s10 + $0x30] sm:$0xff] %v5016
  %5025 = vst [vmem:[%s10 + $0x38] sm:$0xff] %v5017
  // Predicated region
  $region42: #{residual_block_forward.1} parent=0 // pred_check
    _
  $region43: #{residual_block_forward.1} parent=0 // pred_check_branch
    %5027 = sbr.rel (0) target = $region45
  $region44: #{residual_block_forward.1} parent=0 // pred_region
    _
  $region45: #{residual_block_forward.1} parent=0 // pred_fallthru
    _
  // Predicated region
  $region46: #{residual_block_forward.1} parent=0 // pred_check
    _
  $region47: #{residual_block_forward.1} parent=0 // pred_check_branch
    %5029 = sbr.rel (0) target = $region49
  $region48: #{residual_block_forward.1} parent=0 // pred_region
    _
  $region49: #{residual_block_forward.1} parent=0 // pred_fallthru
    _

</llo_original>
